<compile_context>
chip_gen: v7x
topology: tpu7x:2x2x1
jax: 0.10.0
libtpu: 0.0.40
codegen_flags: <defaults>
</compile_context>

<pallas_src>
import functools
import numpy as np

import jax
import jax.numpy as jnp
from jax import lax
from jax.experimental import pallas as pl
from jax.experimental.pallas import tpu as pltpu


def _attn_kernel(x_ref, gamma_ref, beta_ref,
                 wq_ref, bq_ref, wk_ref, bk_ref, wv_ref, bv_ref, w3_ref, b3_ref,
                 o_ref, kT_s, v_s, gn_scale_s, gn_shift_s, *,
                 eps, skip_rescale, tq, chunk, num_groups, approx_recip):
    qi = pl.program_id(1)
    hw = x_ref.shape[1]
    c = x_ref.shape[2]
    cdt = v_s.dtype                      # MXU operand dtype (bf16 or f32)
    n_chunks = hw // chunk               # static Python int

    # ---- once per batch element: GroupNorm stats + k/v projection ---------
    @pl.when(qi == 0)
    def _():
        g = num_groups
        cg = c // g
        n = float(hw * cg)

        # per-channel sums -> per-channel group statistic (no reshapes across
        # the lane dim; group membership via an iota mask, g is small/static)
        if g == 1:
            def to_group(s):                                   # (1, C) -> (1, C)
                return jnp.broadcast_to(jnp.sum(s, axis=1, keepdims=True) / n, (1, c))
        else:
            gid = lax.broadcasted_iota(jnp.int32, (1, c), 1) // cg
            def to_group(s):
                out = jnp.zeros((1, c), jnp.float32)
                for gi in range(g):
                    mask = gid == gi
                    m = jnp.sum(jnp.where(mask, s, 0.0), axis=1, keepdims=True) / n
                    out = jnp.where(mask, m, out)
                return out

        # pass 1 (chunked): per-channel sums -> group mean
        def _sum_body(i, acc):
            r = pl.multiple_of(i * chunk, chunk)
            return acc + jnp.sum(x_ref[0, pl.ds(r, chunk), :], axis=0, keepdims=True)
        s1 = lax.fori_loop(0, n_chunks, _sum_body, jnp.zeros((1, c), jnp.float32))
        mean_c = to_group(s1)

        # pass 2 (chunked): two-pass variance (no E[x^2]-E[x]^2 cancellation)
        def _var_body(i, acc):
            r = pl.multiple_of(i * chunk, chunk)
            d = x_ref[0, pl.ds(r, chunk), :] - mean_c
            return acc + jnp.sum(d * d, axis=0, keepdims=True)
        s2 = lax.fori_loop(0, n_chunks, _var_body, jnp.zeros((1, c), jnp.float32))
        var_c = to_group(s2)

        scale = gamma_ref[...] * lax.rsqrt(var_c + eps)        # (1, C) f32
        shift = beta_ref[...] - mean_c * scale                 # (1, C) f32
        gn_scale_s[...] = scale
        gn_shift_s[...] = shift

        # pass 3 (static chunk loop, 128-aligned offsets): project k / v
        # straight into persistent scratch; k is written transposed (C, HW).
        for ci in range(n_chunks):
            r0 = ci * chunk
            h = (x_ref[0, pl.ds(r0, chunk), :] * scale + shift).astype(cdt)  # (chunk, C)
            kc = jnp.dot(h, wk_ref[...], preferred_element_type=jnp.float32) + bk_ref[...]
            vc = jnp.dot(h, wv_ref[...], preferred_element_type=jnp.float32) + bv_ref[...]
            kT_s[:, pl.ds(r0, chunk)] = jnp.transpose(kc).astype(cdt)        # (C, chunk)
            v_s[pl.ds(r0, chunk), :] = vc.astype(cdt)

    # ---- per query tile: q on the fly, scores, softmax, attend, project ---
    row = pl.multiple_of(qi * tq, tq)
    x_t = x_ref[0, pl.ds(row, tq), :]                          # (TQ, C) f32
    h_t = x_t * gn_scale_s[...] + gn_shift_s[...]              # GroupNorm applied (f32)
    # Wq / bq already carry the C^-0.5 attention-score scale (folded in wrapper).
    q_t = (jnp.dot(h_t.astype(cdt), wq_ref[...], preferred_element_type=jnp.float32)
           + bq_ref[...]).astype(cdt)                          # (TQ, C)

    scores = jnp.dot(q_t, kT_s[...], preferred_element_type=jnp.float32)     # (TQ, HW) f32

    m = jnp.max(scores, axis=-1, keepdims=True)                # f32
    p = jnp.exp(scores - m)                                    # f32
    denom = jnp.sum(p, axis=-1, keepdims=True)                 # (TQ, 1) f32

    # normalize after p@v (mathematically identical; TQ*C instead of TQ*HW muls)
    att = jnp.dot(p.astype(cdt), v_s[...], preferred_element_type=jnp.float32)  # (TQ, C) f32
    att = att * pl.reciprocal(denom, approx=approx_recip)

    h_out = jnp.dot(att.astype(cdt), w3_ref[...],
                    preferred_element_type=jnp.float32) + b3_ref[...]        # (TQ, C) f32

    out = x_t + h_out                                          # residual in f32
    if skip_rescale:
        out = out * (1.0 / np.sqrt(2.0))
    o_ref[0] = out


def _pick_chunk(hw, max_chunk=None):
    """Chunk length for the qi==0 projection: 128-aligned divisor of HW (or HW)."""
    cap = 512 if max_chunk is None else min(512, max_chunk)
    if hw <= cap:
        return hw
    for ch in (512, 384, 256, 128):
        if ch <= cap and hw % ch == 0:
            return ch
    return hw          # no aligned divisor: fall back to a single unchunked pass


def _pick_tq(hw, c, cdt_bytes, vmem_limit, *, chunk, max_tq=None):
    """Largest query-tile whose working set fits the VMEM budget (TQ>=256 preferred)."""
    budget = int(vmem_limit * 0.85)
    resident = (2 * hw * c * cdt_bytes          # kT / v persistent scratch
                + 2 * hw * c * 4                # x block (assume double-buffered)
                + 2 * 4 * c * c * cdt_bytes     # 4 weight matrices (assume 2 buffers)
                + 6 * chunk * c * 4             # qi==0 chunk transients (h/k/v/kT)
                + 32 * c * 4)                   # biases / gamma / beta / GN stats
    avail = budget - resident
    divisors = [t for t in (1024, 512, 256, 128, 64, 32, 16, 8)
                if hw % t == 0 and (max_tq is None or t <= max_tq)]
    if not divisors:
        return hw                               # full extent is always legal
    for t in divisors:                          # descending -> biggest MXU-friendly tile
        per_tile = (3 * t * hw * 4              # scores / exp / p temporaries
                    + 8 * t * c * 4)            # h_t/q_t/att/h_out + out double-buffer
        if per_tile <= avail:
            return t
    return divisors[-1]


def attn_blockpp(x_nchw, params, *, skip_rescale=False, eps=1e-6,
                 compute_dtype=jnp.bfloat16, max_tq=None, max_chunk=None):
    """x_nchw: (B, C, H, W) float32."""
    B, C, H, W = x_nchw.shape
    HW = H * W
    G = min(C // 4, 32)
    assert G >= 1 and C % G == 0
    # NOTE: for peak throughput C should be a multiple of 128 (lane-dense
    # loads/stores); smaller C is correct but wastes lanes.

    # NCHW -> (B, HW, C); channels on the lane axis.
    x = jnp.transpose(x_nchw, (0, 2, 3, 1)).reshape(B, HW, C).astype(jnp.float32)

    cdt = jnp.dtype(compute_dtype)
    inv_sqrt_c = float(int(C) ** (-0.5))
    gamma = params["gamma"].reshape(1, C).astype(jnp.float32)
    beta = params["beta"].reshape(1, C).astype(jnp.float32)
    # Fold the C^-0.5 attention-score scale into the q projection once.
    wq = (params["W0"].astype(jnp.float32) * inv_sqrt_c).astype(cdt)      # (C, C)
    bq = (params["b0"].astype(jnp.float32) * inv_sqrt_c).reshape(1, C)    # (1, C) f32
    wk = params["W1"].astype(cdt)
    bk = params["b1"].reshape(1, C).astype(jnp.float32)
    wv = params["W2"].astype(cdt)
    bv = params["b2"].reshape(1, C).astype(jnp.float32)
    w3 = params["W3"].astype(cdt)
    b3 = params["b3"].reshape(1, C).astype(jnp.float32)

    # VMEM budget: well inside the chip's capacity (64 MiB v7x / 128 MiB v5e,v6e)
    # but above the small default scoped limit.
    try:
        vmem_cap = int(pltpu.get_tpu_info().vmem_capacity_bytes)
    except Exception:
        vmem_cap = 64 * 1024 * 1024
    vmem_limit = min((vmem_cap * 3) // 4, 100 * 1024 * 1024)

    chunk = _pick_chunk(HW, max_chunk)
    tq = _pick_tq(HW, C, cdt.itemsize, vmem_limit, chunk=chunk, max_tq=max_tq)
    grid = (B, HW // tq)

    kernel = functools.partial(
        _attn_kernel, eps=float(eps), skip_rescale=bool(skip_rescale),
        tq=tq, chunk=chunk, num_groups=G,
        approx_recip=(cdt != jnp.dtype(jnp.float32)))

    args = (x, gamma, beta, wq, bq, wk, bk, wv, bv, w3, b3)

    def build(single_buffer_consts):
        pm = dict(pipeline_mode=pl.Buffered(1)) if single_buffer_consts else {}
        const = lambda shape: pl.BlockSpec(
            shape, lambda b, qi: tuple(0 for _ in shape), **pm)
        return pl.pallas_call(
            kernel,
            out_shape=jax.ShapeDtypeStruct((B, HW, C), jnp.float32),
            grid_spec=pltpu.PrefetchScalarGridSpec(
                num_scalar_prefetch=0,
                grid=grid,
                in_specs=[
                    pl.BlockSpec((1, HW, C), lambda b, qi: (b, 0, 0)),  # x (per b)
                    const((1, C)),        # gamma
                    const((1, C)),        # beta
                    const((C, C)),        # Wq (pre-scaled by C^-0.5)
                    const((1, C)),        # bq (pre-scaled)
                    const((C, C)),        # Wk
                    const((1, C)),        # bk
                    const((C, C)),        # Wv
                    const((1, C)),        # bv
                    const((C, C)),        # W3
                    const((1, C)),        # b3
                ],
                out_specs=pl.BlockSpec((1, tq, C), lambda b, qi: (b, qi, 0)),
                scratch_shapes=[
                    pltpu.VMEM((C, HW), cdt),          # k^T (persistent per batch elem)
                    pltpu.VMEM((HW, C), cdt),          # v
                    pltpu.VMEM((1, C), jnp.float32),   # GroupNorm scale
                    pltpu.VMEM((1, C), jnp.float32),   # GroupNorm shift
                ],
            ),
            compiler_params=pltpu.CompilerParams(
                dimension_semantics=("parallel", "arbitrary"),
                vmem_limit_bytes=vmem_limit),
        )

    try:
        # Single-buffer the constant-index inputs (weights/biases): their block
        # index never changes, so one buffer is sufficient and halves their VMEM.
        out = build(True)(*args)
    except Exception:
        # Fallback if this JAX build rejects pipeline_mode / Buffered(1).
        out = build(False)(*args)

    return jnp.transpose(out.reshape(B, H, W, C), (0, 3, 1, 2))


def make_params(key, C, *, out_init_scale=0.0):
    """Parameter init mirroring NIN's default_init (fan_avg uniform)."""
    def nin_w(k, scale):
        scale = 1e-10 if scale == 0.0 else scale
        fan_avg = (C + C) / 2.0
        lim = np.sqrt(3.0 * scale / fan_avg)
        return jax.random.uniform(k, (C, C), jnp.float32, -lim, lim)

    k0, k1, k2, k3 = jax.random.split(key, 4)
    return {
        "gamma": jnp.ones((C,), jnp.float32),
        "beta": jnp.zeros((C,), jnp.float32),
        "W0": nin_w(k0, 0.1), "b0": jnp.zeros((C,), jnp.float32),
        "W1": nin_w(k1, 0.1), "b1": jnp.zeros((C,), jnp.float32),
        "W2": nin_w(k2, 0.1), "b2": jnp.zeros((C,), jnp.float32),
        "W3": nin_w(k3, out_init_scale), "b3": jnp.zeros((C,), jnp.float32),
    }


def attn_blockpp_reference(x_nchw, params, *, skip_rescale=False, eps=1e-6):
    """Pure-JAX reference reproducing the PyTorch semantics (full-f32 matmuls)."""
    hi = jax.lax.Precision.HIGHEST
    B, C, H, W = x_nchw.shape
    G = min(C // 4, 32)
    cg = C // G
    xg = x_nchw.reshape(B, G, cg, H, W)
    mu = xg.mean(axis=(2, 3, 4), keepdims=True)
    var = ((xg - mu) ** 2).mean(axis=(2, 3, 4), keepdims=True)
    h = ((xg - mu) / jnp.sqrt(var + eps)).reshape(B, C, H, W)
    h = h * params["gamma"][None, :, None, None] + params["beta"][None, :, None, None]

    def nin(t, Wm, bv):
        t = jnp.transpose(t, (0, 2, 3, 1))
        y = jnp.einsum("bhwc,cd->bhwd", t, Wm, precision=hi) + bv
        return jnp.transpose(y, (0, 3, 1, 2))

    q = nin(h, params["W0"], params["b0"])
    k = nin(h, params["W1"], params["b1"])
    v = nin(h, params["W2"], params["b2"])
    w = jnp.einsum("bchw,bcij->bhwij", q, k, precision=hi) * (int(C) ** (-0.5))
    w = w.reshape(B, H, W, H * W)
    w = jax.nn.softmax(w, axis=-1).reshape(B, H, W, H, W)
    h2 = jnp.einsum("bhwij,bcij->bchw", w, v, precision=hi)
    h2 = nin(h2, params["W3"], params["b3"])
    out = x_nchw + h2
    return out / np.sqrt(2.0) if skip_rescale else out


if __name__ == "__main__":
    key = jax.random.PRNGKey(0)
    kx, kp, kx2, kp2 = jax.random.split(key, 4)

    B, C, H, W = 2, 4, 16, 16
    x = jax.random.normal(kx, (B, C, H, W), jnp.float32)

    # Non-degenerate output projection so the attention path matters
    # (module default init_scale=0.0 makes W3 ~ 0).
    params = make_params(kp, C, out_init_scale=0.1)
    ref = attn_blockpp_reference(x, params, skip_rescale=False)

    # 1) strict-semantics check: f32 compute path, small query tiles so the
    #    tiled grid, per-tile q recomputation and transposed-k scratch are hit.
    out_f32 = jax.block_until_ready(
        attn_blockpp(x, params, skip_rescale=False,
                     compute_dtype=jnp.float32, max_tq=64))
    assert out_f32.shape == (B, C, H, W)
    err_f32 = float(jnp.max(jnp.abs(out_f32 - ref)))
    assert jnp.allclose(out_f32, ref, atol=1e-4, rtol=1e-4), err_f32

    # 2) performance path: bf16 MXU operands with f32 accumulation.
    out_bf16 = jax.block_until_ready(attn_blockpp(x, params, skip_rescale=False))
    err_bf16 = float(jnp.max(jnp.abs(out_bf16 - ref)))
    assert jnp.allclose(out_bf16, ref, atol=5e-2, rtol=5e-2), err_bf16

    # 3) skip_rescale with module-default params (NIN_3 init_scale=0.0).
    params0 = make_params(kp, C)
    ref_sr = attn_blockpp_reference(x, params0, skip_rescale=True)
    out_sr = jax.block_until_ready(attn_blockpp(x, params0, skip_rescale=True))
    err_sr = float(jnp.max(jnp.abs(out_sr - ref_sr)))
    assert jnp.allclose(out_sr, ref_sr, atol=1e-3, rtol=1e-3), err_sr

    # 4) multi-chunk qi==0 projection (4 chunks of 256) + multi-group GroupNorm
    #    (G=2) + B=1, exercising the production code path at a bigger HW.
    B2, C2, H2, W2 = 1, 8, 32, 32
    x2 = jax.random.normal(kx2, (B2, C2, H2, W2), jnp.float32)
    params2 = make_params(kp2, C2, out_init_scale=0.1)
    ref2 = attn_blockpp_reference(x2, params2, skip_rescale=False)
    out2 = jax.block_until_ready(
        attn_blockpp(x2, params2, skip_rescale=False, max_tq=256, max_chunk=256))
    err2 = float(jnp.max(jnp.abs(out2 - ref2)))
    assert jnp.allclose(out2, ref2, atol=5e-2, rtol=5e-2), err2

    print("KERNEL_OK")
</pallas_src>

<mosaic_0001>
module attributes {stable_mosaic.version = 11 : i64} {
  func.func @_attn_kernel(%arg0: i32, %arg1: i32, %arg2: memref<1x256x4xf32, #tpu.memory_space<vmem>>, %arg3: memref<1x4xf32, #tpu.memory_space<vmem>>, %arg4: memref<1x4xf32, #tpu.memory_space<vmem>>, %arg5: memref<4x4xf32, #tpu.memory_space<vmem>>, %arg6: memref<1x4xf32, #tpu.memory_space<vmem>>, %arg7: memref<4x4xf32, #tpu.memory_space<vmem>>, %arg8: memref<1x4xf32, #tpu.memory_space<vmem>>, %arg9: memref<4x4xf32, #tpu.memory_space<vmem>>, %arg10: memref<1x4xf32, #tpu.memory_space<vmem>>, %arg11: memref<4x4xf32, #tpu.memory_space<vmem>>, %arg12: memref<1x4xf32, #tpu.memory_space<vmem>>, %arg13: memref<1x64x4xf32, #tpu.memory_space<vmem>>, %arg14: memref<4x256xf32, #tpu.memory_space<vmem>>, %arg15: memref<256x4xf32, #tpu.memory_space<vmem>>, %arg16: memref<1x4xf32, #tpu.memory_space<vmem>>, %arg17: memref<1x4xf32, #tpu.memory_space<vmem>>) attributes {dimension_semantics = [#tpu.dimension_semantics<parallel>, #tpu.dimension_semantics<arbitrary>], iteration_bounds = array<i64: 2, 4>, scalar_prefetch = 0 : i64, scratch_operands = 4 : i64, tpu.core_type = #tpu.core_type<tc>, window_params = [{transform_indices = @transform_0, window_bounds = array<i64: 1, 256, 4>}, {pipeline_mode = #tpu.pipeline_mode<synchronous>, transform_indices = @transform_1, window_bounds = array<i64: 1, 4>}, {pipeline_mode = #tpu.pipeline_mode<synchronous>, transform_indices = @transform_2, window_bounds = array<i64: 1, 4>}, {pipeline_mode = #tpu.pipeline_mode<synchronous>, transform_indices = @transform_3, window_bounds = array<i64: 4, 4>}, {pipeline_mode = #tpu.pipeline_mode<synchronous>, transform_indices = @transform_4, window_bounds = array<i64: 1, 4>}, {pipeline_mode = #tpu.pipeline_mode<synchronous>, transform_indices = @transform_5, window_bounds = array<i64: 4, 4>}, {pipeline_mode = #tpu.pipeline_mode<synchronous>, transform_indices = @transform_6, window_bounds = array<i64: 1, 4>}, {pipeline_mode = #tpu.pipeline_mode<synchronous>, transform_indices = @transform_7, window_bounds = array<i64: 4, 4>}, {pipeline_mode = #tpu.pipeline_mode<synchronous>, transform_indices = @transform_8, window_bounds = array<i64: 1, 4>}, {pipeline_mode = #tpu.pipeline_mode<synchronous>, transform_indices = @transform_9, window_bounds = array<i64: 4, 4>}, {pipeline_mode = #tpu.pipeline_mode<synchronous>, transform_indices = @transform_10, window_bounds = array<i64: 1, 4>}, {transform_indices = @transform_11, window_bounds = array<i64: 1, 64, 4>}]} {
    %c0_i32 = arith.constant 0 : i32
    %0 = arith.cmpi eq, %arg1, %c0_i32 : i32
    %1 = arith.extui %0 : i1 to i32
    %c0_i32_0 = arith.constant 0 : i32
    %2 = arith.cmpi ne, %1, %c0_i32_0 : i32
    scf.if %2 {
      %cst_26 = arith.constant 0.000000e+00 : f32
      %42 = vector.broadcast %cst_26 : f32 to vector<1x4xf32>
      %c0_i32_27 = arith.constant 0 : i32
      %c256_i32 = arith.constant 256 : i32
      %43 = arith.muli %c0_i32_27, %c256_i32 : i32
      %44 = tpu.assume_multiple %43, 256 : i32
      %c0_28 = arith.constant 0 : index
      %45 = arith.index_cast %44 : i32 to index
      %c0_29 = arith.constant 0 : index
      %46 = vector.load %arg2[%c0_28, %45, %c0_29] : memref<1x256x4xf32, #tpu.memory_space<vmem>>, vector<1x256x4xf32>
      %47 = vector.shape_cast %46 : vector<1x256x4xf32> to vector<256x4xf32>
      %cst_30 = arith.constant dense<0.000000e+00> : vector<4xf32>
      %48 = vector.multi_reduction <add>, %47, %cst_30 [0] : vector<256x4xf32> to vector<4xf32>
      %49 = vector.shape_cast %48 : vector<4xf32> to vector<1x4xf32>
      %50 = arith.addf %42, %49 : vector<1x4xf32>
      %c1_i32 = arith.constant 1 : i32
      %cst_31 = arith.constant dense<0.000000e+00> : vector<1xf32>
      %51 = vector.multi_reduction <add>, %50, %cst_31 [1] : vector<1x4xf32> to vector<1xf32>
      %52 = vector.shape_cast %51 : vector<1xf32> to vector<1x1xf32>
      %cst_32 = arith.constant 1.024000e+03 : f32
      %53 = vector.broadcast %cst_32 : f32 to vector<1x1xf32>
      %54 = arith.divf %52, %53 : vector<1x1xf32>
      %55 = vector.shape_cast %54 : vector<1x1xf32> to vector<1x1xf32>
      %56 = vector.broadcast %55 : vector<1x1xf32> to vector<1x4xf32>
      %cst_33 = arith.constant 0.000000e+00 : f32
      %57 = vector.broadcast %cst_33 : f32 to vector<1x4xf32>
      %c0_i32_34 = arith.constant 0 : i32
      %c256_i32_35 = arith.constant 256 : i32
      %58 = arith.muli %c0_i32_34, %c256_i32_35 : i32
      %59 = tpu.assume_multiple %58, 256 : i32
      %c0_36 = arith.constant 0 : index
      %60 = arith.index_cast %59 : i32 to index
      %c0_37 = arith.constant 0 : index
      %61 = vector.load %arg2[%c0_36, %60, %c0_37] : memref<1x256x4xf32, #tpu.memory_space<vmem>>, vector<1x256x4xf32>
      %62 = vector.shape_cast %61 : vector<1x256x4xf32> to vector<256x4xf32>
      %63 = vector.broadcast %56 : vector<1x4xf32> to vector<256x4xf32>
      %64 = arith.subf %62, %63 : vector<256x4xf32>
      %65 = arith.mulf %64, %64 : vector<256x4xf32>
      %cst_38 = arith.constant dense<0.000000e+00> : vector<4xf32>
      %66 = vector.multi_reduction <add>, %65, %cst_38 [0] : vector<256x4xf32> to vector<4xf32>
      %67 = vector.shape_cast %66 : vector<4xf32> to vector<1x4xf32>
      %68 = arith.addf %57, %67 : vector<1x4xf32>
      %c1_i32_39 = arith.constant 1 : i32
      %cst_40 = arith.constant dense<0.000000e+00> : vector<1xf32>
      %69 = vector.multi_reduction <add>, %68, %cst_40 [1] : vector<1x4xf32> to vector<1xf32>
      %70 = vector.shape_cast %69 : vector<1xf32> to vector<1x1xf32>
      %cst_41 = arith.constant 1.024000e+03 : f32
      %71 = vector.broadcast %cst_41 : f32 to vector<1x1xf32>
      %72 = arith.divf %70, %71 : vector<1x1xf32>
      %73 = vector.shape_cast %72 : vector<1x1xf32> to vector<1x1xf32>
      %74 = vector.broadcast %73 : vector<1x1xf32> to vector<1x4xf32>
      %c0_42 = arith.constant 0 : index
      %c0_43 = arith.constant 0 : index
      %75 = vector.load %arg3[%c0_42, %c0_43] : memref<1x4xf32, #tpu.memory_space<vmem>>, vector<1x4xf32>
      %cst_44 = arith.constant 9.99999997E-7 : f32
      %76 = vector.broadcast %cst_44 : f32 to vector<1x4xf32>
      %77 = arith.addf %74, %76 : vector<1x4xf32>
      %78 = math.rsqrt %77 : vector<1x4xf32>
      %79 = arith.mulf %75, %78 : vector<1x4xf32>
      %c0_45 = arith.constant 0 : index
      %c0_46 = arith.constant 0 : index
      %80 = vector.load %arg4[%c0_45, %c0_46] : memref<1x4xf32, #tpu.memory_space<vmem>>, vector<1x4xf32>
      %81 = arith.mulf %56, %79 : vector<1x4xf32>
      %82 = arith.subf %80, %81 : vector<1x4xf32>
      %c0_47 = arith.constant 0 : index
      %c0_48 = arith.constant 0 : index
      %83 = vector.load %arg16[%c0_47, %c0_48] : memref<1x4xf32, #tpu.memory_space<vmem>>, vector<1x4xf32>
      tpu.vector_store %arg16[%c0_47, %c0_48], %79 {strides = array<i32>} : memref<1x4xf32, #tpu.memory_space<vmem>>, vector<1x4xf32>,
      %c0_49 = arith.constant 0 : index
      %c0_50 = arith.constant 0 : index
      %84 = vector.load %arg17[%c0_49, %c0_50] : memref<1x4xf32, #tpu.memory_space<vmem>>, vector<1x4xf32>
      tpu.vector_store %arg17[%c0_49, %c0_50], %82 {strides = array<i32>} : memref<1x4xf32, #tpu.memory_space<vmem>>, vector<1x4xf32>,
      %c0_51 = arith.constant 0 : index
      %c0_52 = arith.constant 0 : index
      %c0_53 = arith.constant 0 : index
      %85 = vector.load %arg2[%c0_51, %c0_52, %c0_53] : memref<1x256x4xf32, #tpu.memory_space<vmem>>, vector<1x256x4xf32>
      %86 = vector.shape_cast %85 : vector<1x256x4xf32> to vector<256x4xf32>
      %87 = vector.broadcast %79 : vector<1x4xf32> to vector<256x4xf32>
      %88 = arith.mulf %86, %87 : vector<256x4xf32>
      %89 = vector.broadcast %82 : vector<1x4xf32> to vector<256x4xf32>
      %90 = arith.addf %88, %89 : vector<256x4xf32>
      %c0_54 = arith.constant 0 : index
      %c0_55 = arith.constant 0 : index
      %91 = vector.load %arg7[%c0_54, %c0_55] : memref<4x4xf32, #tpu.memory_space<vmem>>, vector<4x4xf32>
      %cst_56 = arith.constant dense<0.000000e+00> : vector<256x4xf32>
      %92 = tpu.matmul %90, %91, %cst_56 {dimension_numbers = #tpu.dot_dimension_numbers<[1], [0], [0], [1], [0, 0, 1, 1], [], []>} : vector<256x4xf32>, vector<4x4xf32>, vector<256x4xf32> -> vector<256x4xf32>
      %c0_57 = arith.constant 0 : index
      %c0_58 = arith.constant 0 : index
      %93 = vector.load %arg8[%c0_57, %c0_58] : memref<1x4xf32, #tpu.memory_space<vmem>>, vector<1x4xf32>
      %94 = vector.broadcast %93 : vector<1x4xf32> to vector<256x4xf32>
      %95 = arith.addf %92, %94 : vector<256x4xf32>
      %c0_59 = arith.constant 0 : index
      %c0_60 = arith.constant 0 : index
      %96 = vector.load %arg9[%c0_59, %c0_60] : memref<4x4xf32, #tpu.memory_space<vmem>>, vector<4x4xf32>
      %cst_61 = arith.constant dense<0.000000e+00> : vector<256x4xf32>
      %97 = tpu.matmul %90, %96, %cst_61 {dimension_numbers = #tpu.dot_dimension_numbers<[1], [0], [0], [1], [0, 0, 1, 1], [], []>} : vector<256x4xf32>, vector<4x4xf32>, vector<256x4xf32> -> vector<256x4xf32>
      %c0_62 = arith.constant 0 : index
      %c0_63 = arith.constant 0 : index
      %98 = vector.load %arg10[%c0_62, %c0_63] : memref<1x4xf32, #tpu.memory_space<vmem>>, vector<1x4xf32>
      %99 = vector.broadcast %98 : vector<1x4xf32> to vector<256x4xf32>
      %100 = arith.addf %97, %99 : vector<256x4xf32>
      %101 = tpu.transpose %95, [1, 0] : vector<256x4xf32> -> vector<4x256xf32>
      %c0_64 = arith.constant 0 : index
      %c0_65 = arith.constant 0 : index
      %102 = vector.load %arg14[%c0_64, %c0_65] : memref<4x256xf32, #tpu.memory_space<vmem>>, vector<4x256xf32>
      tpu.vector_store %arg14[%c0_64, %c0_65], %101 {strides = array<i32>} : memref<4x256xf32, #tpu.memory_space<vmem>>, vector<4x256xf32>,
      %c0_66 = arith.constant 0 : index
      %c0_67 = arith.constant 0 : index
      %103 = vector.load %arg15[%c0_66, %c0_67] : memref<256x4xf32, #tpu.memory_space<vmem>>, vector<256x4xf32>
      tpu.vector_store %arg15[%c0_66, %c0_67], %100 {strides = array<i32>} : memref<256x4xf32, #tpu.memory_space<vmem>>, vector<256x4xf32>,
    } else {
    }
    %c64_i32 = arith.constant 64 : i32
    %3 = arith.muli %arg1, %c64_i32 : i32
    %4 = tpu.assume_multiple %3, 64 : i32
    %c0 = arith.constant 0 : index
    %5 = arith.index_cast %4 : i32 to index
    %c0_1 = arith.constant 0 : index
    %6 = vector.load %arg2[%c0, %5, %c0_1] : memref<1x256x4xf32, #tpu.memory_space<vmem>>, vector<1x64x4xf32>
    %7 = vector.shape_cast %6 : vector<1x64x4xf32> to vector<64x4xf32>
    %c0_2 = arith.constant 0 : index
    %c0_3 = arith.constant 0 : index
    %8 = vector.load %arg16[%c0_2, %c0_3] : memref<1x4xf32, #tpu.memory_space<vmem>>, vector<1x4xf32>
    %9 = vector.broadcast %8 : vector<1x4xf32> to vector<64x4xf32>
    %10 = arith.mulf %7, %9 : vector<64x4xf32>
    %c0_4 = arith.constant 0 : index
    %c0_5 = arith.constant 0 : index
    %11 = vector.load %arg17[%c0_4, %c0_5] : memref<1x4xf32, #tpu.memory_space<vmem>>, vector<1x4xf32>
    %12 = vector.broadcast %11 : vector<1x4xf32> to vector<64x4xf32>
    %13 = arith.addf %10, %12 : vector<64x4xf32>
    %c0_6 = arith.constant 0 : index
    %c0_7 = arith.constant 0 : index
    %14 = vector.load %arg5[%c0_6, %c0_7] : memref<4x4xf32, #tpu.memory_space<vmem>>, vector<4x4xf32>
    %cst = arith.constant dense<0.000000e+00> : vector<64x4xf32>
    %15 = tpu.matmul %13, %14, %cst {dimension_numbers = #tpu.dot_dimension_numbers<[1], [0], [0], [1], [0, 0, 1, 1], [], []>} : vector<64x4xf32>, vector<4x4xf32>, vector<64x4xf32> -> vector<64x4xf32>
    %c0_8 = arith.constant 0 : index
    %c0_9 = arith.constant 0 : index
    %16 = vector.load %arg6[%c0_8, %c0_9] : memref<1x4xf32, #tpu.memory_space<vmem>>, vector<1x4xf32>
    %17 = vector.broadcast %16 : vector<1x4xf32> to vector<64x4xf32>
    %18 = arith.addf %15, %17 : vector<64x4xf32>
    %c0_10 = arith.constant 0 : index
    %c0_11 = arith.constant 0 : index
    %19 = vector.load %arg14[%c0_10, %c0_11] : memref<4x256xf32, #tpu.memory_space<vmem>>, vector<4x256xf32>
    %cst_12 = arith.constant dense<0.000000e+00> : vector<64x256xf32>
    %20 = tpu.matmul %18, %19, %cst_12 {dimension_numbers = #tpu.dot_dimension_numbers<[1], [0], [0], [1], [0, 0, 1, 1], [], []>} : vector<64x4xf32>, vector<4x256xf32>, vector<64x256xf32> -> vector<64x256xf32>
    %cst_13 = arith.constant dense<0xFF800000> : vector<64xf32>
    %21 = vector.multi_reduction <maximumf>, %20, %cst_13 [1] : vector<64x256xf32> to vector<64xf32>
    %22 = vector.shape_cast %21 : vector<64xf32> to vector<64x1xf32>
    %23 = vector.broadcast %22 : vector<64x1xf32> to vector<64x256xf32>
    %24 = arith.subf %20, %23 : vector<64x256xf32>
    %25 = math.exp %24 : vector<64x256xf32>
    %cst_14 = arith.constant dense<0.000000e+00> : vector<64xf32>
    %26 = vector.multi_reduction <add>, %25, %cst_14 [1] : vector<64x256xf32> to vector<64xf32>
    %27 = vector.shape_cast %26 : vector<64xf32> to vector<64x1xf32>
    %c0_15 = arith.constant 0 : index
    %c0_16 = arith.constant 0 : index
    %28 = vector.load %arg15[%c0_15, %c0_16] : memref<256x4xf32, #tpu.memory_space<vmem>>, vector<256x4xf32>
    %cst_17 = arith.constant dense<0.000000e+00> : vector<64x4xf32>
    %29 = tpu.matmul %25, %28, %cst_17 {dimension_numbers = #tpu.dot_dimension_numbers<[1], [0], [0], [1], [0, 0, 1, 1], [], []>} : vector<64x256xf32>, vector<256x4xf32>, vector<64x4xf32> -> vector<64x4xf32>
    %30 = tpu.reciprocal %27 : vector<64x1xf32> -> vector<64x1xf32>
    %31 = vector.broadcast %30 : vector<64x1xf32> to vector<64x4xf32>
    %32 = arith.mulf %29, %31 : vector<64x4xf32>
    %c0_18 = arith.constant 0 : index
    %c0_19 = arith.constant 0 : index
    %33 = vector.load %arg11[%c0_18, %c0_19] : memref<4x4xf32, #tpu.memory_space<vmem>>, vector<4x4xf32>
    %cst_20 = arith.constant dense<0.000000e+00> : vector<64x4xf32>
    %34 = tpu.matmul %32, %33, %cst_20 {dimension_numbers = #tpu.dot_dimension_numbers<[1], [0], [0], [1], [0, 0, 1, 1], [], []>} : vector<64x4xf32>, vector<4x4xf32>, vector<64x4xf32> -> vector<64x4xf32>
    %c0_21 = arith.constant 0 : index
    %c0_22 = arith.constant 0 : index
    %35 = vector.load %arg12[%c0_21, %c0_22] : memref<1x4xf32, #tpu.memory_space<vmem>>, vector<1x4xf32>
    %36 = vector.broadcast %35 : vector<1x4xf32> to vector<64x4xf32>
    %37 = arith.addf %34, %36 : vector<64x4xf32>
    %38 = arith.addf %7, %37 : vector<64x4xf32>
    %c0_23 = arith.constant 0 : index
    %c0_24 = arith.constant 0 : index
    %c0_25 = arith.constant 0 : index
    %39 = vector.load %arg13[%c0_23, %c0_24, %c0_25] : memref<1x64x4xf32, #tpu.memory_space<vmem>>, vector<1x64x4xf32>
    %40 = vector.shape_cast %39 : vector<1x64x4xf32> to vector<64x4xf32>
    %41 = vector.shape_cast %38 : vector<64x4xf32> to vector<1x64x4xf32>
    tpu.vector_store %arg13[%c0_23, %c0_24, %c0_25], %41 {strides = array<i32>} : memref<1x64x4xf32, #tpu.memory_space<vmem>>, vector<1x64x4xf32>,
    return
  }
  func.func @transform_0(%arg0: i32, %arg1: i32) -> (i32, i32, i32) {
    %c0_i32 = arith.constant 0 : i32
    %c0_i32_0 = arith.constant 0 : i32
    %c0_i32_1 = arith.constant 0 : i32
    return %arg0, %c0_i32, %c0_i32_0 : i32, i32, i32
  }
  func.func @transform_1(%arg0: i32, %arg1: i32) -> (i32, i32) {
    %c0_i32 = arith.constant 0 : i32
    %c0_i32_0 = arith.constant 0 : i32
    %c0_i32_1 = arith.constant 0 : i32
    return %c0_i32, %c0_i32_0 : i32, i32
  }
  func.func @transform_2(%arg0: i32, %arg1: i32) -> (i32, i32) {
    %c0_i32 = arith.constant 0 : i32
    %c0_i32_0 = arith.constant 0 : i32
    %c0_i32_1 = arith.constant 0 : i32
    return %c0_i32, %c0_i32_0 : i32, i32
  }
  func.func @transform_3(%arg0: i32, %arg1: i32) -> (i32, i32) {
    %c0_i32 = arith.constant 0 : i32
    %c0_i32_0 = arith.constant 0 : i32
    %c0_i32_1 = arith.constant 0 : i32
    return %c0_i32, %c0_i32_0 : i32, i32
  }
  func.func @transform_4(%arg0: i32, %arg1: i32) -> (i32, i32) {
    %c0_i32 = arith.constant 0 : i32
    %c0_i32_0 = arith.constant 0 : i32
    %c0_i32_1 = arith.constant 0 : i32
    return %c0_i32, %c0_i32_0 : i32, i32
  }
  func.func @transform_5(%arg0: i32, %arg1: i32) -> (i32, i32) {
    %c0_i32 = arith.constant 0 : i32
    %c0_i32_0 = arith.constant 0 : i32
    %c0_i32_1 = arith.constant 0 : i32
    return %c0_i32, %c0_i32_0 : i32, i32
  }
  func.func @transform_6(%arg0: i32, %arg1: i32) -> (i32, i32) {
    %c0_i32 = arith.constant 0 : i32
    %c0_i32_0 = arith.constant 0 : i32
    %c0_i32_1 = arith.constant 0 : i32
    return %c0_i32, %c0_i32_0 : i32, i32
  }
  func.func @transform_7(%arg0: i32, %arg1: i32) -> (i32, i32) {
    %c0_i32 = arith.constant 0 : i32
    %c0_i32_0 = arith.constant 0 : i32
    %c0_i32_1 = arith.constant 0 : i32
    return %c0_i32, %c0_i32_0 : i32, i32
  }
  func.func @transform_8(%arg0: i32, %arg1: i32) -> (i32, i32) {
    %c0_i32 = arith.constant 0 : i32
    %c0_i32_0 = arith.constant 0 : i32
    %c0_i32_1 = arith.constant 0 : i32
    return %c0_i32, %c0_i32_0 : i32, i32
  }
  func.func @transform_9(%arg0: i32, %arg1: i32) -> (i32, i32) {
    %c0_i32 = arith.constant 0 : i32
    %c0_i32_0 = arith.constant 0 : i32
    %c0_i32_1 = arith.constant 0 : i32
    return %c0_i32, %c0_i32_0 : i32, i32
  }
  func.func @transform_10(%arg0: i32, %arg1: i32) -> (i32, i32) {
    %c0_i32 = arith.constant 0 : i32
    %c0_i32_0 = arith.constant 0 : i32
    %c0_i32_1 = arith.constant 0 : i32
    return %c0_i32, %c0_i32_0 : i32, i32
  }
  func.func @transform_11(%arg0: i32, %arg1: i32) -> (i32, i32, i32) {
    %c0_i32 = arith.constant 0 : i32
    %c0_i32_0 = arith.constant 0 : i32
    return %arg0, %arg1, %c0_i32 : i32, i32, i32
  }
}

module attributes {stable_mosaic.version = 11 : i64} {
  func.func @_attn_kernel(%arg0: i32, %arg1: i32, %arg2: memref<1x256x4xf32, #tpu.memory_space<vmem>>, %arg3: memref<1x4xf32, #tpu.memory_space<vmem>>, %arg4: memref<1x4xf32, #tpu.memory_space<vmem>>, %arg5: memref<4x4xf32, #tpu.memory_space<vmem>>, %arg6: memref<1x4xf32, #tpu.memory_space<vmem>>, %arg7: memref<4x4xf32, #tpu.memory_space<vmem>>, %arg8: memref<1x4xf32, #tpu.memory_space<vmem>>, %arg9: memref<4x4xf32, #tpu.memory_space<vmem>>, %arg10: memref<1x4xf32, #tpu.memory_space<vmem>>, %arg11: memref<4x4xf32, #tpu.memory_space<vmem>>, %arg12: memref<1x4xf32, #tpu.memory_space<vmem>>, %arg13: memref<1x64x4xf32, #tpu.memory_space<vmem>>, %arg14: memref<4x256xf32, #tpu.memory_space<vmem>>, %arg15: memref<256x4xf32, #tpu.memory_space<vmem>>, %arg16: memref<1x4xf32, #tpu.memory_space<vmem>>, %arg17: memref<1x4xf32, #tpu.memory_space<vmem>>) attributes {dimension_semantics = [#tpu.dimension_semantics<parallel>, #tpu.dimension_semantics<arbitrary>], iteration_bounds = array<i64: 2, 4>, scalar_prefetch = 0 : i64, scratch_operands = 4 : i64, tpu.core_type = #tpu.core_type<tc>, window_params = [{transform_indices = @transform_0, window_bounds = array<i64: 1, 256, 4>}, {pipeline_mode = #tpu.pipeline_mode<synchronous>, transform_indices = @transform_1, window_bounds = array<i64: 1, 4>}, {pipeline_mode = #tpu.pipeline_mode<synchronous>, transform_indices = @transform_2, window_bounds = array<i64: 1, 4>}, {pipeline_mode = #tpu.pipeline_mode<synchronous>, transform_indices = @transform_3, window_bounds = array<i64: 4, 4>}, {pipeline_mode = #tpu.pipeline_mode<synchronous>, transform_indices = @transform_4, window_bounds = array<i64: 1, 4>}, {pipeline_mode = #tpu.pipeline_mode<synchronous>, transform_indices = @transform_5, window_bounds = array<i64: 4, 4>}, {pipeline_mode = #tpu.pipeline_mode<synchronous>, transform_indices = @transform_6, window_bounds = array<i64: 1, 4>}, {pipeline_mode = #tpu.pipeline_mode<synchronous>, transform_indices = @transform_7, window_bounds = array<i64: 4, 4>}, {pipeline_mode = #tpu.pipeline_mode<synchronous>, transform_indices = @transform_8, window_bounds = array<i64: 1, 4>}, {pipeline_mode = #tpu.pipeline_mode<synchronous>, transform_indices = @transform_9, window_bounds = array<i64: 4, 4>}, {pipeline_mode = #tpu.pipeline_mode<synchronous>, transform_indices = @transform_10, window_bounds = array<i64: 1, 4>}, {transform_indices = @transform_11, window_bounds = array<i64: 1, 64, 4>}]} {
    %c0_i32 = arith.constant 0 : i32
    %0 = arith.cmpi eq, %arg1, %c0_i32 : i32
    %1 = arith.extui %0 : i1 to i32
    %c0_i32_0 = arith.constant 0 : i32
    %2 = arith.cmpi ne, %1, %c0_i32_0 : i32
    scf.if %2 {
      %cst_26 = arith.constant 0.000000e+00 : f32
      %42 = vector.broadcast %cst_26 : f32 to vector<1x4xf32>
      %c0_i32_27 = arith.constant 0 : i32
      %c256_i32 = arith.constant 256 : i32
      %43 = arith.muli %c0_i32_27, %c256_i32 : i32
      %44 = tpu.assume_multiple %43, 256 : i32
      %c0_28 = arith.constant 0 : index
      %45 = arith.index_cast %44 : i32 to index
      %c0_29 = arith.constant 0 : index
      %46 = vector.load %arg2[%c0_28, %45, %c0_29] : memref<1x256x4xf32, #tpu.memory_space<vmem>>, vector<1x256x4xf32>
      %47 = vector.shape_cast %46 : vector<1x256x4xf32> to vector<256x4xf32>
      %cst_30 = arith.constant dense<0.000000e+00> : vector<4xf32>
      %48 = vector.multi_reduction <add>, %47, %cst_30 [0] : vector<256x4xf32> to vector<4xf32>
      %49 = vector.shape_cast %48 : vector<4xf32> to vector<1x4xf32>
      %50 = arith.addf %42, %49 : vector<1x4xf32>
      %c1_i32 = arith.constant 1 : i32
      %cst_31 = arith.constant dense<0.000000e+00> : vector<1xf32>
      %51 = vector.multi_reduction <add>, %50, %cst_31 [1] : vector<1x4xf32> to vector<1xf32>
      %52 = vector.shape_cast %51 : vector<1xf32> to vector<1x1xf32>
      %cst_32 = arith.constant 1.024000e+03 : f32
      %53 = vector.broadcast %cst_32 : f32 to vector<1x1xf32>
      %54 = arith.divf %52, %53 : vector<1x1xf32>
      %55 = vector.shape_cast %54 : vector<1x1xf32> to vector<1x1xf32>
      %56 = vector.broadcast %55 : vector<1x1xf32> to vector<1x4xf32>
      %cst_33 = arith.constant 0.000000e+00 : f32
      %57 = vector.broadcast %cst_33 : f32 to vector<1x4xf32>
      %c0_i32_34 = arith.constant 0 : i32
      %c256_i32_35 = arith.constant 256 : i32
      %58 = arith.muli %c0_i32_34, %c256_i32_35 : i32
      %59 = tpu.assume_multiple %58, 256 : i32
      %c0_36 = arith.constant 0 : index
      %60 = arith.index_cast %59 : i32 to index
      %c0_37 = arith.constant 0 : index
      %61 = vector.load %arg2[%c0_36, %60, %c0_37] : memref<1x256x4xf32, #tpu.memory_space<vmem>>, vector<1x256x4xf32>
      %62 = vector.shape_cast %61 : vector<1x256x4xf32> to vector<256x4xf32>
      %63 = vector.broadcast %56 : vector<1x4xf32> to vector<256x4xf32>
      %64 = arith.subf %62, %63 : vector<256x4xf32>
      %65 = arith.mulf %64, %64 : vector<256x4xf32>
      %cst_38 = arith.constant dense<0.000000e+00> : vector<4xf32>
      %66 = vector.multi_reduction <add>, %65, %cst_38 [0] : vector<256x4xf32> to vector<4xf32>
      %67 = vector.shape_cast %66 : vector<4xf32> to vector<1x4xf32>
      %68 = arith.addf %57, %67 : vector<1x4xf32>
      %c1_i32_39 = arith.constant 1 : i32
      %cst_40 = arith.constant dense<0.000000e+00> : vector<1xf32>
      %69 = vector.multi_reduction <add>, %68, %cst_40 [1] : vector<1x4xf32> to vector<1xf32>
      %70 = vector.shape_cast %69 : vector<1xf32> to vector<1x1xf32>
      %cst_41 = arith.constant 1.024000e+03 : f32
      %71 = vector.broadcast %cst_41 : f32 to vector<1x1xf32>
      %72 = arith.divf %70, %71 : vector<1x1xf32>
      %73 = vector.shape_cast %72 : vector<1x1xf32> to vector<1x1xf32>
      %74 = vector.broadcast %73 : vector<1x1xf32> to vector<1x4xf32>
      %c0_42 = arith.constant 0 : index
      %c0_43 = arith.constant 0 : index
      %75 = vector.load %arg3[%c0_42, %c0_43] : memref<1x4xf32, #tpu.memory_space<vmem>>, vector<1x4xf32>
      %cst_44 = arith.constant 9.99999997E-7 : f32
      %76 = vector.broadcast %cst_44 : f32 to vector<1x4xf32>
      %77 = arith.addf %74, %76 : vector<1x4xf32>
      %78 = math.rsqrt %77 : vector<1x4xf32>
      %79 = arith.mulf %75, %78 : vector<1x4xf32>
      %c0_45 = arith.constant 0 : index
      %c0_46 = arith.constant 0 : index
      %80 = vector.load %arg4[%c0_45, %c0_46] : memref<1x4xf32, #tpu.memory_space<vmem>>, vector<1x4xf32>
      %81 = arith.mulf %56, %79 : vector<1x4xf32>
      %82 = arith.subf %80, %81 : vector<1x4xf32>
      %c0_47 = arith.constant 0 : index
      %c0_48 = arith.constant 0 : index
      %83 = vector.load %arg16[%c0_47, %c0_48] : memref<1x4xf32, #tpu.memory_space<vmem>>, vector<1x4xf32>
      tpu.vector_store %arg16[%c0_47, %c0_48], %79 {strides = array<i32>} : memref<1x4xf32, #tpu.memory_space<vmem>>, vector<1x4xf32>,
      %c0_49 = arith.constant 0 : index
      %c0_50 = arith.constant 0 : index
      %84 = vector.load %arg17[%c0_49, %c0_50] : memref<1x4xf32, #tpu.memory_space<vmem>>, vector<1x4xf32>
      tpu.vector_store %arg17[%c0_49, %c0_50], %82 {strides = array<i32>} : memref<1x4xf32, #tpu.memory_space<vmem>>, vector<1x4xf32>,
      %c0_51 = arith.constant 0 : index
      %c0_52 = arith.constant 0 : index
      %c0_53 = arith.constant 0 : index
      %85 = vector.load %arg2[%c0_51, %c0_52, %c0_53] : memref<1x256x4xf32, #tpu.memory_space<vmem>>, vector<1x256x4xf32>
      %86 = vector.shape_cast %85 : vector<1x256x4xf32> to vector<256x4xf32>
      %87 = vector.broadcast %79 : vector<1x4xf32> to vector<256x4xf32>
      %88 = arith.mulf %86, %87 : vector<256x4xf32>
      %89 = vector.broadcast %82 : vector<1x4xf32> to vector<256x4xf32>
      %90 = arith.addf %88, %89 : vector<256x4xf32>
      %c0_54 = arith.constant 0 : index
      %c0_55 = arith.constant 0 : index
      %91 = vector.load %arg7[%c0_54, %c0_55] : memref<4x4xf32, #tpu.memory_space<vmem>>, vector<4x4xf32>
      %cst_56 = arith.constant dense<0.000000e+00> : vector<256x4xf32>
      %92 = tpu.matmul %90, %91, %cst_56 {dimension_numbers = #tpu.dot_dimension_numbers<[1], [0], [0], [1], [0, 0, 1, 1], [], []>} : vector<256x4xf32>, vector<4x4xf32>, vector<256x4xf32> -> vector<256x4xf32>
      %c0_57 = arith.constant 0 : index
      %c0_58 = arith.constant 0 : index
      %93 = vector.load %arg8[%c0_57, %c0_58] : memref<1x4xf32, #tpu.memory_space<vmem>>, vector<1x4xf32>
      %94 = vector.broadcast %93 : vector<1x4xf32> to vector<256x4xf32>
      %95 = arith.addf %92, %94 : vector<256x4xf32>
      %c0_59 = arith.constant 0 : index
      %c0_60 = arith.constant 0 : index
      %96 = vector.load %arg9[%c0_59, %c0_60] : memref<4x4xf32, #tpu.memory_space<vmem>>, vector<4x4xf32>
      %cst_61 = arith.constant dense<0.000000e+00> : vector<256x4xf32>
      %97 = tpu.matmul %90, %96, %cst_61 {dimension_numbers = #tpu.dot_dimension_numbers<[1], [0], [0], [1], [0, 0, 1, 1], [], []>} : vector<256x4xf32>, vector<4x4xf32>, vector<256x4xf32> -> vector<256x4xf32>
      %c0_62 = arith.constant 0 : index
      %c0_63 = arith.constant 0 : index
      %98 = vector.load %arg10[%c0_62, %c0_63] : memref<1x4xf32, #tpu.memory_space<vmem>>, vector<1x4xf32>
      %99 = vector.broadcast %98 : vector<1x4xf32> to vector<256x4xf32>
      %100 = arith.addf %97, %99 : vector<256x4xf32>
      %101 = tpu.transpose %95, [1, 0] : vector<256x4xf32> -> vector<4x256xf32>
      %c0_64 = arith.constant 0 : index
      %c0_65 = arith.constant 0 : index
      %102 = vector.load %arg14[%c0_64, %c0_65] : memref<4x256xf32, #tpu.memory_space<vmem>>, vector<4x256xf32>
      tpu.vector_store %arg14[%c0_64, %c0_65], %101 {strides = array<i32>} : memref<4x256xf32, #tpu.memory_space<vmem>>, vector<4x256xf32>,
      %c0_66 = arith.constant 0 : index
      %c0_67 = arith.constant 0 : index
      %103 = vector.load %arg15[%c0_66, %c0_67] : memref<256x4xf32, #tpu.memory_space<vmem>>, vector<256x4xf32>
      tpu.vector_store %arg15[%c0_66, %c0_67], %100 {strides = array<i32>} : memref<256x4xf32, #tpu.memory_space<vmem>>, vector<256x4xf32>,
    } else {
    }
    %c64_i32 = arith.constant 64 : i32
    %3 = arith.muli %arg1, %c64_i32 : i32
    %4 = tpu.assume_multiple %3, 64 : i32
    %c0 = arith.constant 0 : index
    %5 = arith.index_cast %4 : i32 to index
    %c0_1 = arith.constant 0 : index
    %6 = vector.load %arg2[%c0, %5, %c0_1] : memref<1x256x4xf32, #tpu.memory_space<vmem>>, vector<1x64x4xf32>
    %7 = vector.shape_cast %6 : vector<1x64x4xf32> to vector<64x4xf32>
    %c0_2 = arith.constant 0 : index
    %c0_3 = arith.constant 0 : index
    %8 = vector.load %arg16[%c0_2, %c0_3] : memref<1x4xf32, #tpu.memory_space<vmem>>, vector<1x4xf32>
    %9 = vector.broadcast %8 : vector<1x4xf32> to vector<64x4xf32>
    %10 = arith.mulf %7, %9 : vector<64x4xf32>
    %c0_4 = arith.constant 0 : index
    %c0_5 = arith.constant 0 : index
    %11 = vector.load %arg17[%c0_4, %c0_5] : memref<1x4xf32, #tpu.memory_space<vmem>>, vector<1x4xf32>
    %12 = vector.broadcast %11 : vector<1x4xf32> to vector<64x4xf32>
    %13 = arith.addf %10, %12 : vector<64x4xf32>
    %c0_6 = arith.constant 0 : index
    %c0_7 = arith.constant 0 : index
    %14 = vector.load %arg5[%c0_6, %c0_7] : memref<4x4xf32, #tpu.memory_space<vmem>>, vector<4x4xf32>
    %cst = arith.constant dense<0.000000e+00> : vector<64x4xf32>
    %15 = tpu.matmul %13, %14, %cst {dimension_numbers = #tpu.dot_dimension_numbers<[1], [0], [0], [1], [0, 0, 1, 1], [], []>} : vector<64x4xf32>, vector<4x4xf32>, vector<64x4xf32> -> vector<64x4xf32>
    %c0_8 = arith.constant 0 : index
    %c0_9 = arith.constant 0 : index
    %16 = vector.load %arg6[%c0_8, %c0_9] : memref<1x4xf32, #tpu.memory_space<vmem>>, vector<1x4xf32>
    %17 = vector.broadcast %16 : vector<1x4xf32> to vector<64x4xf32>
    %18 = arith.addf %15, %17 : vector<64x4xf32>
    %c0_10 = arith.constant 0 : index
    %c0_11 = arith.constant 0 : index
    %19 = vector.load %arg14[%c0_10, %c0_11] : memref<4x256xf32, #tpu.memory_space<vmem>>, vector<4x256xf32>
    %cst_12 = arith.constant dense<0.000000e+00> : vector<64x256xf32>
    %20 = tpu.matmul %18, %19, %cst_12 {dimension_numbers = #tpu.dot_dimension_numbers<[1], [0], [0], [1], [0, 0, 1, 1], [], []>} : vector<64x4xf32>, vector<4x256xf32>, vector<64x256xf32> -> vector<64x256xf32>
    %cst_13 = arith.constant dense<0xFF800000> : vector<64xf32>
    %21 = vector.multi_reduction <maximumf>, %20, %cst_13 [1] : vector<64x256xf32> to vector<64xf32>
    %22 = vector.shape_cast %21 : vector<64xf32> to vector<64x1xf32>
    %23 = vector.broadcast %22 : vector<64x1xf32> to vector<64x256xf32>
    %24 = arith.subf %20, %23 : vector<64x256xf32>
    %25 = math.exp %24 : vector<64x256xf32>
    %cst_14 = arith.constant dense<0.000000e+00> : vector<64xf32>
    %26 = vector.multi_reduction <add>, %25, %cst_14 [1] : vector<64x256xf32> to vector<64xf32>
    %27 = vector.shape_cast %26 : vector<64xf32> to vector<64x1xf32>
    %c0_15 = arith.constant 0 : index
    %c0_16 = arith.constant 0 : index
    %28 = vector.load %arg15[%c0_15, %c0_16] : memref<256x4xf32, #tpu.memory_space<vmem>>, vector<256x4xf32>
    %cst_17 = arith.constant dense<0.000000e+00> : vector<64x4xf32>
    %29 = tpu.matmul %25, %28, %cst_17 {dimension_numbers = #tpu.dot_dimension_numbers<[1], [0], [0], [1], [0, 0, 1, 1], [], []>} : vector<64x256xf32>, vector<256x4xf32>, vector<64x4xf32> -> vector<64x4xf32>
    %30 = tpu.reciprocal %27 : vector<64x1xf32> -> vector<64x1xf32>
    %31 = vector.broadcast %30 : vector<64x1xf32> to vector<64x4xf32>
    %32 = arith.mulf %29, %31 : vector<64x4xf32>
    %c0_18 = arith.constant 0 : index
    %c0_19 = arith.constant 0 : index
    %33 = vector.load %arg11[%c0_18, %c0_19] : memref<4x4xf32, #tpu.memory_space<vmem>>, vector<4x4xf32>
    %cst_20 = arith.constant dense<0.000000e+00> : vector<64x4xf32>
    %34 = tpu.matmul %32, %33, %cst_20 {dimension_numbers = #tpu.dot_dimension_numbers<[1], [0], [0], [1], [0, 0, 1, 1], [], []>} : vector<64x4xf32>, vector<4x4xf32>, vector<64x4xf32> -> vector<64x4xf32>
    %c0_21 = arith.constant 0 : index
    %c0_22 = arith.constant 0 : index
    %35 = vector.load %arg12[%c0_21, %c0_22] : memref<1x4xf32, #tpu.memory_space<vmem>>, vector<1x4xf32>
    %36 = vector.broadcast %35 : vector<1x4xf32> to vector<64x4xf32>
    %37 = arith.addf %34, %36 : vector<64x4xf32>
    %38 = arith.addf %7, %37 : vector<64x4xf32>
    %c0_23 = arith.constant 0 : index
    %c0_24 = arith.constant 0 : index
    %c0_25 = arith.constant 0 : index
    %39 = vector.load %arg13[%c0_23, %c0_24, %c0_25] : memref<1x64x4xf32, #tpu.memory_space<vmem>>, vector<1x64x4xf32>
    %40 = vector.shape_cast %39 : vector<1x64x4xf32> to vector<64x4xf32>
    %41 = vector.shape_cast %38 : vector<64x4xf32> to vector<1x64x4xf32>
    tpu.vector_store %arg13[%c0_23, %c0_24, %c0_25], %41 {strides = array<i32>} : memref<1x64x4xf32, #tpu.memory_space<vmem>>, vector<1x64x4xf32>,
    return
  }
  func.func @transform_0(%arg0: i32, %arg1: i32) -> (i32, i32, i32) {
    %c0_i32 = arith.constant 0 : i32
    %c0_i32_0 = arith.constant 0 : i32
    %c0_i32_1 = arith.constant 0 : i32
    return %arg0, %c0_i32, %c0_i32_0 : i32, i32, i32
  }
  func.func @transform_1(%arg0: i32, %arg1: i32) -> (i32, i32) {
    %c0_i32 = arith.constant 0 : i32
    %c0_i32_0 = arith.constant 0 : i32
    %c0_i32_1 = arith.constant 0 : i32
    return %c0_i32, %c0_i32_0 : i32, i32
  }
  func.func @transform_2(%arg0: i32, %arg1: i32) -> (i32, i32) {
    %c0_i32 = arith.constant 0 : i32
    %c0_i32_0 = arith.constant 0 : i32
    %c0_i32_1 = arith.constant 0 : i32
    return %c0_i32, %c0_i32_0 : i32, i32
  }
  func.func @transform_3(%arg0: i32, %arg1: i32) -> (i32, i32) {
    %c0_i32 = arith.constant 0 : i32
    %c0_i32_0 = arith.constant 0 : i32
    %c0_i32_1 = arith.constant 0 : i32
    return %c0_i32, %c0_i32_0 : i32, i32
  }
  func.func @transform_4(%arg0: i32, %arg1: i32) -> (i32, i32) {
    %c0_i32 = arith.constant 0 : i32
    %c0_i32_0 = arith.constant 0 : i32
    %c0_i32_1 = arith.constant 0 : i32
    return %c0_i32, %c0_i32_0 : i32, i32
  }
  func.func @transform_5(%arg0: i32, %arg1: i32) -> (i32, i32) {
    %c0_i32 = arith.constant 0 : i32
    %c0_i32_0 = arith.constant 0 : i32
    %c0_i32_1 = arith.constant 0 : i32
    return %c0_i32, %c0_i32_0 : i32, i32
  }
  func.func @transform_6(%arg0: i32, %arg1: i32) -> (i32, i32) {
    %c0_i32 = arith.constant 0 : i32
    %c0_i32_0 = arith.constant 0 : i32
    %c0_i32_1 = arith.constant 0 : i32
    return %c0_i32, %c0_i32_0 : i32, i32
  }
  func.func @transform_7(%arg0: i32, %arg1: i32) -> (i32, i32) {
    %c0_i32 = arith.constant 0 : i32
    %c0_i32_0 = arith.constant 0 : i32
    %c0_i32_1 = arith.constant 0 : i32
    return %c0_i32, %c0_i32_0 : i32, i32
  }
  func.func @transform_8(%arg0: i32, %arg1: i32) -> (i32, i32) {
    %c0_i32 = arith.constant 0 : i32
    %c0_i32_0 = arith.constant 0 : i32
    %c0_i32_1 = arith.constant 0 : i32
    return %c0_i32, %c0_i32_0 : i32, i32
  }
  func.func @transform_9(%arg0: i32, %arg1: i32) -> (i32, i32) {
    %c0_i32 = arith.constant 0 : i32
    %c0_i32_0 = arith.constant 0 : i32
    %c0_i32_1 = arith.constant 0 : i32
    return %c0_i32, %c0_i32_0 : i32, i32
  }
  func.func @transform_10(%arg0: i32, %arg1: i32) -> (i32, i32) {
    %c0_i32 = arith.constant 0 : i32
    %c0_i32_0 = arith.constant 0 : i32
    %c0_i32_1 = arith.constant 0 : i32
    return %c0_i32, %c0_i32_0 : i32, i32
  }
  func.func @transform_11(%arg0: i32, %arg1: i32) -> (i32, i32, i32) {
    %c0_i32 = arith.constant 0 : i32
    %c0_i32_0 = arith.constant 0 : i32
    return %arg0, %arg1, %c0_i32 : i32, i32, i32
  }
}

</mosaic_0001>

<llo_original>
// kernel: tpu_custom_call.1
$region0: #{tpu_custom_call.1}
  #allocation0 [shape = 'u32[]', space=smem, size = 0x4, offset = 0x4, fixed_abs, tag = 'smem constant byte address 0x4 - core index']
  #allocation1 [shape = 'u32[144,128]{1,0:T(1,128)}', space=vmem, size = 0x12000, scoped, tag = 'internal scratch']
  #allocation2 [shape = 'f32[4,256]{1,0:T(4,128)}', space=vmem, size = 0x1000, scoped, tag = 'scratch operand']
  #allocation3 [shape = 'f32[256,4]{1,0:T(8,128)}', space=vmem, size = 0x20000, scoped, tag = 'scratch operand']
  #allocation4 [shape = 'f32[1,4]{1,0:T(1,128)}', space=vmem, size = 0x200, scoped, tag = 'scratch operand']
  #allocation5 [shape = 'f32[1,4]{1,0:T(1,128)}', space=vmem, size = 0x200, scoped, tag = 'scratch operand']
  %s0 = inlined_call_operand.vmem [shape: f32[2,256,4], index: 0, kind: input, shape index: {}]
  %s1 = inlined_call_operand.vmem [shape: f32[1,4], index: 1, kind: input, shape index: {}]
  %s2 = inlined_call_operand.vmem [shape: f32[1,4], index: 2, kind: input, shape index: {}]
  %s3 = inlined_call_operand.vmem [shape: f32[4,4], index: 3, kind: input, shape index: {}]
  %s4 = inlined_call_operand.vmem [shape: f32[1,4], index: 4, kind: input, shape index: {}]
  %s5 = inlined_call_operand.vmem [shape: f32[4,4], index: 5, kind: input, shape index: {}]
  %s6 = inlined_call_operand.vmem [shape: f32[1,4], index: 6, kind: input, shape index: {}]
  %s7 = inlined_call_operand.vmem [shape: f32[4,4], index: 7, kind: input, shape index: {}]
  %s8 = inlined_call_operand.vmem [shape: f32[1,4], index: 8, kind: input, shape index: {}]
  %s9 = inlined_call_operand.vmem [shape: f32[4,4], index: 9, kind: input, shape index: {}]
  %s10 = inlined_call_operand.vmem [shape: f32[1,4], index: 10, kind: input, shape index: {}]
  %s11 = inlined_call_operand.vmem [shape: f32[2,256,4], index: 11, kind: output, shape index: {}]
  %s12 = sld [smem:[#allocation0]]
  $region81: #{tpu_custom_call.1} parent=0
    _
  %s14 = ssub.s32 1, %s12
  %s15 = scalar_select 0, %s14, %s12
  loop: start=0, step=1, limit=10
  $region2: #{tpu_custom_call.1} parent=0 // loop_pre_header
    _
  $region3: #{tpu_custom_call.1} parent=0 // loop_header
    %s17 = sphi 0, %s21
    %p18 = scmp.ge.s32.totalorder %s17, 10
    %s24 = sphi 0, %s36
    %s25 = sphi 0, %s32
    %s26 = sphi 0, %s24
    %s27 = sphi 0, %s25
    %s28 = sphi 0, %s26
    %s29 = sphi 0, %s27
    %s39 = sphi 0, %s41
    %s42 = sphi 0, %s39
    %s43 = sphi 0, %s42
    %s59 = sphi 0, %s43
    %s63 = sphi 0, %s63
    %s65 = sphi 0, %s63
    %s66 = sphi 0, %s65
    %s80 = sphi 0, %s66
    %s84 = sphi 0, %s84
    %s86 = sphi 0, %s84
    %s87 = sphi 0, %s86
    %s101 = sphi 0, %s87
    %s105 = sphi 0, %s105
    %s107 = sphi 0, %s105
    %s108 = sphi 0, %s107
    %s122 = sphi 0, %s108
    %s126 = sphi 0, %s126
    %s128 = sphi 0, %s126
    %s129 = sphi 0, %s128
    %s143 = sphi 0, %s129
    %s147 = sphi 0, %s147
    %s149 = sphi 0, %s147
    %s150 = sphi 0, %s149
    %s164 = sphi 0, %s150
    %s168 = sphi 0, %s168
    %s170 = sphi 0, %s168
    %s171 = sphi 0, %s170
    %s185 = sphi 0, %s171
    %s189 = sphi 0, %s189
    %s191 = sphi 0, %s189
    %s192 = sphi 0, %s191
    %s206 = sphi 0, %s192
    %s210 = sphi 0, %s210
    %s212 = sphi 0, %s210
    %s213 = sphi 0, %s212
    %s227 = sphi 0, %s213
    %s231 = sphi 0, %s231
    %s233 = sphi 0, %s231
    %s234 = sphi 0, %s233
    %s248 = sphi 0, %s234
    %s252 = sphi 0, %s252
    %s254 = sphi 0, %s252
    %s255 = sphi 0, %s254
    %s269 = sphi 0, %s255
    %s277 = sphi 0, %s279
    %s280 = sphi 0, %s277
    %s281 = sphi 0, %s280
    %s297 = sphi 0, %s281
  $region4: #{tpu_custom_call.1} parent=0 // loop_header_branch
    %20 = sbr.rel (%p18) target = $region8
  $region5: #{tpu_custom_call.1} parent=0 // loop_body
    %s22 = ssub.s32 %s17, 1
    %s23 = ssub.s32 %s17, 2
    %s30 = sadd.s32 1, %s25
    %p31 = scmp.ge.s32.totalorder %s30, 4
    %s32 = scalar_select %p31, 0, %s30
    %s33 = sadd.s32 1, %s24
    %s34 = scalar_select %p31, %s33, %s24
    %p35 = scmp.ge.s32.totalorder %s34, 2
    %s36 = scalar_select %p35, 0, %s34
    %s37 = ssub.s32 %s24, %s36
    %p38 = scmp.eq.s32.totalorder %s37, 0
    %s40 = sadd.s32 %s39, 1
    %s41 = scalar_select %p38, %s39, %s40
    %p44 = pneg %p38
    %p45 = scmp.eq.s32.totalorder %s17, 7
    %p46 = por %p44, %p45
    %p47 = scmp.ne.s32.totalorder %s39, %s42
    %p48 = scmp.eq.s32.totalorder %s17, 0
    %p49 = por %p47, %p48
    %p50 = scmp.ne.s32.totalorder %s39, %s42
    %p51 = scmp.eq.s32.totalorder %s22, 7
    %p52 = por %p50, %p51
    %p53 = scmp.ne.s32.totalorder %s42, %s43
    %p54 = scmp.eq.s32.totalorder %s22, 0
    %p55 = por %p53, %p54
    %p56 = scmp.ne.s32.totalorder %s42, %s43
    %p57 = scmp.eq.s32.totalorder %s23, 7
    %p58 = por %p56, %p57
    %p60 = scmp.ne.s32.totalorder %s43, %s59
    %p61 = scmp.eq.s32.totalorder %s23, 0
    %p62 = por %p60, %p61
    %s64 = sadd.s32 %s63, 1
    %p67 = scmp.eq.s32.totalorder %s17, 7
    %p68 = scmp.ne.s32.totalorder %s63, %s65
    %p69 = scmp.eq.s32.totalorder %s17, 0
    %p70 = por %p68, %p69
    %p71 = scmp.ne.s32.totalorder %s63, %s65
    %p72 = scmp.eq.s32.totalorder %s22, 7
    %p73 = por %p71, %p72
    %p74 = scmp.ne.s32.totalorder %s65, %s66
    %p75 = scmp.eq.s32.totalorder %s22, 0
    %p76 = por %p74, %p75
    %p77 = scmp.ne.s32.totalorder %s65, %s66
    %p78 = scmp.eq.s32.totalorder %s23, 7
    %p79 = por %p77, %p78
    %p81 = scmp.ne.s32.totalorder %s66, %s80
    %p82 = scmp.eq.s32.totalorder %s23, 0
    %p83 = por %p81, %p82
    %s85 = sadd.s32 %s84, 1
    %p88 = scmp.eq.s32.totalorder %s17, 7
    %p89 = scmp.ne.s32.totalorder %s84, %s86
    %p90 = scmp.eq.s32.totalorder %s17, 0
    %p91 = por %p89, %p90
    %p92 = scmp.ne.s32.totalorder %s84, %s86
    %p93 = scmp.eq.s32.totalorder %s22, 7
    %p94 = por %p92, %p93
    %p95 = scmp.ne.s32.totalorder %s86, %s87
    %p96 = scmp.eq.s32.totalorder %s22, 0
    %p97 = por %p95, %p96
    %p98 = scmp.ne.s32.totalorder %s86, %s87
    %p99 = scmp.eq.s32.totalorder %s23, 7
    %p100 = por %p98, %p99
    %p102 = scmp.ne.s32.totalorder %s87, %s101
    %p103 = scmp.eq.s32.totalorder %s23, 0
    %p104 = por %p102, %p103
    %s106 = sadd.s32 %s105, 1
    %p109 = scmp.eq.s32.totalorder %s17, 7
    %p110 = scmp.ne.s32.totalorder %s105, %s107
    %p111 = scmp.eq.s32.totalorder %s17, 0
    %p112 = por %p110, %p111
    %p113 = scmp.ne.s32.totalorder %s105, %s107
    %p114 = scmp.eq.s32.totalorder %s22, 7
    %p115 = por %p113, %p114
    %p116 = scmp.ne.s32.totalorder %s107, %s108
    %p117 = scmp.eq.s32.totalorder %s22, 0
    %p118 = por %p116, %p117
    %p119 = scmp.ne.s32.totalorder %s107, %s108
    %p120 = scmp.eq.s32.totalorder %s23, 7
    %p121 = por %p119, %p120
    %p123 = scmp.ne.s32.totalorder %s108, %s122
    %p124 = scmp.eq.s32.totalorder %s23, 0
    %p125 = por %p123, %p124
    %s127 = sadd.s32 %s126, 1
    %p130 = scmp.eq.s32.totalorder %s17, 7
    %p131 = scmp.ne.s32.totalorder %s126, %s128
    %p132 = scmp.eq.s32.totalorder %s17, 0
    %p133 = por %p131, %p132
    %p134 = scmp.ne.s32.totalorder %s126, %s128
    %p135 = scmp.eq.s32.totalorder %s22, 7
    %p136 = por %p134, %p135
    %p137 = scmp.ne.s32.totalorder %s128, %s129
    %p138 = scmp.eq.s32.totalorder %s22, 0
    %p139 = por %p137, %p138
    %p140 = scmp.ne.s32.totalorder %s128, %s129
    %p141 = scmp.eq.s32.totalorder %s23, 7
    %p142 = por %p140, %p141
    %p144 = scmp.ne.s32.totalorder %s129, %s143
    %p145 = scmp.eq.s32.totalorder %s23, 0
    %p146 = por %p144, %p145
    %s148 = sadd.s32 %s147, 1
    %p151 = scmp.eq.s32.totalorder %s17, 7
    %p152 = scmp.ne.s32.totalorder %s147, %s149
    %p153 = scmp.eq.s32.totalorder %s17, 0
    %p154 = por %p152, %p153
    %p155 = scmp.ne.s32.totalorder %s147, %s149
    %p156 = scmp.eq.s32.totalorder %s22, 7
    %p157 = por %p155, %p156
    %p158 = scmp.ne.s32.totalorder %s149, %s150
    %p159 = scmp.eq.s32.totalorder %s22, 0
    %p160 = por %p158, %p159
    %p161 = scmp.ne.s32.totalorder %s149, %s150
    %p162 = scmp.eq.s32.totalorder %s23, 7
    %p163 = por %p161, %p162
    %p165 = scmp.ne.s32.totalorder %s150, %s164
    %p166 = scmp.eq.s32.totalorder %s23, 0
    %p167 = por %p165, %p166
    %s169 = sadd.s32 %s168, 1
    %p172 = scmp.eq.s32.totalorder %s17, 7
    %p173 = scmp.ne.s32.totalorder %s168, %s170
    %p174 = scmp.eq.s32.totalorder %s17, 0
    %p175 = por %p173, %p174
    %p176 = scmp.ne.s32.totalorder %s168, %s170
    %p177 = scmp.eq.s32.totalorder %s22, 7
    %p178 = por %p176, %p177
    %p179 = scmp.ne.s32.totalorder %s170, %s171
    %p180 = scmp.eq.s32.totalorder %s22, 0
    %p181 = por %p179, %p180
    %p182 = scmp.ne.s32.totalorder %s170, %s171
    %p183 = scmp.eq.s32.totalorder %s23, 7
    %p184 = por %p182, %p183
    %p186 = scmp.ne.s32.totalorder %s171, %s185
    %p187 = scmp.eq.s32.totalorder %s23, 0
    %p188 = por %p186, %p187
    %s190 = sadd.s32 %s189, 1
    %p193 = scmp.eq.s32.totalorder %s17, 7
    %p194 = scmp.ne.s32.totalorder %s189, %s191
    %p195 = scmp.eq.s32.totalorder %s17, 0
    %p196 = por %p194, %p195
    %p197 = scmp.ne.s32.totalorder %s189, %s191
    %p198 = scmp.eq.s32.totalorder %s22, 7
    %p199 = por %p197, %p198
    %p200 = scmp.ne.s32.totalorder %s191, %s192
    %p201 = scmp.eq.s32.totalorder %s22, 0
    %p202 = por %p200, %p201
    %p203 = scmp.ne.s32.totalorder %s191, %s192
    %p204 = scmp.eq.s32.totalorder %s23, 7
    %p205 = por %p203, %p204
    %p207 = scmp.ne.s32.totalorder %s192, %s206
    %p208 = scmp.eq.s32.totalorder %s23, 0
    %p209 = por %p207, %p208
    %s211 = sadd.s32 %s210, 1
    %p214 = scmp.eq.s32.totalorder %s17, 7
    %p215 = scmp.ne.s32.totalorder %s210, %s212
    %p216 = scmp.eq.s32.totalorder %s17, 0
    %p217 = por %p215, %p216
    %p218 = scmp.ne.s32.totalorder %s210, %s212
    %p219 = scmp.eq.s32.totalorder %s22, 7
    %p220 = por %p218, %p219
    %p221 = scmp.ne.s32.totalorder %s212, %s213
    %p222 = scmp.eq.s32.totalorder %s22, 0
    %p223 = por %p221, %p222
    %p224 = scmp.ne.s32.totalorder %s212, %s213
    %p225 = scmp.eq.s32.totalorder %s23, 7
    %p226 = por %p224, %p225
    %p228 = scmp.ne.s32.totalorder %s213, %s227
    %p229 = scmp.eq.s32.totalorder %s23, 0
    %p230 = por %p228, %p229
    %s232 = sadd.s32 %s231, 1
    %p235 = scmp.eq.s32.totalorder %s17, 7
    %p236 = scmp.ne.s32.totalorder %s231, %s233
    %p237 = scmp.eq.s32.totalorder %s17, 0
    %p238 = por %p236, %p237
    %p239 = scmp.ne.s32.totalorder %s231, %s233
    %p240 = scmp.eq.s32.totalorder %s22, 7
    %p241 = por %p239, %p240
    %p242 = scmp.ne.s32.totalorder %s233, %s234
    %p243 = scmp.eq.s32.totalorder %s22, 0
    %p244 = por %p242, %p243
    %p245 = scmp.ne.s32.totalorder %s233, %s234
    %p246 = scmp.eq.s32.totalorder %s23, 7
    %p247 = por %p245, %p246
    %p249 = scmp.ne.s32.totalorder %s234, %s248
    %p250 = scmp.eq.s32.totalorder %s23, 0
    %p251 = por %p249, %p250
    %s253 = sadd.s32 %s252, 1
    %p256 = scmp.eq.s32.totalorder %s17, 7
    %p257 = scmp.ne.s32.totalorder %s252, %s254
    %p258 = scmp.eq.s32.totalorder %s17, 0
    %p259 = por %p257, %p258
    %p260 = scmp.ne.s32.totalorder %s252, %s254
    %p261 = scmp.eq.s32.totalorder %s22, 7
    %p262 = por %p260, %p261
    %p263 = scmp.ne.s32.totalorder %s254, %s255
    %p264 = scmp.eq.s32.totalorder %s22, 0
    %p265 = por %p263, %p264
    %p266 = scmp.ne.s32.totalorder %s254, %s255
    %p267 = scmp.eq.s32.totalorder %s23, 7
    %p268 = por %p266, %p267
    %p270 = scmp.ne.s32.totalorder %s255, %s269
    %p271 = scmp.eq.s32.totalorder %s23, 0
    %p272 = por %p270, %p271
    %s273 = ssub.s32 %s24, %s36
    %s274 = ssub.s32 %s25, %s32
    %s275 = sor.u32 %s273, %s274
    %p276 = scmp.eq.s32.totalorder %s275, 0
    %s278 = sadd.s32 %s277, 1
    %s279 = scalar_select %p276, %s277, %s278
    %p282 = pneg %p276
    %p283 = scmp.eq.s32.totalorder %s17, 7
    %p284 = por %p282, %p283
    %p285 = scmp.ne.s32.totalorder %s277, %s280
    %p286 = scmp.eq.s32.totalorder %s17, 0
    %p287 = por %p285, %p286
    %p288 = scmp.ne.s32.totalorder %s277, %s280
    %p289 = scmp.eq.s32.totalorder %s22, 7
    %p290 = por %p288, %p289
    %p291 = scmp.ne.s32.totalorder %s280, %s281
    %p292 = scmp.eq.s32.totalorder %s22, 0
    %p293 = por %p291, %p292
    %p294 = scmp.ne.s32.totalorder %s280, %s281
    %p295 = scmp.eq.s32.totalorder %s23, 7
    %p296 = por %p294, %p295
    %p298 = scmp.ne.s32.totalorder %s281, %s297
    %p299 = scmp.eq.s32.totalorder %s23, 0
    %p300 = por %p298, %p299
    %p301 = scmp.le.s32.totalorder 1, %s17
    %p302 = scmp.lt.s32.totalorder %s17, 9
    %p303 = pnand %p301, %p302
    %p304 = pneg %p303
    // Predicated region
    $region9: #{tpu_custom_call.1} parent=5 // pred_check
      _
    $region10: #{tpu_custom_call.1} parent=5 // pred_check_branch
      %306 = sbr.rel (%p303) target = $region12
    $region11: #{tpu_custom_call.1} parent=5 // pred_region
      %s307 = ssub.s32 %s17, 1
      // Predicated region
      $region13: #{tpu_custom_call.1} parent=11 // pred_check
        %p308 = pneg %p76
      $region14: #{tpu_custom_call.1} parent=11 // pred_check_branch
        %310 = sbr.rel (%p308) target = $region16
      $region15: #{tpu_custom_call.1} parent=11 // pred_region
        _
      $region16: #{tpu_custom_call.1} parent=11 // pred_fallthru
        _
      // Predicated region
      $region17: #{tpu_custom_call.1} parent=11 // pred_check
        %p311 = pneg %p97
      $region18: #{tpu_custom_call.1} parent=11 // pred_check_branch
        %313 = sbr.rel (%p311) target = $region20
      $region19: #{tpu_custom_call.1} parent=11 // pred_region
        _
      $region20: #{tpu_custom_call.1} parent=11 // pred_fallthru
        _
      // Predicated region
      $region21: #{tpu_custom_call.1} parent=11 // pred_check
        %p314 = pneg %p118
      $region22: #{tpu_custom_call.1} parent=11 // pred_check_branch
        %316 = sbr.rel (%p314) target = $region24
      $region23: #{tpu_custom_call.1} parent=11 // pred_region
        _
      $region24: #{tpu_custom_call.1} parent=11 // pred_fallthru
        _
      // Predicated region
      $region25: #{tpu_custom_call.1} parent=11 // pred_check
        %p317 = pneg %p139
      $region26: #{tpu_custom_call.1} parent=11 // pred_check_branch
        %319 = sbr.rel (%p317) target = $region28
      $region27: #{tpu_custom_call.1} parent=11 // pred_region
        _
      $region28: #{tpu_custom_call.1} parent=11 // pred_fallthru
        _
      // Predicated region
      $region29: #{tpu_custom_call.1} parent=11 // pred_check
        %p320 = pneg %p160
      $region30: #{tpu_custom_call.1} parent=11 // pred_check_branch
        %322 = sbr.rel (%p320) target = $region32
      $region31: #{tpu_custom_call.1} parent=11 // pred_region
        _
      $region32: #{tpu_custom_call.1} parent=11 // pred_fallthru
        _
      // Predicated region
      $region33: #{tpu_custom_call.1} parent=11 // pred_check
        %p323 = pneg %p181
      $region34: #{tpu_custom_call.1} parent=11 // pred_check_branch
        %325 = sbr.rel (%p323) target = $region36
      $region35: #{tpu_custom_call.1} parent=11 // pred_region
        _
      $region36: #{tpu_custom_call.1} parent=11 // pred_fallthru
        _
      // Predicated region
      $region37: #{tpu_custom_call.1} parent=11 // pred_check
        %p326 = pneg %p202
      $region38: #{tpu_custom_call.1} parent=11 // pred_check_branch
        %328 = sbr.rel (%p326) target = $region40
      $region39: #{tpu_custom_call.1} parent=11 // pred_region
        _
      $region40: #{tpu_custom_call.1} parent=11 // pred_fallthru
        _
      // Predicated region
      $region41: #{tpu_custom_call.1} parent=11 // pred_check
        %p329 = pneg %p223
      $region42: #{tpu_custom_call.1} parent=11 // pred_check_branch
        %331 = sbr.rel (%p329) target = $region44
      $region43: #{tpu_custom_call.1} parent=11 // pred_region
        _
      $region44: #{tpu_custom_call.1} parent=11 // pred_fallthru
        _
      // Predicated region
      $region45: #{tpu_custom_call.1} parent=11 // pred_check
        %p332 = pneg %p244
      $region46: #{tpu_custom_call.1} parent=11 // pred_check_branch
        %334 = sbr.rel (%p332) target = $region48
      $region47: #{tpu_custom_call.1} parent=11 // pred_region
        _
      $region48: #{tpu_custom_call.1} parent=11 // pred_fallthru
        _
      // Predicated region
      $region49: #{tpu_custom_call.1} parent=11 // pred_check
        %p335 = pneg %p265
      $region50: #{tpu_custom_call.1} parent=11 // pred_check_branch
        %337 = sbr.rel (%p335) target = $region52
      $region51: #{tpu_custom_call.1} parent=11 // pred_region
        _
      $region52: #{tpu_custom_call.1} parent=11 // pred_fallthru
        _
    $region12: #{tpu_custom_call.1} parent=5 // pred_fallthru
      _
    %p338 = scmp.lt.s32.totalorder %s17, 8
    // Predicated region
    $region53: #{tpu_custom_call.1} parent=5 // pred_check
      %p339 = pneg %p338
    $region54: #{tpu_custom_call.1} parent=5 // pred_check_branch
      %341 = sbr.rel (%p339) target = $region56
    $region55: #{tpu_custom_call.1} parent=5 // pred_region
      // Predicated region
      $region57: #{tpu_custom_call.1} parent=55 // pred_check
        %p342 = pneg %p49
      $region58: #{tpu_custom_call.1} parent=55 // pred_check_branch
        %344 = sbr.rel (%p342) target = $region60
      $region59: #{tpu_custom_call.1} parent=55 // pred_region
        %p345 = scmp.lt.s32.totalorder %s24, 1
        %s346 = scalar_select %p345, %s24, 1
        %s347 = smul.addr %s346, 32
        %s348 = smul.addr %s347, 8
        %s349 = scalar_lea.vmem %s0, %s348
      $region60: #{tpu_custom_call.1} parent=55 // pred_fallthru
        _
    $region56: #{tpu_custom_call.1} parent=5 // pred_fallthru
      _
    %p350 = scmp.le.s32.totalorder 1, %s17
    %p351 = scmp.lt.s32.totalorder %s17, 9
    %p352 = pnand %p350, %p351
    %p353 = pneg %p352
    // Predicated region
    $region61: #{tpu_custom_call.1} parent=5 // pred_check
      _
    $region62: #{tpu_custom_call.1} parent=5 // pred_check_branch
      %355 = sbr.rel (%p352) target = $region64
    $region63: #{tpu_custom_call.1} parent=5 // pred_region
      %s356 = ssub.s32 %s17, 1
      %p357 = scmp.lt.s32.totalorder %s26, 1
      %s358 = scalar_select %p357, %s26, 1
      %s359 = smul.addr %s358, 32
      %s360 = smul.addr %s359, 8
      %s361 = scalar_lea.vmem %s0, %s360
      %p362 = pneg %p55
      %p363 = pneg %p52
      %p364 = pneg %p76
      %p365 = pneg %p73
      %p366 = pneg %p97
      %p367 = pneg %p94
      %p368 = pneg %p118
      %p369 = pneg %p115
      %p370 = pneg %p139
      %p371 = pneg %p136
      %p372 = pneg %p160
      %p373 = pneg %p157
      %p374 = pneg %p181
      %p375 = pneg %p178
      %p376 = pneg %p202
      %p377 = pneg %p199
      %p378 = pneg %p223
      %p379 = pneg %p220
      %p380 = pneg %p244
      %p381 = pneg %p241
      %p382 = pneg %p265
      %p383 = pneg %p262
      %p384 = pneg %p293
      %p385 = pneg %p290
      %s386 = smul.u32 8, %s27
      %p387 = scmp.lt.s32.totalorder %s26, 1
      %s388 = scalar_select %p387, %s26, 1
      %p389 = scmp.lt.s32.totalorder %s386, 31
      %s390 = scalar_select %p389, %s386, 31
      %s391 = smul.addr %s388, 32
      %s392 = sadd.s32 %s390, %s391
      %s393 = smul.addr %s392, 8
      %s394 = scalar_lea.vmem %s11, %s393
      %p395 = scmp.lt.s32.totalorder %s26, 1
      %s396 = scalar_select %p395, %s26, 1
      %s397 = smul.addr %s396, 32
      %s398 = smul.addr %s397, 8
      %s399 = scalar_lea.vmem %s0, %s398
      %s400 = smul.u32 8, %s27
      %p401 = scmp.lt.s32.totalorder %s26, 1
      %s402 = scalar_select %p401, %s26, 1
      %p403 = scmp.lt.s32.totalorder %s400, 31
      %s404 = scalar_select %p403, %s400, 31
      %s405 = smul.addr %s402, 32
      %s406 = sadd.s32 %s404, %s405
      %s407 = smul.addr %s406, 8
      %s408 = scalar_lea.vmem %s11, %s407
      %s409 = smul.u32 8, %s27
      %p410 = scmp.eq.s32.totalorder %s27, 0
      // Predicated region
      $region65: #{tpu_custom_call.1} parent=63 // pred_check
        %p411 = pneg %p410
      $region66: #{tpu_custom_call.1} parent=63 // pred_check_branch
        %413 = sbr.rel (%p411) target = $region68
      $region67: #{tpu_custom_call.1} parent=63 // pred_region
        %v414 = vld [vmem:[%s399] sm:$0xff]
        %v415 = vld [vmem:[%s399 + $0x8] sm:$0xff]
        %v416 = vld [vmem:[%s399 + $0x10] sm:$0xff]
        %v417 = vld [vmem:[%s399 + $0x18] sm:$0xff]
        %v418 = vld [vmem:[%s399 + $0x20] sm:$0xff]
        %v419 = vld [vmem:[%s399 + $0x28] sm:$0xff]
        %v420 = vld [vmem:[%s399 + $0x30] sm:$0xff]
        %v421 = vld [vmem:[%s399 + $0x38] sm:$0xff]
        %v422 = vld [vmem:[%s399 + $0x40] sm:$0xff]
        %v423 = vld [vmem:[%s399 + $0x48] sm:$0xff]
        %v424 = vld [vmem:[%s399 + $0x50] sm:$0xff]
        %v425 = vld [vmem:[%s399 + $0x58] sm:$0xff]
        %v426 = vld [vmem:[%s399 + $0x60] sm:$0xff]
        %v427 = vld [vmem:[%s399 + $0x68] sm:$0xff]
        %v428 = vld [vmem:[%s399 + $0x70] sm:$0xff]
        %v429 = vld [vmem:[%s399 + $0x78] sm:$0xff]
        %v430 = vld [vmem:[%s399 + $0x80] sm:$0xff]
        %v431 = vld [vmem:[%s399 + $0x88] sm:$0xff]
        %v432 = vld [vmem:[%s399 + $0x90] sm:$0xff]
        %v433 = vld [vmem:[%s399 + $0x98] sm:$0xff]
        %v434 = vld [vmem:[%s399 + $0xa0] sm:$0xff]
        %v435 = vld [vmem:[%s399 + $0xa8] sm:$0xff]
        %v436 = vld [vmem:[%s399 + $0xb0] sm:$0xff]
        %v437 = vld [vmem:[%s399 + $0xb8] sm:$0xff]
        %v438 = vld [vmem:[%s399 + $0xc0] sm:$0xff]
        %v439 = vld [vmem:[%s399 + $0xc8] sm:$0xff]
        %v440 = vld [vmem:[%s399 + $0xd0] sm:$0xff]
        %v441 = vld [vmem:[%s399 + $0xd8] sm:$0xff]
        %v442 = vld [vmem:[%s399 + $0xe0] sm:$0xff]
        %v443 = vld [vmem:[%s399 + $0xe8] sm:$0xff]
        %v444 = vld [vmem:[%s399 + $0xf0] sm:$0xff]
        %v445 = vld [vmem:[%s399 + $0xf8] sm:$0xff]
        %vm446 = vcmask 31744
        %v447 = vsel %vm446, %v414, 0.0
        %v448 = vsel %vm446, %v415, 0.0
        %v449 = vadd.f32 %v447, %v448
        %v450 = vsel %vm446, %v416, 0.0
        %v451 = vadd.f32 %v449, %v450
        %v452 = vsel %vm446, %v417, 0.0
        %v453 = vadd.f32 %v451, %v452
        %v454 = vsel %vm446, %v418, 0.0
        %v455 = vadd.f32 %v453, %v454
        %v456 = vsel %vm446, %v419, 0.0
        %v457 = vadd.f32 %v455, %v456
        %v458 = vsel %vm446, %v420, 0.0
        %v459 = vadd.f32 %v457, %v458
        %v460 = vsel %vm446, %v421, 0.0
        %v461 = vadd.f32 %v459, %v460
        %v462 = vsel %vm446, %v422, 0.0
        %v463 = vadd.f32 %v461, %v462
        %v464 = vsel %vm446, %v423, 0.0
        %v465 = vadd.f32 %v463, %v464
        %v466 = vsel %vm446, %v424, 0.0
        %v467 = vadd.f32 %v465, %v466
        %v468 = vsel %vm446, %v425, 0.0
        %v469 = vadd.f32 %v467, %v468
        %v470 = vsel %vm446, %v426, 0.0
        %v471 = vadd.f32 %v469, %v470
        %v472 = vsel %vm446, %v427, 0.0
        %v473 = vadd.f32 %v471, %v472
        %v474 = vsel %vm446, %v428, 0.0
        %v475 = vadd.f32 %v473, %v474
        %v476 = vsel %vm446, %v429, 0.0
        %v477 = vadd.f32 %v475, %v476
        %v478 = vsel %vm446, %v430, 0.0
        %v479 = vadd.f32 %v477, %v478
        %v480 = vsel %vm446, %v431, 0.0
        %v481 = vadd.f32 %v479, %v480
        %v482 = vsel %vm446, %v432, 0.0
        %v483 = vadd.f32 %v481, %v482
        %v484 = vsel %vm446, %v433, 0.0
        %v485 = vadd.f32 %v483, %v484
        %v486 = vsel %vm446, %v434, 0.0
        %v487 = vadd.f32 %v485, %v486
        %v488 = vsel %vm446, %v435, 0.0
        %v489 = vadd.f32 %v487, %v488
        %v490 = vsel %vm446, %v436, 0.0
        %v491 = vadd.f32 %v489, %v490
        %v492 = vsel %vm446, %v437, 0.0
        %v493 = vadd.f32 %v491, %v492
        %v494 = vsel %vm446, %v438, 0.0
        %v495 = vadd.f32 %v493, %v494
        %v496 = vsel %vm446, %v439, 0.0
        %v497 = vadd.f32 %v495, %v496
        %v498 = vsel %vm446, %v440, 0.0
        %v499 = vadd.f32 %v497, %v498
        %v500 = vsel %vm446, %v441, 0.0
        %v501 = vadd.f32 %v499, %v500
        %v502 = vsel %vm446, %v442, 0.0
        %v503 = vadd.f32 %v501, %v502
        %v504 = vsel %vm446, %v443, 0.0
        %v505 = vadd.f32 %v503, %v504
        %v506 = vsel %vm446, %v444, 0.0
        %v507 = vadd.f32 %v505, %v506
        %v508 = vsel %vm446, %v445, 0.0
        %v509 = vadd.f32 %v507, %v508
        %v510 = vrot.slane %v509, 4
        %v511 = vadd.f32 %v509, %v510
        %v512 = vrot.slane %v511, 2
        %v513 = vadd.f32 %v511, %v512
        %v514 = vrot.slane %v513, 1
        %v515 = vadd.f32 %v513, %v514
        %v516 = vadd.f32 %v515, 0.0
        %v517 = vsel %vm446, %v516, 0.0
        %518 = vadd.xlane.f32.xlu0 %v517
        %v519 = vpop.xlane.xlu0 %518
        %v520 = vrcp.pop 1024.0
        %v521 = vmul.f32 %v519, %v520
        %v522 = vsub.f32 %v414, %v521
        %v523 = vsub.f32 %v415, %v521
        %v524 = vsub.f32 %v416, %v521
        %v525 = vsub.f32 %v417, %v521
        %v526 = vsub.f32 %v418, %v521
        %v527 = vsub.f32 %v419, %v521
        %v528 = vsub.f32 %v420, %v521
        %v529 = vsub.f32 %v421, %v521
        %v530 = vsub.f32 %v422, %v521
        %v531 = vsub.f32 %v423, %v521
        %v532 = vsub.f32 %v424, %v521
        %v533 = vsub.f32 %v425, %v521
        %v534 = vsub.f32 %v426, %v521
        %v535 = vsub.f32 %v427, %v521
        %v536 = vsub.f32 %v428, %v521
        %v537 = vsub.f32 %v429, %v521
        %v538 = vsub.f32 %v430, %v521
        %v539 = vsub.f32 %v431, %v521
        %v540 = vsub.f32 %v432, %v521
        %v541 = vsub.f32 %v433, %v521
        %v542 = vsub.f32 %v434, %v521
        %v543 = vsub.f32 %v435, %v521
        %v544 = vsub.f32 %v436, %v521
        %v545 = vsub.f32 %v437, %v521
        %v546 = vsub.f32 %v438, %v521
        %v547 = vsub.f32 %v439, %v521
        %v548 = vsub.f32 %v440, %v521
        %v549 = vsub.f32 %v441, %v521
        %v550 = vsub.f32 %v442, %v521
        %v551 = vsub.f32 %v443, %v521
        %v552 = vsub.f32 %v444, %v521
        %v553 = vsub.f32 %v445, %v521
        %v554 = vmul.f32 %v522, %v522
        %v555 = vmul.f32 %v523, %v523
        %v556 = vmul.f32 %v524, %v524
        %v557 = vmul.f32 %v525, %v525
        %v558 = vmul.f32 %v526, %v526
        %v559 = vmul.f32 %v527, %v527
        %v560 = vmul.f32 %v528, %v528
        %v561 = vmul.f32 %v529, %v529
        %v562 = vmul.f32 %v530, %v530
        %v563 = vmul.f32 %v531, %v531
        %v564 = vmul.f32 %v532, %v532
        %v565 = vmul.f32 %v533, %v533
        %v566 = vmul.f32 %v534, %v534
        %v567 = vmul.f32 %v535, %v535
        %v568 = vmul.f32 %v536, %v536
        %v569 = vmul.f32 %v537, %v537
        %v570 = vmul.f32 %v538, %v538
        %v571 = vmul.f32 %v539, %v539
        %v572 = vmul.f32 %v540, %v540
        %v573 = vmul.f32 %v541, %v541
        %v574 = vmul.f32 %v542, %v542
        %v575 = vmul.f32 %v543, %v543
        %v576 = vmul.f32 %v544, %v544
        %v577 = vmul.f32 %v545, %v545
        %v578 = vmul.f32 %v546, %v546
        %v579 = vmul.f32 %v547, %v547
        %v580 = vmul.f32 %v548, %v548
        %v581 = vmul.f32 %v549, %v549
        %v582 = vmul.f32 %v550, %v550
        %v583 = vmul.f32 %v551, %v551
        %v584 = vmul.f32 %v552, %v552
        %v585 = vmul.f32 %v553, %v553
        %v586 = vsel %vm446, %v554, 0.0
        %v587 = vsel %vm446, %v555, 0.0
        %v588 = vadd.f32 %v586, %v587
        %v589 = vsel %vm446, %v556, 0.0
        %v590 = vadd.f32 %v588, %v589
        %v591 = vsel %vm446, %v557, 0.0
        %v592 = vadd.f32 %v590, %v591
        %v593 = vsel %vm446, %v558, 0.0
        %v594 = vadd.f32 %v592, %v593
        %v595 = vsel %vm446, %v559, 0.0
        %v596 = vadd.f32 %v594, %v595
        %v597 = vsel %vm446, %v560, 0.0
        %v598 = vadd.f32 %v596, %v597
        %v599 = vsel %vm446, %v561, 0.0
        %v600 = vadd.f32 %v598, %v599
        %v601 = vsel %vm446, %v562, 0.0
        %v602 = vadd.f32 %v600, %v601
        %v603 = vsel %vm446, %v563, 0.0
        %v604 = vadd.f32 %v602, %v603
        %v605 = vsel %vm446, %v564, 0.0
        %v606 = vadd.f32 %v604, %v605
        %v607 = vsel %vm446, %v565, 0.0
        %v608 = vadd.f32 %v606, %v607
        %v609 = vsel %vm446, %v566, 0.0
        %v610 = vadd.f32 %v608, %v609
        %v611 = vsel %vm446, %v567, 0.0
        %v612 = vadd.f32 %v610, %v611
        %v613 = vsel %vm446, %v568, 0.0
        %v614 = vadd.f32 %v612, %v613
        %v615 = vsel %vm446, %v569, 0.0
        %v616 = vadd.f32 %v614, %v615
        %v617 = vsel %vm446, %v570, 0.0
        %v618 = vadd.f32 %v616, %v617
        %v619 = vsel %vm446, %v571, 0.0
        %v620 = vadd.f32 %v618, %v619
        %v621 = vsel %vm446, %v572, 0.0
        %v622 = vadd.f32 %v620, %v621
        %v623 = vsel %vm446, %v573, 0.0
        %v624 = vadd.f32 %v622, %v623
        %v625 = vsel %vm446, %v574, 0.0
        %v626 = vadd.f32 %v624, %v625
        %v627 = vsel %vm446, %v575, 0.0
        %v628 = vadd.f32 %v626, %v627
        %v629 = vsel %vm446, %v576, 0.0
        %v630 = vadd.f32 %v628, %v629
        %v631 = vsel %vm446, %v577, 0.0
        %v632 = vadd.f32 %v630, %v631
        %v633 = vsel %vm446, %v578, 0.0
        %v634 = vadd.f32 %v632, %v633
        %v635 = vsel %vm446, %v579, 0.0
        %v636 = vadd.f32 %v634, %v635
        %v637 = vsel %vm446, %v580, 0.0
        %v638 = vadd.f32 %v636, %v637
        %v639 = vsel %vm446, %v581, 0.0
        %v640 = vadd.f32 %v638, %v639
        %v641 = vsel %vm446, %v582, 0.0
        %v642 = vadd.f32 %v640, %v641
        %v643 = vsel %vm446, %v583, 0.0
        %v644 = vadd.f32 %v642, %v643
        %v645 = vsel %vm446, %v584, 0.0
        %v646 = vadd.f32 %v644, %v645
        %v647 = vsel %vm446, %v585, 0.0
        %v648 = vadd.f32 %v646, %v647
        %v649 = vrot.slane %v648, 4
        %v650 = vadd.f32 %v648, %v649
        %v651 = vrot.slane %v650, 2
        %v652 = vadd.f32 %v650, %v651
        %v653 = vrot.slane %v652, 1
        %v654 = vadd.f32 %v652, %v653
        %v655 = vadd.f32 %v654, 0.0
        %v656 = vsel %vm446, %v655, 0.0
        %657 = vadd.xlane.f32.xlu0 %v656
        %v658 = vpop.xlane.xlu0 %657
        %v659 = vmul.f32 %v658, %v520
        %v660 = vld [vmem:[%s1] sm:$0x1]
        %v661 = vadd.f32 %v659, 1e-06
        %v662 = vrsqrt.pop %v661
        %v663 = vmul.f32 %v660, %v662
        %v664 = vld [vmem:[%s2] sm:$0x1]
        %v665 = vmul.f32 %v521, %v663
        %v666 = vsub.f32 %v664, %v665
        %vm667 = vcmask 24576
        %668 = vst.msk [vmem:[#allocation4] sm:$0x1] %vm667, %v663
        %669 = vst.msk [vmem:[#allocation5] sm:$0x1] %vm667, %v666
        %v670 = vld [vmem:[%s399] sm:$0xff]
        %v671 = vld [vmem:[%s399 + $0x8] sm:$0xff]
        %v672 = vld [vmem:[%s399 + $0x10] sm:$0xff]
        %v673 = vld [vmem:[%s399 + $0x18] sm:$0xff]
        %v674 = vld [vmem:[%s399 + $0x20] sm:$0xff]
        %v675 = vld [vmem:[%s399 + $0x28] sm:$0xff]
        %v676 = vld [vmem:[%s399 + $0x30] sm:$0xff]
        %v677 = vld [vmem:[%s399 + $0x38] sm:$0xff]
        %v678 = vld [vmem:[%s399 + $0x40] sm:$0xff]
        %v679 = vld [vmem:[%s399 + $0x48] sm:$0xff]
        %v680 = vld [vmem:[%s399 + $0x50] sm:$0xff]
        %v681 = vld [vmem:[%s399 + $0x58] sm:$0xff]
        %v682 = vld [vmem:[%s399 + $0x60] sm:$0xff]
        %v683 = vld [vmem:[%s399 + $0x68] sm:$0xff]
        %v684 = vld [vmem:[%s399 + $0x70] sm:$0xff]
        %v685 = vld [vmem:[%s399 + $0x78] sm:$0xff]
        %v686 = vld [vmem:[%s399 + $0x80] sm:$0xff]
        %v687 = vld [vmem:[%s399 + $0x88] sm:$0xff]
        %v688 = vld [vmem:[%s399 + $0x90] sm:$0xff]
        %v689 = vld [vmem:[%s399 + $0x98] sm:$0xff]
        %v690 = vld [vmem:[%s399 + $0xa0] sm:$0xff]
        %v691 = vld [vmem:[%s399 + $0xa8] sm:$0xff]
        %v692 = vld [vmem:[%s399 + $0xb0] sm:$0xff]
        %v693 = vld [vmem:[%s399 + $0xb8] sm:$0xff]
        %v694 = vld [vmem:[%s399 + $0xc0] sm:$0xff]
        %v695 = vld [vmem:[%s399 + $0xc8] sm:$0xff]
        %v696 = vld [vmem:[%s399 + $0xd0] sm:$0xff]
        %v697 = vld [vmem:[%s399 + $0xd8] sm:$0xff]
        %v698 = vld [vmem:[%s399 + $0xe0] sm:$0xff]
        %v699 = vld [vmem:[%s399 + $0xe8] sm:$0xff]
        %v700 = vld [vmem:[%s399 + $0xf0] sm:$0xff]
        %v701 = vld [vmem:[%s399 + $0xf8] sm:$0xff]
        %v703 = vlaneseq
        %v704 = vshrl.u32 %v703, 7
        %v705 = vsub.s32 0, %v704
        %v706 = vrot.slane %v663, %v705
        %v708 = vmul.f32 %v670, %v706
        %v709 = vmul.f32 %v671, %v706
        %v710 = vmul.f32 %v672, %v706
        %v711 = vmul.f32 %v673, %v706
        %v712 = vmul.f32 %v674, %v706
        %v713 = vmul.f32 %v675, %v706
        %v714 = vmul.f32 %v676, %v706
        %v715 = vmul.f32 %v677, %v706
        %v716 = vmul.f32 %v678, %v706
        %v717 = vmul.f32 %v679, %v706
        %v718 = vmul.f32 %v680, %v706
        %v719 = vmul.f32 %v681, %v706
        %v720 = vmul.f32 %v682, %v706
        %v721 = vmul.f32 %v683, %v706
        %v722 = vmul.f32 %v684, %v706
        %v723 = vmul.f32 %v685, %v706
        %v724 = vmul.f32 %v686, %v706
        %v725 = vmul.f32 %v687, %v706
        %v726 = vmul.f32 %v688, %v706
        %v727 = vmul.f32 %v689, %v706
        %v728 = vmul.f32 %v690, %v706
        %v729 = vmul.f32 %v691, %v706
        %v730 = vmul.f32 %v692, %v706
        %v731 = vmul.f32 %v693, %v706
        %v732 = vmul.f32 %v694, %v706
        %v733 = vmul.f32 %v695, %v706
        %v734 = vmul.f32 %v696, %v706
        %v735 = vmul.f32 %v697, %v706
        %v736 = vmul.f32 %v698, %v706
        %v737 = vmul.f32 %v699, %v706
        %v738 = vmul.f32 %v700, %v706
        %v739 = vmul.f32 %v701, %v706
        %v741 = vlaneseq
        %v742 = vshrl.u32 %v741, 7
        %v743 = vsub.s32 0, %v742
        %v744 = vrot.slane %v666, %v743
        %v746 = vadd.f32 %v708, %v744
        %v747 = vadd.f32 %v709, %v744
        %v748 = vadd.f32 %v710, %v744
        %v749 = vadd.f32 %v711, %v744
        %v750 = vadd.f32 %v712, %v744
        %v751 = vadd.f32 %v713, %v744
        %v752 = vadd.f32 %v714, %v744
        %v753 = vadd.f32 %v715, %v744
        %v754 = vadd.f32 %v716, %v744
        %v755 = vadd.f32 %v717, %v744
        %v756 = vadd.f32 %v718, %v744
        %v757 = vadd.f32 %v719, %v744
        %v758 = vadd.f32 %v720, %v744
        %v759 = vadd.f32 %v721, %v744
        %v760 = vadd.f32 %v722, %v744
        %v761 = vadd.f32 %v723, %v744
        %v762 = vadd.f32 %v724, %v744
        %v763 = vadd.f32 %v725, %v744
        %v764 = vadd.f32 %v726, %v744
        %v765 = vadd.f32 %v727, %v744
        %v766 = vadd.f32 %v728, %v744
        %v767 = vadd.f32 %v729, %v744
        %v768 = vadd.f32 %v730, %v744
        %v769 = vadd.f32 %v731, %v744
        %v770 = vadd.f32 %v732, %v744
        %v771 = vadd.f32 %v733, %v744
        %v772 = vadd.f32 %v734, %v744
        %v773 = vadd.f32 %v735, %v744
        %v774 = vadd.f32 %v736, %v744
        %v775 = vadd.f32 %v737, %v744
        %v776 = vadd.f32 %v738, %v744
        %v777 = vadd.f32 %v739, %v744
        %v778 = vld [vmem:[%s5] sm:$0xf]
        %v779 = vld [vmem:[%s6] sm:$0x1]
        %v781 = vlaneseq
        %v782 = vshrl.u32 %v781, 7
        %v783 = vsub.s32 0, %v782
        %v784 = vrot.slane %v779, %v783
        %v787 = vsel %vm446, %v746, 0
        %v790 = vsel %vm446, %v747, 0
        %v793 = vsel %vm446, %v748, 0
        %v796 = vsel %vm446, %v749, 0
        %v799 = vsel %vm446, %v750, 0
        %v802 = vsel %vm446, %v751, 0
        %v805 = vsel %vm446, %v752, 0
        %v808 = vsel %vm446, %v753, 0
        %v811 = vsel %vm446, %v754, 0
        %v814 = vsel %vm446, %v755, 0
        %v817 = vsel %vm446, %v756, 0
        %v820 = vsel %vm446, %v757, 0
        %v823 = vsel %vm446, %v758, 0
        %v826 = vsel %vm446, %v759, 0
        %v829 = vsel %vm446, %v760, 0
        %v832 = vsel %vm446, %v761, 0
        %v835 = vsel %vm446, %v762, 0
        %v838 = vsel %vm446, %v763, 0
        %v841 = vsel %vm446, %v764, 0
        %v844 = vsel %vm446, %v765, 0
        %v847 = vsel %vm446, %v766, 0
        %v850 = vsel %vm446, %v767, 0
        %v853 = vsel %vm446, %v768, 0
        %v856 = vsel %vm446, %v769, 0
        %v859 = vsel %vm446, %v770, 0
        %v862 = vsel %vm446, %v771, 0
        %v865 = vsel %vm446, %v772, 0
        %v868 = vsel %vm446, %v773, 0
        %v871 = vsel %vm446, %v774, 0
        %v874 = vsel %vm446, %v775, 0
        %v877 = vsel %vm446, %v776, 0
        %v880 = vsel %vm446, %v777, 0
        %vm882 = vcmask 1043456
        %v884 = vsel %vm882, %v778, 0
        %886 = vmatprep.subr.mxu0 0.0
        %887 = vmatpush1.msra.mxu0 %v884
        %888 = vmatprep.subr.mxu0 0.0
        %889 = vmatpush1.msra.mxu0 0.0
        %890 = vmatprep.subr.mxu0 0.0
        %891 = vmatpush1.msra.mxu0 0.0
        %892 = vmatprep.subr.mxu0 0.0
        %893 = vmatpush1.msra.mxu0 0.0
        %894 = vmatprep.subr.mxu0 0.0
        %895 = vmatpush1.msra.mxu0 0.0
        %896 = vmatprep.subr.mxu0 0.0
        %897 = vmatpush1.msra.mxu0 0.0
        %898 = vmatprep.subr.mxu0 0.0
        %899 = vmatpush1.msra.mxu0 0.0
        %900 = vmatprep.subr.mxu0 0.0
        %901 = vmatpush1.msra.mxu0 0.0
        %902 = vmatprep.subr.mxu0 0.0
        %903 = vmatpush1.msra.mxu0 0.0
        %904 = vmatprep.subr.mxu0 0.0
        %905 = vmatpush1.msra.mxu0 0.0
        %906 = vmatprep.subr.mxu0 0.0
        %907 = vmatpush1.msra.mxu0 0.0
        %908 = vmatprep.subr.mxu0 0.0
        %909 = vmatpush1.msra.mxu0 0.0
        %910 = vmatprep.subr.mxu0 0.0
        %911 = vmatpush1.msra.mxu0 0.0
        %912 = vmatprep.subr.mxu0 0.0
        %913 = vmatpush1.msra.mxu0 0.0
        %914 = vmatprep.subr.mxu0 0.0
        %915 = vmatpush1.msra.mxu0 0.0
        %916 = vmatprep.subr.mxu0 0.0
        %917 = vmatpush1.msra.mxu0 0.0
        %918 = vmatprep.subr.mxu0 0.0
        %919 = vmatpush1.msra.mxu0 0.0
        %920 = vmatprep.subr.mxu0 0.0
        %921 = vmatpush1.msra.mxu0 0.0
        %922 = vmatprep.subr.mxu0 0.0
        %923 = vmatpush1.msra.mxu0 0.0
        %924 = vmatprep.subr.mxu0 0.0
        %925 = vmatpush1.msra.mxu0 0.0
        %926 = vmatprep.subr.mxu0 0.0
        %927 = vmatpush1.msra.mxu0 0.0
        %928 = vmatprep.subr.mxu0 0.0
        %929 = vmatpush1.msra.mxu0 0.0
        %930 = vmatprep.subr.mxu0 0.0
        %931 = vmatpush1.msra.mxu0 0.0
        %932 = vmatprep.subr.mxu0 0.0
        %933 = vmatpush1.msra.mxu0 0.0
        %934 = vmatprep.subr.mxu0 0.0
        %935 = vmatpush1.msra.mxu0 0.0
        %936 = vmatprep.subr.mxu0 0.0
        %937 = vmatpush1.msra.mxu0 0.0
        %938 = vmatprep.subr.mxu0 0.0
        %939 = vmatpush1.msra.mxu0 0.0
        %940 = vmatprep.subr.mxu0 0.0
        %941 = vmatpush1.msra.mxu0 0.0
        %942 = vmatprep.subr.mxu0 0.0
        %943 = vmatpush1.msra.mxu0 0.0
        %944 = vmatprep.subr.mxu0 0.0
        %945 = vmatpush1.msra.mxu0 0.0
        %946 = vmatprep.subr.mxu0 0.0
        %947 = vmatpush1.msra.mxu0 0.0
        %948 = vmatprep.subr.mxu0 0.0
        %949 = vmatpush1.msra.mxu0 0.0
        %950 = vmatprep.mubr.f32.mxu0 0.0
        %951 = vmatmul.mubr.f32.gmra.mrb[0].mxu0 %v787
        %v952 = vpop.f32.mrb[0].mxu0
        %v953 = vadd.f32 %v784, %v952
        %v954 = vpop.f32.mrb[0].mxu0
        %955 = vmatprep.mubr.f32.mxu0 0.0
        %956 = vmatmul.mubr.f32.gmra.mrb[0].mxu0 %v790
        %v957 = vpop.f32.mrb[0].mxu0
        %v958 = vadd.f32 %v784, %v957
        %v959 = vpop.f32.mrb[0].mxu0
        %960 = vmatprep.mubr.f32.mxu0 0.0
        %961 = vmatmul.mubr.f32.gmra.mrb[0].mxu0 %v793
        %v962 = vpop.f32.mrb[0].mxu0
        %v963 = vadd.f32 %v784, %v962
        %v964 = vpop.f32.mrb[0].mxu0
        %965 = vmatprep.mubr.f32.mxu0 0.0
        %966 = vmatmul.mubr.f32.gmra.mrb[0].mxu0 %v796
        %v967 = vpop.f32.mrb[0].mxu0
        %v968 = vadd.f32 %v784, %v967
        %v969 = vpop.f32.mrb[0].mxu0
        %970 = vmatprep.mubr.f32.mxu0 0.0
        %971 = vmatmul.mubr.f32.gmra.mrb[0].mxu0 %v799
        %v972 = vpop.f32.mrb[0].mxu0
        %v973 = vadd.f32 %v784, %v972
        %v974 = vpop.f32.mrb[0].mxu0
        %975 = vmatprep.mubr.f32.mxu0 0.0
        %976 = vmatmul.mubr.f32.gmra.mrb[0].mxu0 %v802
        %v977 = vpop.f32.mrb[0].mxu0
        %v978 = vadd.f32 %v784, %v977
        %v979 = vpop.f32.mrb[0].mxu0
        %980 = vmatprep.mubr.f32.mxu0 0.0
        %981 = vmatmul.mubr.f32.gmra.mrb[0].mxu0 %v805
        %v982 = vpop.f32.mrb[0].mxu0
        %v983 = vadd.f32 %v784, %v982
        %v984 = vpop.f32.mrb[0].mxu0
        %985 = vmatprep.mubr.f32.mxu0 0.0
        %986 = vmatmul.mubr.f32.gmra.mrb[0].mxu0 %v808
        %v987 = vpop.f32.mrb[0].mxu0
        %v988 = vadd.f32 %v784, %v987
        %v989 = vpop.f32.mrb[0].mxu0
        %990 = vmatprep.mubr.f32.mxu0 0.0
        %991 = vmatmul.mubr.f32.gmra.mrb[0].mxu0 %v811
        %v992 = vpop.f32.mrb[0].mxu0
        %v993 = vadd.f32 %v784, %v992
        %v994 = vpop.f32.mrb[0].mxu0
        %995 = vmatprep.mubr.f32.mxu0 0.0
        %996 = vmatmul.mubr.f32.gmra.mrb[0].mxu0 %v814
        %v997 = vpop.f32.mrb[0].mxu0
        %v998 = vadd.f32 %v784, %v997
        %v999 = vpop.f32.mrb[0].mxu0
        %1000 = vmatprep.mubr.f32.mxu0 0.0
        %1001 = vmatmul.mubr.f32.gmra.mrb[0].mxu0 %v817
        %v1002 = vpop.f32.mrb[0].mxu0
        %v1003 = vadd.f32 %v784, %v1002
        %v1004 = vpop.f32.mrb[0].mxu0
        %1005 = vmatprep.mubr.f32.mxu0 0.0
        %1006 = vmatmul.mubr.f32.gmra.mrb[0].mxu0 %v820
        %v1007 = vpop.f32.mrb[0].mxu0
        %v1008 = vadd.f32 %v784, %v1007
        %v1009 = vpop.f32.mrb[0].mxu0
        %1010 = vmatprep.mubr.f32.mxu0 0.0
        %1011 = vmatmul.mubr.f32.gmra.mrb[0].mxu0 %v823
        %v1012 = vpop.f32.mrb[0].mxu0
        %v1013 = vadd.f32 %v784, %v1012
        %v1014 = vpop.f32.mrb[0].mxu0
        %1015 = vmatprep.mubr.f32.mxu0 0.0
        %1016 = vmatmul.mubr.f32.gmra.mrb[0].mxu0 %v826
        %v1017 = vpop.f32.mrb[0].mxu0
        %v1018 = vadd.f32 %v784, %v1017
        %v1019 = vpop.f32.mrb[0].mxu0
        %1020 = vmatprep.mubr.f32.mxu0 0.0
        %1021 = vmatmul.mubr.f32.gmra.mrb[0].mxu0 %v829
        %v1022 = vpop.f32.mrb[0].mxu0
        %v1023 = vadd.f32 %v784, %v1022
        %v1024 = vpop.f32.mrb[0].mxu0
        %1025 = vmatprep.mubr.f32.mxu0 0.0
        %1026 = vmatmul.mubr.f32.gmra.mrb[0].mxu0 %v832
        %v1027 = vpop.f32.mrb[0].mxu0
        %v1028 = vadd.f32 %v784, %v1027
        %v1029 = vpop.f32.mrb[0].mxu0
        %1030 = vmatprep.mubr.f32.mxu0 0.0
        %1031 = vmatmul.mubr.f32.gmra.mrb[0].mxu0 %v835
        %v1032 = vpop.f32.mrb[0].mxu0
        %v1033 = vadd.f32 %v784, %v1032
        %v1034 = vpop.f32.mrb[0].mxu0
        %1035 = vmatprep.mubr.f32.mxu0 0.0
        %1036 = vmatmul.mubr.f32.gmra.mrb[0].mxu0 %v838
        %v1037 = vpop.f32.mrb[0].mxu0
        %v1038 = vadd.f32 %v784, %v1037
        %v1039 = vpop.f32.mrb[0].mxu0
        %1040 = vmatprep.mubr.f32.mxu0 0.0
        %1041 = vmatmul.mubr.f32.gmra.mrb[0].mxu0 %v841
        %v1042 = vpop.f32.mrb[0].mxu0
        %v1043 = vadd.f32 %v784, %v1042
        %v1044 = vpop.f32.mrb[0].mxu0
        %1045 = vmatprep.mubr.f32.mxu0 0.0
        %1046 = vmatmul.mubr.f32.gmra.mrb[0].mxu0 %v844
        %v1047 = vpop.f32.mrb[0].mxu0
        %v1048 = vadd.f32 %v784, %v1047
        %v1049 = vpop.f32.mrb[0].mxu0
        %1050 = vmatprep.mubr.f32.mxu0 0.0
        %1051 = vmatmul.mubr.f32.gmra.mrb[0].mxu0 %v847
        %v1052 = vpop.f32.mrb[0].mxu0
        %v1053 = vadd.f32 %v784, %v1052
        %v1054 = vpop.f32.mrb[0].mxu0
        %1055 = vmatprep.mubr.f32.mxu0 0.0
        %1056 = vmatmul.mubr.f32.gmra.mrb[0].mxu0 %v850
        %v1057 = vpop.f32.mrb[0].mxu0
        %v1058 = vadd.f32 %v784, %v1057
        %v1059 = vpop.f32.mrb[0].mxu0
        %1060 = vmatprep.mubr.f32.mxu0 0.0
        %1061 = vmatmul.mubr.f32.gmra.mrb[0].mxu0 %v853
        %v1062 = vpop.f32.mrb[0].mxu0
        %v1063 = vadd.f32 %v784, %v1062
        %v1064 = vpop.f32.mrb[0].mxu0
        %1065 = vmatprep.mubr.f32.mxu0 0.0
        %1066 = vmatmul.mubr.f32.gmra.mrb[0].mxu0 %v856
        %v1067 = vpop.f32.mrb[0].mxu0
        %v1068 = vadd.f32 %v784, %v1067
        %v1069 = vpop.f32.mrb[0].mxu0
        %1070 = vmatprep.mubr.f32.mxu0 0.0
        %1071 = vmatmul.mubr.f32.gmra.mrb[0].mxu0 %v859
        %v1072 = vpop.f32.mrb[0].mxu0
        %v1073 = vadd.f32 %v784, %v1072
        %v1074 = vpop.f32.mrb[0].mxu0
        %1075 = vmatprep.mubr.f32.mxu0 0.0
        %1076 = vmatmul.mubr.f32.gmra.mrb[0].mxu0 %v862
        %v1077 = vpop.f32.mrb[0].mxu0
        %v1078 = vadd.f32 %v784, %v1077
        %v1079 = vpop.f32.mrb[0].mxu0
        %1080 = vmatprep.mubr.f32.mxu0 0.0
        %1081 = vmatmul.mubr.f32.gmra.mrb[0].mxu0 %v865
        %v1082 = vpop.f32.mrb[0].mxu0
        %v1083 = vadd.f32 %v784, %v1082
        %v1084 = vpop.f32.mrb[0].mxu0
        %1085 = vmatprep.mubr.f32.mxu0 0.0
        %1086 = vmatmul.mubr.f32.gmra.mrb[0].mxu0 %v868
        %v1087 = vpop.f32.mrb[0].mxu0
        %v1088 = vadd.f32 %v784, %v1087
        %v1089 = vpop.f32.mrb[0].mxu0
        %1090 = vmatprep.mubr.f32.mxu0 0.0
        %1091 = vmatmul.mubr.f32.gmra.mrb[0].mxu0 %v871
        %v1092 = vpop.f32.mrb[0].mxu0
        %v1093 = vadd.f32 %v784, %v1092
        %v1094 = vpop.f32.mrb[0].mxu0
        %1095 = vmatprep.mubr.f32.mxu0 0.0
        %1096 = vmatmul.mubr.f32.gmra.mrb[0].mxu0 %v874
        %v1097 = vpop.f32.mrb[0].mxu0
        %v1098 = vadd.f32 %v784, %v1097
        %v1099 = vpop.f32.mrb[0].mxu0
        %1100 = vmatprep.mubr.f32.mxu0 0.0
        %1101 = vmatmul.mubr.f32.gmra.mrb[0].mxu0 %v877
        %v1102 = vpop.f32.mrb[0].mxu0
        %v1103 = vadd.f32 %v784, %v1102
        %v1104 = vpop.f32.mrb[0].mxu0
        %1105 = vmatprep.mubr.f32.mxu0 0.0
        %1106 = vmatmul.mubr.f32.gmra.mrb[0].mxu0 %v880
        %v1107 = vpop.f32.mrb[0].mxu0
        %v1108 = vadd.f32 %v784, %v1107
        %v1109 = vpop.f32.mrb[0].mxu0
        %1110 = vdwg.mxu0
        %v1111 = vld [vmem:[%s7] sm:$0xf]
        %v1112 = vld [vmem:[%s8] sm:$0x1]
        %v1114 = vlaneseq
        %v1115 = vshrl.u32 %v1114, 7
        %v1116 = vsub.s32 0, %v1115
        %v1117 = vrot.slane %v1112, %v1116
        %v1120 = vsel %vm882, %v1111, 0
        %1122 = vmatprep.subr.mxu0 0.0
        %1123 = vmatpush1.msra.mxu0 %v1120
        %1124 = vmatprep.subr.mxu0 0.0
        %1125 = vmatpush1.msra.mxu0 0.0
        %1126 = vmatprep.subr.mxu0 0.0
        %1127 = vmatpush1.msra.mxu0 0.0
        %1128 = vmatprep.subr.mxu0 0.0
        %1129 = vmatpush1.msra.mxu0 0.0
        %1130 = vmatprep.subr.mxu0 0.0
        %1131 = vmatpush1.msra.mxu0 0.0
        %1132 = vmatprep.subr.mxu0 0.0
        %1133 = vmatpush1.msra.mxu0 0.0
        %1134 = vmatprep.subr.mxu0 0.0
        %1135 = vmatpush1.msra.mxu0 0.0
        %1136 = vmatprep.subr.mxu0 0.0
        %1137 = vmatpush1.msra.mxu0 0.0
        %1138 = vmatprep.subr.mxu0 0.0
        %1139 = vmatpush1.msra.mxu0 0.0
        %1140 = vmatprep.subr.mxu0 0.0
        %1141 = vmatpush1.msra.mxu0 0.0
        %1142 = vmatprep.subr.mxu0 0.0
        %1143 = vmatpush1.msra.mxu0 0.0
        %1144 = vmatprep.subr.mxu0 0.0
        %1145 = vmatpush1.msra.mxu0 0.0
        %1146 = vmatprep.subr.mxu0 0.0
        %1147 = vmatpush1.msra.mxu0 0.0
        %1148 = vmatprep.subr.mxu0 0.0
        %1149 = vmatpush1.msra.mxu0 0.0
        %1150 = vmatprep.subr.mxu0 0.0
        %1151 = vmatpush1.msra.mxu0 0.0
        %1152 = vmatprep.subr.mxu0 0.0
        %1153 = vmatpush1.msra.mxu0 0.0
        %1154 = vmatprep.subr.mxu0 0.0
        %1155 = vmatpush1.msra.mxu0 0.0
        %1156 = vmatprep.subr.mxu0 0.0
        %1157 = vmatpush1.msra.mxu0 0.0
        %1158 = vmatprep.subr.mxu0 0.0
        %1159 = vmatpush1.msra.mxu0 0.0
        %1160 = vmatprep.subr.mxu0 0.0
        %1161 = vmatpush1.msra.mxu0 0.0
        %1162 = vmatprep.subr.mxu0 0.0
        %1163 = vmatpush1.msra.mxu0 0.0
        %1164 = vmatprep.subr.mxu0 0.0
        %1165 = vmatpush1.msra.mxu0 0.0
        %1166 = vmatprep.subr.mxu0 0.0
        %1167 = vmatpush1.msra.mxu0 0.0
        %1168 = vmatprep.subr.mxu0 0.0
        %1169 = vmatpush1.msra.mxu0 0.0
        %1170 = vmatprep.subr.mxu0 0.0
        %1171 = vmatpush1.msra.mxu0 0.0
        %1172 = vmatprep.subr.mxu0 0.0
        %1173 = vmatpush1.msra.mxu0 0.0
        %1174 = vmatprep.subr.mxu0 0.0
        %1175 = vmatpush1.msra.mxu0 0.0
        %1176 = vmatprep.subr.mxu0 0.0
        %1177 = vmatpush1.msra.mxu0 0.0
        %1178 = vmatprep.subr.mxu0 0.0
        %1179 = vmatpush1.msra.mxu0 0.0
        %1180 = vmatprep.subr.mxu0 0.0
        %1181 = vmatpush1.msra.mxu0 0.0
        %1182 = vmatprep.subr.mxu0 0.0
        %1183 = vmatpush1.msra.mxu0 0.0
        %1184 = vmatprep.subr.mxu0 0.0
        %1185 = vmatpush1.msra.mxu0 0.0
        %1186 = vmatprep.mubr.f32.mxu0 0.0
        %1187 = vmatmul.mubr.f32.gmra.mrb[0].mxu0 %v787
        %v1188 = vpop.f32.mrb[0].mxu0
        %v1189 = vadd.f32 %v1117, %v1188
        %v1190 = vpop.f32.mrb[0].mxu0
        %1191 = vmatprep.mubr.f32.mxu0 0.0
        %1192 = vmatmul.mubr.f32.gmra.mrb[0].mxu0 %v790
        %v1193 = vpop.f32.mrb[0].mxu0
        %v1194 = vadd.f32 %v1117, %v1193
        %v1195 = vpop.f32.mrb[0].mxu0
        %1196 = vmatprep.mubr.f32.mxu0 0.0
        %1197 = vmatmul.mubr.f32.gmra.mrb[0].mxu0 %v793
        %v1198 = vpop.f32.mrb[0].mxu0
        %v1199 = vadd.f32 %v1117, %v1198
        %v1200 = vpop.f32.mrb[0].mxu0
        %1201 = vmatprep.mubr.f32.mxu0 0.0
        %1202 = vmatmul.mubr.f32.gmra.mrb[0].mxu0 %v796
        %v1203 = vpop.f32.mrb[0].mxu0
        %v1204 = vadd.f32 %v1117, %v1203
        %v1205 = vpop.f32.mrb[0].mxu0
        %1206 = vmatprep.mubr.f32.mxu0 0.0
        %1207 = vmatmul.mubr.f32.gmra.mrb[0].mxu0 %v799
        %v1208 = vpop.f32.mrb[0].mxu0
        %v1209 = vadd.f32 %v1117, %v1208
        %v1210 = vpop.f32.mrb[0].mxu0
        %1211 = vmatprep.mubr.f32.mxu0 0.0
        %1212 = vmatmul.mubr.f32.gmra.mrb[0].mxu0 %v802
        %v1213 = vpop.f32.mrb[0].mxu0
        %v1214 = vadd.f32 %v1117, %v1213
        %v1215 = vpop.f32.mrb[0].mxu0
        %1216 = vmatprep.mubr.f32.mxu0 0.0
        %1217 = vmatmul.mubr.f32.gmra.mrb[0].mxu0 %v805
        %v1218 = vpop.f32.mrb[0].mxu0
        %v1219 = vadd.f32 %v1117, %v1218
        %v1220 = vpop.f32.mrb[0].mxu0
        %1221 = vmatprep.mubr.f32.mxu0 0.0
        %1222 = vmatmul.mubr.f32.gmra.mrb[0].mxu0 %v808
        %v1223 = vpop.f32.mrb[0].mxu0
        %v1224 = vadd.f32 %v1117, %v1223
        %v1225 = vpop.f32.mrb[0].mxu0
        %1226 = vmatprep.mubr.f32.mxu0 0.0
        %1227 = vmatmul.mubr.f32.gmra.mrb[0].mxu0 %v811
        %v1228 = vpop.f32.mrb[0].mxu0
        %v1229 = vadd.f32 %v1117, %v1228
        %v1230 = vpop.f32.mrb[0].mxu0
        %1231 = vmatprep.mubr.f32.mxu0 0.0
        %1232 = vmatmul.mubr.f32.gmra.mrb[0].mxu0 %v814
        %v1233 = vpop.f32.mrb[0].mxu0
        %v1234 = vadd.f32 %v1117, %v1233
        %v1235 = vpop.f32.mrb[0].mxu0
        %1236 = vmatprep.mubr.f32.mxu0 0.0
        %1237 = vmatmul.mubr.f32.gmra.mrb[0].mxu0 %v817
        %v1238 = vpop.f32.mrb[0].mxu0
        %v1239 = vadd.f32 %v1117, %v1238
        %v1240 = vpop.f32.mrb[0].mxu0
        %1241 = vmatprep.mubr.f32.mxu0 0.0
        %1242 = vmatmul.mubr.f32.gmra.mrb[0].mxu0 %v820
        %v1243 = vpop.f32.mrb[0].mxu0
        %v1244 = vadd.f32 %v1117, %v1243
        %v1245 = vpop.f32.mrb[0].mxu0
        %1246 = vmatprep.mubr.f32.mxu0 0.0
        %1247 = vmatmul.mubr.f32.gmra.mrb[0].mxu0 %v823
        %v1248 = vpop.f32.mrb[0].mxu0
        %v1249 = vadd.f32 %v1117, %v1248
        %v1250 = vpop.f32.mrb[0].mxu0
        %1251 = vmatprep.mubr.f32.mxu0 0.0
        %1252 = vmatmul.mubr.f32.gmra.mrb[0].mxu0 %v826
        %v1253 = vpop.f32.mrb[0].mxu0
        %v1254 = vadd.f32 %v1117, %v1253
        %v1255 = vpop.f32.mrb[0].mxu0
        %1256 = vmatprep.mubr.f32.mxu0 0.0
        %1257 = vmatmul.mubr.f32.gmra.mrb[0].mxu0 %v829
        %v1258 = vpop.f32.mrb[0].mxu0
        %v1259 = vadd.f32 %v1117, %v1258
        %v1260 = vpop.f32.mrb[0].mxu0
        %1261 = vmatprep.mubr.f32.mxu0 0.0
        %1262 = vmatmul.mubr.f32.gmra.mrb[0].mxu0 %v832
        %v1263 = vpop.f32.mrb[0].mxu0
        %v1264 = vadd.f32 %v1117, %v1263
        %v1265 = vpop.f32.mrb[0].mxu0
        %1266 = vmatprep.mubr.f32.mxu0 0.0
        %1267 = vmatmul.mubr.f32.gmra.mrb[0].mxu0 %v835
        %v1268 = vpop.f32.mrb[0].mxu0
        %v1269 = vadd.f32 %v1117, %v1268
        %v1270 = vpop.f32.mrb[0].mxu0
        %1271 = vmatprep.mubr.f32.mxu0 0.0
        %1272 = vmatmul.mubr.f32.gmra.mrb[0].mxu0 %v838
        %v1273 = vpop.f32.mrb[0].mxu0
        %v1274 = vadd.f32 %v1117, %v1273
        %v1275 = vpop.f32.mrb[0].mxu0
        %1276 = vmatprep.mubr.f32.mxu0 0.0
        %1277 = vmatmul.mubr.f32.gmra.mrb[0].mxu0 %v841
        %v1278 = vpop.f32.mrb[0].mxu0
        %v1279 = vadd.f32 %v1117, %v1278
        %v1280 = vpop.f32.mrb[0].mxu0
        %1281 = vmatprep.mubr.f32.mxu0 0.0
        %1282 = vmatmul.mubr.f32.gmra.mrb[0].mxu0 %v844
        %v1283 = vpop.f32.mrb[0].mxu0
        %v1284 = vadd.f32 %v1117, %v1283
        %v1285 = vpop.f32.mrb[0].mxu0
        %1286 = vmatprep.mubr.f32.mxu0 0.0
        %1287 = vmatmul.mubr.f32.gmra.mrb[0].mxu0 %v847
        %v1288 = vpop.f32.mrb[0].mxu0
        %v1289 = vadd.f32 %v1117, %v1288
        %v1290 = vpop.f32.mrb[0].mxu0
        %1291 = vmatprep.mubr.f32.mxu0 0.0
        %1292 = vmatmul.mubr.f32.gmra.mrb[0].mxu0 %v850
        %v1293 = vpop.f32.mrb[0].mxu0
        %v1294 = vadd.f32 %v1117, %v1293
        %v1295 = vpop.f32.mrb[0].mxu0
        %1296 = vmatprep.mubr.f32.mxu0 0.0
        %1297 = vmatmul.mubr.f32.gmra.mrb[0].mxu0 %v853
        %v1298 = vpop.f32.mrb[0].mxu0
        %v1299 = vadd.f32 %v1117, %v1298
        %v1300 = vpop.f32.mrb[0].mxu0
        %1301 = vmatprep.mubr.f32.mxu0 0.0
        %1302 = vmatmul.mubr.f32.gmra.mrb[0].mxu0 %v856
        %v1303 = vpop.f32.mrb[0].mxu0
        %v1304 = vadd.f32 %v1117, %v1303
        %v1305 = vpop.f32.mrb[0].mxu0
        %1306 = vmatprep.mubr.f32.mxu0 0.0
        %1307 = vmatmul.mubr.f32.gmra.mrb[0].mxu0 %v859
        %v1308 = vpop.f32.mrb[0].mxu0
        %v1309 = vadd.f32 %v1117, %v1308
        %v1310 = vpop.f32.mrb[0].mxu0
        %1311 = vmatprep.mubr.f32.mxu0 0.0
        %1312 = vmatmul.mubr.f32.gmra.mrb[0].mxu0 %v862
        %v1313 = vpop.f32.mrb[0].mxu0
        %v1314 = vadd.f32 %v1117, %v1313
        %v1315 = vpop.f32.mrb[0].mxu0
        %1316 = vmatprep.mubr.f32.mxu0 0.0
        %1317 = vmatmul.mubr.f32.gmra.mrb[0].mxu0 %v865
        %v1318 = vpop.f32.mrb[0].mxu0
        %v1319 = vadd.f32 %v1117, %v1318
        %v1320 = vpop.f32.mrb[0].mxu0
        %1321 = vmatprep.mubr.f32.mxu0 0.0
        %1322 = vmatmul.mubr.f32.gmra.mrb[0].mxu0 %v868
        %v1323 = vpop.f32.mrb[0].mxu0
        %v1324 = vadd.f32 %v1117, %v1323
        %v1325 = vpop.f32.mrb[0].mxu0
        %1326 = vmatprep.mubr.f32.mxu0 0.0
        %1327 = vmatmul.mubr.f32.gmra.mrb[0].mxu0 %v871
        %v1328 = vpop.f32.mrb[0].mxu0
        %v1329 = vadd.f32 %v1117, %v1328
        %v1330 = vpop.f32.mrb[0].mxu0
        %1331 = vmatprep.mubr.f32.mxu0 0.0
        %1332 = vmatmul.mubr.f32.gmra.mrb[0].mxu0 %v874
        %v1333 = vpop.f32.mrb[0].mxu0
        %v1334 = vadd.f32 %v1117, %v1333
        %v1335 = vpop.f32.mrb[0].mxu0
        %1336 = vmatprep.mubr.f32.mxu0 0.0
        %1337 = vmatmul.mubr.f32.gmra.mrb[0].mxu0 %v877
        %v1338 = vpop.f32.mrb[0].mxu0
        %v1339 = vadd.f32 %v1117, %v1338
        %v1340 = vpop.f32.mrb[0].mxu0
        %1341 = vmatprep.mubr.f32.mxu0 0.0
        %1342 = vmatmul.mubr.f32.gmra.mrb[0].mxu0 %v880
        %v1343 = vpop.f32.mrb[0].mxu0
        %v1344 = vadd.f32 %v1117, %v1343
        %v1345 = vpop.f32.mrb[0].mxu0
        %1346 = vdwg.mxu0
        %1347 = vxpose.xlu0.b32.start [1/16] %v953, 128
        %1348 = vxpose.xlu0.b32.cont [2/16] %v958, 128
        %1349 = vxpose.xlu0.b32.cont [3/16] %v963, 128
        %1350 = vxpose.xlu0.b32.cont [4/16] %v968, 128
        %1351 = vxpose.xlu0.b32.cont [5/16] %v973, 128
        %1352 = vxpose.xlu0.b32.cont [6/16] %v978, 128
        %1353 = vxpose.xlu0.b32.cont [7/16] %v983, 128
        %1354 = vxpose.xlu0.b32.cont [8/16] %v988, 128
        %1355 = vxpose.xlu0.b32.cont [9/16] %v993, 128
        %1356 = vxpose.xlu0.b32.cont [10/16] %v998, 128
        %1357 = vxpose.xlu0.b32.cont [11/16] %v1003, 128
        %1358 = vxpose.xlu0.b32.cont [12/16] %v1008, 128
        %1359 = vxpose.xlu0.b32.cont [13/16] %v1013, 128
        %1360 = vxpose.xlu0.b32.cont [14/16] %v1018, 128
        %1361 = vxpose.xlu0.b32.cont [15/16] %v1023, 128
        %1362 = vxpose.xlu0.b32.end [16/16] %v1028, 128
        %v1363 = vpop.trf.xlu0
        %v1364 = vpop.trf.xlu0
        %v1365 = vpop.trf.xlu0
        %v1366 = vpop.trf.xlu0
        %v1367 = vpop.trf.xlu0
        %v1368 = vpop.trf.xlu0
        %v1369 = vpop.trf.xlu0
        %v1370 = vpop.trf.xlu0
        %v1371 = vpop.trf.xlu0
        %v1372 = vpop.trf.xlu0
        %v1373 = vpop.trf.xlu0
        %v1374 = vpop.trf.xlu0
        %v1375 = vpop.trf.xlu0
        %v1376 = vpop.trf.xlu0
        %v1377 = vpop.trf.xlu0
        %v1378 = vpop.trf.xlu0
        %1379 = vxpose.xlu0.b32.start [1/16] %v1033, 128
        %1380 = vxpose.xlu0.b32.cont [2/16] %v1038, 128
        %1381 = vxpose.xlu0.b32.cont [3/16] %v1043, 128
        %1382 = vxpose.xlu0.b32.cont [4/16] %v1048, 128
        %1383 = vxpose.xlu0.b32.cont [5/16] %v1053, 128
        %1384 = vxpose.xlu0.b32.cont [6/16] %v1058, 128
        %1385 = vxpose.xlu0.b32.cont [7/16] %v1063, 128
        %1386 = vxpose.xlu0.b32.cont [8/16] %v1068, 128
        %1387 = vxpose.xlu0.b32.cont [9/16] %v1073, 128
        %1388 = vxpose.xlu0.b32.cont [10/16] %v1078, 128
        %1389 = vxpose.xlu0.b32.cont [11/16] %v1083, 128
        %1390 = vxpose.xlu0.b32.cont [12/16] %v1088, 128
        %1391 = vxpose.xlu0.b32.cont [13/16] %v1093, 128
        %1392 = vxpose.xlu0.b32.cont [14/16] %v1098, 128
        %1393 = vxpose.xlu0.b32.cont [15/16] %v1103, 128
        %1394 = vxpose.xlu0.b32.end [16/16] %v1108, 128
        %v1395 = vpop.trf.xlu0
        %v1396 = vpop.trf.xlu0
        %v1397 = vpop.trf.xlu0
        %v1398 = vpop.trf.xlu0
        %v1399 = vpop.trf.xlu0
        %v1400 = vpop.trf.xlu0
        %v1401 = vpop.trf.xlu0
        %v1402 = vpop.trf.xlu0
        %v1403 = vpop.trf.xlu0
        %v1404 = vpop.trf.xlu0
        %v1405 = vpop.trf.xlu0
        %v1406 = vpop.trf.xlu0
        %v1407 = vpop.trf.xlu0
        %v1408 = vpop.trf.xlu0
        %v1409 = vpop.trf.xlu0
        %v1410 = vpop.trf.xlu0
        %v1413 = vcombine.low %v1363, %v1395
        %1415 = vst [vmem:[#allocation2] sm:$0xff] %v1413
        %1416 = vst.msk [vmem:[#allocation3] sm:$0xff] %vm446, %v1189
        %1417 = vst.msk [vmem:[#allocation3 + $0x8] sm:$0xff] %vm446, %v1194
        %1418 = vst.msk [vmem:[#allocation3 + $0x10] sm:$0xff] %vm446, %v1199
        %1419 = vst.msk [vmem:[#allocation3 + $0x18] sm:$0xff] %vm446, %v1204
        %1420 = vst.msk [vmem:[#allocation3 + $0x20] sm:$0xff] %vm446, %v1209
        %1421 = vst.msk [vmem:[#allocation3 + $0x28] sm:$0xff] %vm446, %v1214
        %1422 = vst.msk [vmem:[#allocation3 + $0x30] sm:$0xff] %vm446, %v1219
        %1423 = vst.msk [vmem:[#allocation3 + $0x38] sm:$0xff] %vm446, %v1224
        %1424 = vst.msk [vmem:[#allocation3 + $0x40] sm:$0xff] %vm446, %v1229
        %1425 = vst.msk [vmem:[#allocation3 + $0x48] sm:$0xff] %vm446, %v1234
        %1426 = vst.msk [vmem:[#allocation3 + $0x50] sm:$0xff] %vm446, %v1239
        %1427 = vst.msk [vmem:[#allocation3 + $0x58] sm:$0xff] %vm446, %v1244
        %1428 = vst.msk [vmem:[#allocation3 + $0x60] sm:$0xff] %vm446, %v1249
        %1429 = vst.msk [vmem:[#allocation3 + $0x68] sm:$0xff] %vm446, %v1254
        %1430 = vst.msk [vmem:[#allocation3 + $0x70] sm:$0xff] %vm446, %v1259
        %1431 = vst.msk [vmem:[#allocation3 + $0x78] sm:$0xff] %vm446, %v1264
        %1432 = vst.msk [vmem:[#allocation3 + $0x80] sm:$0xff] %vm446, %v1269
        %1433 = vst.msk [vmem:[#allocation3 + $0x88] sm:$0xff] %vm446, %v1274
        %1434 = vst.msk [vmem:[#allocation3 + $0x90] sm:$0xff] %vm446, %v1279
        %1435 = vst.msk [vmem:[#allocation3 + $0x98] sm:$0xff] %vm446, %v1284
        %1436 = vst.msk [vmem:[#allocation3 + $0xa0] sm:$0xff] %vm446, %v1289
        %1437 = vst.msk [vmem:[#allocation3 + $0xa8] sm:$0xff] %vm446, %v1294
        %1438 = vst.msk [vmem:[#allocation3 + $0xb0] sm:$0xff] %vm446, %v1299
        %1439 = vst.msk [vmem:[#allocation3 + $0xb8] sm:$0xff] %vm446, %v1304
        %1440 = vst.msk [vmem:[#allocation3 + $0xc0] sm:$0xff] %vm446, %v1309
        %1441 = vst.msk [vmem:[#allocation3 + $0xc8] sm:$0xff] %vm446, %v1314
        %1442 = vst.msk [vmem:[#allocation3 + $0xd0] sm:$0xff] %vm446, %v1319
        %1443 = vst.msk [vmem:[#allocation3 + $0xd8] sm:$0xff] %vm446, %v1324
        %1444 = vst.msk [vmem:[#allocation3 + $0xe0] sm:$0xff] %vm446, %v1329
        %1445 = vst.msk [vmem:[#allocation3 + $0xe8] sm:$0xff] %vm446, %v1334
        %1446 = vst.msk [vmem:[#allocation3 + $0xf0] sm:$0xff] %vm446, %v1339
        %1447 = vst.msk [vmem:[#allocation3 + $0xf8] sm:$0xff] %vm446, %v1344
      $region68: #{tpu_custom_call.1} parent=63 // pred_fallthru
        _
      %s1448 = smul.u32 %s27, 64
      %s1449 = scalar_lea.vmem %s399, %s1448
      %v1450 = vld [vmem:[%s1449] sm:$0xff]
      %v1451 = vld [vmem:[%s1449 + $0x8] sm:$0xff]
      %v1452 = vld [vmem:[%s1449 + $0x10] sm:$0xff]
      %v1453 = vld [vmem:[%s1449 + $0x18] sm:$0xff]
      %v1454 = vld [vmem:[%s1449 + $0x20] sm:$0xff]
      %v1455 = vld [vmem:[%s1449 + $0x28] sm:$0xff]
      %v1456 = vld [vmem:[%s1449 + $0x30] sm:$0xff]
      %v1457 = vld [vmem:[%s1449 + $0x38] sm:$0xff]
      %v1458 = vld [vmem:[#allocation4] sm:$0x1]
      %v1460 = vlaneseq
      %v1461 = vshrl.u32 %v1460, 7
      %v1462 = vsub.s32 0, %v1461
      %v1463 = vrot.slane %v1458, %v1462
      %v1465 = vmul.f32 %v1450, %v1463
      %v1466 = vmul.f32 %v1451, %v1463
      %v1467 = vmul.f32 %v1452, %v1463
      %v1468 = vmul.f32 %v1453, %v1463
      %v1469 = vmul.f32 %v1454, %v1463
      %v1470 = vmul.f32 %v1455, %v1463
      %v1471 = vmul.f32 %v1456, %v1463
      %v1472 = vmul.f32 %v1457, %v1463
      %v1473 = vld [vmem:[#allocation5] sm:$0x1]
      %v1475 = vlaneseq
      %v1476 = vshrl.u32 %v1475, 7
      %v1477 = vsub.s32 0, %v1476
      %v1478 = vrot.slane %v1473, %v1477
      %v1480 = vadd.f32 %v1465, %v1478
      %v1481 = vadd.f32 %v1466, %v1478
      %v1482 = vadd.f32 %v1467, %v1478
      %v1483 = vadd.f32 %v1468, %v1478
      %v1484 = vadd.f32 %v1469, %v1478
      %v1485 = vadd.f32 %v1470, %v1478
      %v1486 = vadd.f32 %v1471, %v1478
      %v1487 = vadd.f32 %v1472, %v1478
      %v1488 = vld [vmem:[%s3] sm:$0xf]
      %v1489 = vld [vmem:[%s4] sm:$0x1]
      %v1491 = vlaneseq
      %v1492 = vshrl.u32 %v1491, 7
      %v1493 = vsub.s32 0, %v1492
      %v1494 = vrot.slane %v1489, %v1493
      %vm1496 = vcmask 31744
      %v1498 = vsel %vm1496, %v1480, 0
      %v1501 = vsel %vm1496, %v1481, 0
      %v1504 = vsel %vm1496, %v1482, 0
      %v1507 = vsel %vm1496, %v1483, 0
      %v1510 = vsel %vm1496, %v1484, 0
      %v1513 = vsel %vm1496, %v1485, 0
      %v1516 = vsel %vm1496, %v1486, 0
      %v1519 = vsel %vm1496, %v1487, 0
      %vm1521 = vcmask 1043456
      %v1523 = vsel %vm1521, %v1488, 0
      %1525 = vmatprep.subr.mxu0 0.0
      %1526 = vmatpush1.msra.mxu0 %v1523
      %1527 = vmatprep.subr.mxu0 0.0
      %1528 = vmatpush1.msra.mxu0 0.0
      %1529 = vmatprep.subr.mxu0 0.0
      %1530 = vmatpush1.msra.mxu0 0.0
      %1531 = vmatprep.subr.mxu0 0.0
      %1532 = vmatpush1.msra.mxu0 0.0
      %1533 = vmatprep.subr.mxu0 0.0
      %1534 = vmatpush1.msra.mxu0 0.0
      %1535 = vmatprep.subr.mxu0 0.0
      %1536 = vmatpush1.msra.mxu0 0.0
      %1537 = vmatprep.subr.mxu0 0.0
      %1538 = vmatpush1.msra.mxu0 0.0
      %1539 = vmatprep.subr.mxu0 0.0
      %1540 = vmatpush1.msra.mxu0 0.0
      %1541 = vmatprep.subr.mxu0 0.0
      %1542 = vmatpush1.msra.mxu0 0.0
      %1543 = vmatprep.subr.mxu0 0.0
      %1544 = vmatpush1.msra.mxu0 0.0
      %1545 = vmatprep.subr.mxu0 0.0
      %1546 = vmatpush1.msra.mxu0 0.0
      %1547 = vmatprep.subr.mxu0 0.0
      %1548 = vmatpush1.msra.mxu0 0.0
      %1549 = vmatprep.subr.mxu0 0.0
      %1550 = vmatpush1.msra.mxu0 0.0
      %1551 = vmatprep.subr.mxu0 0.0
      %1552 = vmatpush1.msra.mxu0 0.0
      %1553 = vmatprep.subr.mxu0 0.0
      %1554 = vmatpush1.msra.mxu0 0.0
      %1555 = vmatprep.subr.mxu0 0.0
      %1556 = vmatpush1.msra.mxu0 0.0
      %1557 = vmatprep.subr.mxu0 0.0
      %1558 = vmatpush1.msra.mxu0 0.0
      %1559 = vmatprep.subr.mxu0 0.0
      %1560 = vmatpush1.msra.mxu0 0.0
      %1561 = vmatprep.subr.mxu0 0.0
      %1562 = vmatpush1.msra.mxu0 0.0
      %1563 = vmatprep.subr.mxu0 0.0
      %1564 = vmatpush1.msra.mxu0 0.0
      %1565 = vmatprep.subr.mxu0 0.0
      %1566 = vmatpush1.msra.mxu0 0.0
      %1567 = vmatprep.subr.mxu0 0.0
      %1568 = vmatpush1.msra.mxu0 0.0
      %1569 = vmatprep.subr.mxu0 0.0
      %1570 = vmatpush1.msra.mxu0 0.0
      %1571 = vmatprep.subr.mxu0 0.0
      %1572 = vmatpush1.msra.mxu0 0.0
      %1573 = vmatprep.subr.mxu0 0.0
      %1574 = vmatpush1.msra.mxu0 0.0
      %1575 = vmatprep.subr.mxu0 0.0
      %1576 = vmatpush1.msra.mxu0 0.0
      %1577 = vmatprep.subr.mxu0 0.0
      %1578 = vmatpush1.msra.mxu0 0.0
      %1579 = vmatprep.subr.mxu0 0.0
      %1580 = vmatpush1.msra.mxu0 0.0
      %1581 = vmatprep.subr.mxu0 0.0
      %1582 = vmatpush1.msra.mxu0 0.0
      %1583 = vmatprep.subr.mxu0 0.0
      %1584 = vmatpush1.msra.mxu0 0.0
      %1585 = vmatprep.subr.mxu0 0.0
      %1586 = vmatpush1.msra.mxu0 0.0
      %1587 = vmatprep.subr.mxu0 0.0
      %1588 = vmatpush1.msra.mxu0 0.0
      %1589 = vmatprep.mubr.f32.mxu0 0.0
      %1590 = vmatmul.mubr.f32.gmra.mrb[0].mxu0 %v1498
      %v1591 = vpop.f32.mrb[0].mxu0
      %v1592 = vadd.f32 %v1494, %v1591
      %v1593 = vpop.f32.mrb[0].mxu0
      %1594 = vmatprep.mubr.f32.mxu0 0.0
      %1595 = vmatmul.mubr.f32.gmra.mrb[0].mxu0 %v1501
      %v1596 = vpop.f32.mrb[0].mxu0
      %v1597 = vadd.f32 %v1494, %v1596
      %v1598 = vpop.f32.mrb[0].mxu0
      %1599 = vmatprep.mubr.f32.mxu0 0.0
      %1600 = vmatmul.mubr.f32.gmra.mrb[0].mxu0 %v1504
      %v1601 = vpop.f32.mrb[0].mxu0
      %v1602 = vadd.f32 %v1494, %v1601
      %v1603 = vpop.f32.mrb[0].mxu0
      %1604 = vmatprep.mubr.f32.mxu0 0.0
      %1605 = vmatmul.mubr.f32.gmra.mrb[0].mxu0 %v1507
      %v1606 = vpop.f32.mrb[0].mxu0
      %v1607 = vadd.f32 %v1494, %v1606
      %v1608 = vpop.f32.mrb[0].mxu0
      %1609 = vmatprep.mubr.f32.mxu0 0.0
      %1610 = vmatmul.mubr.f32.gmra.mrb[0].mxu0 %v1510
      %v1611 = vpop.f32.mrb[0].mxu0
      %v1612 = vadd.f32 %v1494, %v1611
      %v1613 = vpop.f32.mrb[0].mxu0
      %1614 = vmatprep.mubr.f32.mxu0 0.0
      %1615 = vmatmul.mubr.f32.gmra.mrb[0].mxu0 %v1513
      %v1616 = vpop.f32.mrb[0].mxu0
      %v1617 = vadd.f32 %v1494, %v1616
      %v1618 = vpop.f32.mrb[0].mxu0
      %1619 = vmatprep.mubr.f32.mxu0 0.0
      %1620 = vmatmul.mubr.f32.gmra.mrb[0].mxu0 %v1516
      %v1621 = vpop.f32.mrb[0].mxu0
      %v1622 = vadd.f32 %v1494, %v1621
      %v1623 = vpop.f32.mrb[0].mxu0
      %1624 = vmatprep.mubr.f32.mxu0 0.0
      %1625 = vmatmul.mubr.f32.gmra.mrb[0].mxu0 %v1519
      %v1626 = vpop.f32.mrb[0].mxu0
      %v1627 = vadd.f32 %v1494, %v1626
      %v1628 = vpop.f32.mrb[0].mxu0
      %1629 = vdwg.mxu0
      %v1630 = vld [vmem:[#allocation2] sm:$0xff]
      %v1632 = vcombine.high %v1630, %v1630
      %v1634 = vsel %vm1496, %v1592, 0
      %v1637 = vsel %vm1496, %v1597, 0
      %v1640 = vsel %vm1496, %v1602, 0
      %v1643 = vsel %vm1496, %v1607, 0
      %v1646 = vsel %vm1496, %v1612, 0
      %v1649 = vsel %vm1496, %v1617, 0
      %v1652 = vsel %vm1496, %v1622, 0
      %v1655 = vsel %vm1496, %v1627, 0
      %v1657 = vsel %vm1521, %v1630, 0
      %v1659 = vsel %vm1521, %v1632, 0
      %1661 = vmatprep.subr.mxu0 %v1659
      %1662 = vmatpush1.msra.mxu0 %v1657
      %1663 = vmatprep.subr.mxu0 0.0
      %1664 = vmatpush1.msra.mxu0 0.0
      %1665 = vmatprep.subr.mxu0 0.0
      %1666 = vmatpush1.msra.mxu0 0.0
      %1667 = vmatprep.subr.mxu0 0.0
      %1668 = vmatpush1.msra.mxu0 0.0
      %1669 = vmatprep.subr.mxu0 0.0
      %1670 = vmatpush1.msra.mxu0 0.0
      %1671 = vmatprep.subr.mxu0 0.0
      %1672 = vmatpush1.msra.mxu0 0.0
      %1673 = vmatprep.subr.mxu0 0.0
      %1674 = vmatpush1.msra.mxu0 0.0
      %1675 = vmatprep.subr.mxu0 0.0
      %1676 = vmatpush1.msra.mxu0 0.0
      %1677 = vmatprep.subr.mxu0 0.0
      %1678 = vmatpush1.msra.mxu0 0.0
      %1679 = vmatprep.subr.mxu0 0.0
      %1680 = vmatpush1.msra.mxu0 0.0
      %1681 = vmatprep.subr.mxu0 0.0
      %1682 = vmatpush1.msra.mxu0 0.0
      %1683 = vmatprep.subr.mxu0 0.0
      %1684 = vmatpush1.msra.mxu0 0.0
      %1685 = vmatprep.subr.mxu0 0.0
      %1686 = vmatpush1.msra.mxu0 0.0
      %1687 = vmatprep.subr.mxu0 0.0
      %1688 = vmatpush1.msra.mxu0 0.0
      %1689 = vmatprep.subr.mxu0 0.0
      %1690 = vmatpush1.msra.mxu0 0.0
      %1691 = vmatprep.subr.mxu0 0.0
      %1692 = vmatpush1.msra.mxu0 0.0
      %1693 = vmatprep.subr.mxu0 0.0
      %1694 = vmatpush1.msra.mxu0 0.0
      %1695 = vmatprep.subr.mxu0 0.0
      %1696 = vmatpush1.msra.mxu0 0.0
      %1697 = vmatprep.subr.mxu0 0.0
      %1698 = vmatpush1.msra.mxu0 0.0
      %1699 = vmatprep.subr.mxu0 0.0
      %1700 = vmatpush1.msra.mxu0 0.0
      %1701 = vmatprep.subr.mxu0 0.0
      %1702 = vmatpush1.msra.mxu0 0.0
      %1703 = vmatprep.subr.mxu0 0.0
      %1704 = vmatpush1.msra.mxu0 0.0
      %1705 = vmatprep.subr.mxu0 0.0
      %1706 = vmatpush1.msra.mxu0 0.0
      %1707 = vmatprep.subr.mxu0 0.0
      %1708 = vmatpush1.msra.mxu0 0.0
      %1709 = vmatprep.subr.mxu0 0.0
      %1710 = vmatpush1.msra.mxu0 0.0
      %1711 = vmatprep.subr.mxu0 0.0
      %1712 = vmatpush1.msra.mxu0 0.0
      %1713 = vmatprep.subr.mxu0 0.0
      %1714 = vmatpush1.msra.mxu0 0.0
      %1715 = vmatprep.subr.mxu0 0.0
      %1716 = vmatpush1.msra.mxu0 0.0
      %1717 = vmatprep.subr.mxu0 0.0
      %1718 = vmatpush1.msra.mxu0 0.0
      %1719 = vmatprep.subr.mxu0 0.0
      %1720 = vmatpush1.msra.mxu0 0.0
      %1721 = vmatprep.subr.mxu0 0.0
      %1722 = vmatpush1.msra.mxu0 0.0
      %1723 = vmatprep.subr.mxu0 0.0
      %1724 = vmatpush1.msra.mxu0 0.0
      %1725 = vmatprep.mubr.f32.mxu0 0.0
      %1726 = vmatmul.mubr.f32.gmra.mrb[0].mxu0 %v1634
      %v1727 = vpop.f32.mrb[0].mxu0
      %v1728 = vadd.f32 0.0, %v1727
      %v1729 = vpop.f32.mrb[0].mxu0
      %v1730 = vadd.f32 0.0, %v1729
      %1731 = vmatprep.mubr.f32.mxu0 0.0
      %1732 = vmatmul.mubr.f32.gmra.mrb[0].mxu0 %v1637
      %v1733 = vpop.f32.mrb[0].mxu0
      %v1734 = vadd.f32 0.0, %v1733
      %v1735 = vpop.f32.mrb[0].mxu0
      %v1736 = vadd.f32 0.0, %v1735
      %1737 = vmatprep.mubr.f32.mxu0 0.0
      %1738 = vmatmul.mubr.f32.gmra.mrb[0].mxu0 %v1640
      %v1739 = vpop.f32.mrb[0].mxu0
      %v1740 = vadd.f32 0.0, %v1739
      %v1741 = vpop.f32.mrb[0].mxu0
      %v1742 = vadd.f32 0.0, %v1741
      %1743 = vmatprep.mubr.f32.mxu0 0.0
      %1744 = vmatmul.mubr.f32.gmra.mrb[0].mxu0 %v1643
      %v1745 = vpop.f32.mrb[0].mxu0
      %v1746 = vadd.f32 0.0, %v1745
      %v1747 = vpop.f32.mrb[0].mxu0
      %v1748 = vadd.f32 0.0, %v1747
      %1749 = vmatprep.mubr.f32.mxu0 0.0
      %1750 = vmatmul.mubr.f32.gmra.mrb[0].mxu0 %v1646
      %v1751 = vpop.f32.mrb[0].mxu0
      %v1752 = vadd.f32 0.0, %v1751
      %v1753 = vpop.f32.mrb[0].mxu0
      %v1754 = vadd.f32 0.0, %v1753
      %1755 = vmatprep.mubr.f32.mxu0 0.0
      %1756 = vmatmul.mubr.f32.gmra.mrb[0].mxu0 %v1649
      %v1757 = vpop.f32.mrb[0].mxu0
      %v1758 = vadd.f32 0.0, %v1757
      %v1759 = vpop.f32.mrb[0].mxu0
      %v1760 = vadd.f32 0.0, %v1759
      %1761 = vmatprep.mubr.f32.mxu0 0.0
      %1762 = vmatmul.mubr.f32.gmra.mrb[0].mxu0 %v1652
      %v1763 = vpop.f32.mrb[0].mxu0
      %v1764 = vadd.f32 0.0, %v1763
      %v1765 = vpop.f32.mrb[0].mxu0
      %v1766 = vadd.f32 0.0, %v1765
      %1767 = vmatprep.mubr.f32.mxu0 0.0
      %1768 = vmatmul.mubr.f32.gmra.mrb[0].mxu0 %v1655
      %v1769 = vpop.f32.mrb[0].mxu0
      %v1770 = vadd.f32 0.0, %v1769
      %v1771 = vpop.f32.mrb[0].mxu0
      %v1772 = vadd.f32 0.0, %v1771
      %1773 = vdwg.mxu0
      %v1774 = vmax.f32 %v1728, %v1730
      %1775 = vmax.xlane.f32.xlu0 %v1774
      %v1776 = vpop.xlane.xlu0 %1775
      %v1777 = vmax.f32 %v1734, %v1736
      %1778 = vmax.xlane.f32.xlu0 %v1777
      %v1779 = vpop.xlane.xlu0 %1778
      %v1780 = vmax.f32 %v1740, %v1742
      %1781 = vmax.xlane.f32.xlu0 %v1780
      %v1782 = vpop.xlane.xlu0 %1781
      %v1783 = vmax.f32 %v1746, %v1748
      %1784 = vmax.xlane.f32.xlu0 %v1783
      %v1785 = vpop.xlane.xlu0 %1784
      %v1786 = vmax.f32 %v1752, %v1754
      %1787 = vmax.xlane.f32.xlu0 %v1786
      %v1788 = vpop.xlane.xlu0 %1787
      %v1789 = vmax.f32 %v1758, %v1760
      %1790 = vmax.xlane.f32.xlu0 %v1789
      %v1791 = vpop.xlane.xlu0 %1790
      %v1792 = vmax.f32 %v1764, %v1766
      %1793 = vmax.xlane.f32.xlu0 %v1792
      %v1794 = vpop.xlane.xlu0 %1793
      %v1795 = vmax.f32 %v1770, %v1772
      %1796 = vmax.xlane.f32.xlu0 %v1795
      %v1797 = vpop.xlane.xlu0 %1796
      %v1798 = vsub.f32 %v1728, %v1776
      %v1799 = vsub.f32 %v1730, %v1776
      %v1800 = vsub.f32 %v1734, %v1779
      %v1801 = vsub.f32 %v1736, %v1779
      %v1802 = vsub.f32 %v1740, %v1782
      %v1803 = vsub.f32 %v1742, %v1782
      %v1804 = vsub.f32 %v1746, %v1785
      %v1805 = vsub.f32 %v1748, %v1785
      %v1806 = vsub.f32 %v1752, %v1788
      %v1807 = vsub.f32 %v1754, %v1788
      %v1808 = vsub.f32 %v1758, %v1791
      %v1809 = vsub.f32 %v1760, %v1791
      %v1810 = vsub.f32 %v1764, %v1794
      %v1811 = vsub.f32 %v1766, %v1794
      %v1812 = vsub.f32 %v1770, %v1797
      %v1813 = vsub.f32 %v1772, %v1797
      %v1814 = vmul.f32 %v1798, 1.442695
      %v1815 = vpow.pop %v1814
      %v1816 = vmul.f32 %v1799, 1.442695
      %v1817 = vpow.pop %v1816
      %v1818 = vmul.f32 %v1800, 1.442695
      %v1819 = vpow.pop %v1818
      %v1820 = vmul.f32 %v1801, 1.442695
      %v1821 = vpow.pop %v1820
      %v1822 = vmul.f32 %v1802, 1.442695
      %v1823 = vpow.pop %v1822
      %v1824 = vmul.f32 %v1803, 1.442695
      %v1825 = vpow.pop %v1824
      %v1826 = vmul.f32 %v1804, 1.442695
      %v1827 = vpow.pop %v1826
      %v1828 = vmul.f32 %v1805, 1.442695
      %v1829 = vpow.pop %v1828
      %v1830 = vmul.f32 %v1806, 1.442695
      %v1831 = vpow.pop %v1830
      %v1832 = vmul.f32 %v1807, 1.442695
      %v1833 = vpow.pop %v1832
      %v1834 = vmul.f32 %v1808, 1.442695
      %v1835 = vpow.pop %v1834
      %v1836 = vmul.f32 %v1809, 1.442695
      %v1837 = vpow.pop %v1836
      %v1838 = vmul.f32 %v1810, 1.442695
      %v1839 = vpow.pop %v1838
      %v1840 = vmul.f32 %v1811, 1.442695
      %v1841 = vpow.pop %v1840
      %v1842 = vmul.f32 %v1812, 1.442695
      %v1843 = vpow.pop %v1842
      %v1844 = vmul.f32 %v1813, 1.442695
      %v1845 = vpow.pop %v1844
      %v1846 = vadd.f32 %v1815, %v1817
      %1847 = vadd.xlane.f32.xlu0 %v1846
      %v1848 = vpop.xlane.xlu0 %1847
      %v1849 = vadd.f32 %v1819, %v1821
      %1850 = vadd.xlane.f32.xlu0 %v1849
      %v1851 = vpop.xlane.xlu0 %1850
      %v1852 = vadd.f32 %v1823, %v1825
      %1853 = vadd.xlane.f32.xlu0 %v1852
      %v1854 = vpop.xlane.xlu0 %1853
      %v1855 = vadd.f32 %v1827, %v1829
      %1856 = vadd.xlane.f32.xlu0 %v1855
      %v1857 = vpop.xlane.xlu0 %1856
      %v1858 = vadd.f32 %v1831, %v1833
      %1859 = vadd.xlane.f32.xlu0 %v1858
      %v1860 = vpop.xlane.xlu0 %1859
      %v1861 = vadd.f32 %v1835, %v1837
      %1862 = vadd.xlane.f32.xlu0 %v1861
      %v1863 = vpop.xlane.xlu0 %1862
      %v1864 = vadd.f32 %v1839, %v1841
      %1865 = vadd.xlane.f32.xlu0 %v1864
      %v1866 = vpop.xlane.xlu0 %1865
      %v1867 = vadd.f32 %v1843, %v1845
      %1868 = vadd.xlane.f32.xlu0 %v1867
      %v1869 = vpop.xlane.xlu0 %1868
      %v1870 = vld [vmem:[#allocation3] sm:$0xff]
      %v1871 = vld [vmem:[#allocation3 + $0x8] sm:$0xff]
      %v1872 = vld [vmem:[#allocation3 + $0x10] sm:$0xff]
      %v1873 = vld [vmem:[#allocation3 + $0x18] sm:$0xff]
      %v1874 = vld [vmem:[#allocation3 + $0x20] sm:$0xff]
      %v1875 = vld [vmem:[#allocation3 + $0x28] sm:$0xff]
      %v1876 = vld [vmem:[#allocation3 + $0x30] sm:$0xff]
      %v1877 = vld [vmem:[#allocation3 + $0x38] sm:$0xff]
      %v1878 = vld [vmem:[#allocation3 + $0x40] sm:$0xff]
      %v1879 = vld [vmem:[#allocation3 + $0x48] sm:$0xff]
      %v1880 = vld [vmem:[#allocation3 + $0x50] sm:$0xff]
      %v1881 = vld [vmem:[#allocation3 + $0x58] sm:$0xff]
      %v1882 = vld [vmem:[#allocation3 + $0x60] sm:$0xff]
      %v1883 = vld [vmem:[#allocation3 + $0x68] sm:$0xff]
      %v1884 = vld [vmem:[#allocation3 + $0x70] sm:$0xff]
      %v1885 = vld [vmem:[#allocation3 + $0x78] sm:$0xff]
      %v1886 = vld [vmem:[#allocation3 + $0x80] sm:$0xff]
      %v1887 = vld [vmem:[#allocation3 + $0x88] sm:$0xff]
      %v1888 = vld [vmem:[#allocation3 + $0x90] sm:$0xff]
      %v1889 = vld [vmem:[#allocation3 + $0x98] sm:$0xff]
      %v1890 = vld [vmem:[#allocation3 + $0xa0] sm:$0xff]
      %v1891 = vld [vmem:[#allocation3 + $0xa8] sm:$0xff]
      %v1892 = vld [vmem:[#allocation3 + $0xb0] sm:$0xff]
      %v1893 = vld [vmem:[#allocation3 + $0xb8] sm:$0xff]
      %v1894 = vld [vmem:[#allocation3 + $0xc0] sm:$0xff]
      %v1895 = vld [vmem:[#allocation3 + $0xc8] sm:$0xff]
      %v1896 = vld [vmem:[#allocation3 + $0xd0] sm:$0xff]
      %v1897 = vld [vmem:[#allocation3 + $0xd8] sm:$0xff]
      %v1898 = vld [vmem:[#allocation3 + $0xe0] sm:$0xff]
      %v1899 = vld [vmem:[#allocation3 + $0xe8] sm:$0xff]
      %v1900 = vld [vmem:[#allocation3 + $0xf0] sm:$0xff]
      %v1901 = vld [vmem:[#allocation3 + $0xf8] sm:$0xff]
      %1902 = vmatprep.subr.mxu0 0.0
      %1903 = vmatpush1.msra.mxu0 %v1870
      %1904 = vmatprep.subr.mxu0 0.0
      %1905 = vmatpush1.msra.mxu0 %v1871
      %1906 = vmatprep.subr.mxu0 0.0
      %1907 = vmatpush1.msra.mxu0 %v1872
      %1908 = vmatprep.subr.mxu0 0.0
      %1909 = vmatpush1.msra.mxu0 %v1873
      %1910 = vmatprep.subr.mxu0 0.0
      %1911 = vmatpush1.msra.mxu0 %v1874
      %1912 = vmatprep.subr.mxu0 0.0
      %1913 = vmatpush1.msra.mxu0 %v1875
      %1914 = vmatprep.subr.mxu0 0.0
      %1915 = vmatpush1.msra.mxu0 %v1876
      %1916 = vmatprep.subr.mxu0 0.0
      %1917 = vmatpush1.msra.mxu0 %v1877
      %1918 = vmatprep.subr.mxu0 0.0
      %1919 = vmatpush1.msra.mxu0 %v1878
      %1920 = vmatprep.subr.mxu0 0.0
      %1921 = vmatpush1.msra.mxu0 %v1879
      %1922 = vmatprep.subr.mxu0 0.0
      %1923 = vmatpush1.msra.mxu0 %v1880
      %1924 = vmatprep.subr.mxu0 0.0
      %1925 = vmatpush1.msra.mxu0 %v1881
      %1926 = vmatprep.subr.mxu0 0.0
      %1927 = vmatpush1.msra.mxu0 %v1882
      %1928 = vmatprep.subr.mxu0 0.0
      %1929 = vmatpush1.msra.mxu0 %v1883
      %1930 = vmatprep.subr.mxu0 0.0
      %1931 = vmatpush1.msra.mxu0 %v1884
      %1932 = vmatprep.subr.mxu0 0.0
      %1933 = vmatpush1.msra.mxu0 %v1885
      %1934 = vmatprep.subr.mxu0 0.0
      %1935 = vmatpush1.msra.mxu0 %v1886
      %1936 = vmatprep.subr.mxu0 0.0
      %1937 = vmatpush1.msra.mxu0 %v1887
      %1938 = vmatprep.subr.mxu0 0.0
      %1939 = vmatpush1.msra.mxu0 %v1888
      %1940 = vmatprep.subr.mxu0 0.0
      %1941 = vmatpush1.msra.mxu0 %v1889
      %1942 = vmatprep.subr.mxu0 0.0
      %1943 = vmatpush1.msra.mxu0 %v1890
      %1944 = vmatprep.subr.mxu0 0.0
      %1945 = vmatpush1.msra.mxu0 %v1891
      %1946 = vmatprep.subr.mxu0 0.0
      %1947 = vmatpush1.msra.mxu0 %v1892
      %1948 = vmatprep.subr.mxu0 0.0
      %1949 = vmatpush1.msra.mxu0 %v1893
      %1950 = vmatprep.subr.mxu0 0.0
      %1951 = vmatpush1.msra.mxu0 %v1894
      %1952 = vmatprep.subr.mxu0 0.0
      %1953 = vmatpush1.msra.mxu0 %v1895
      %1954 = vmatprep.subr.mxu0 0.0
      %1955 = vmatpush1.msra.mxu0 %v1896
      %1956 = vmatprep.subr.mxu0 0.0
      %1957 = vmatpush1.msra.mxu0 %v1897
      %1958 = vmatprep.subr.mxu0 0.0
      %1959 = vmatpush1.msra.mxu0 %v1898
      %1960 = vmatprep.subr.mxu0 0.0
      %1961 = vmatpush1.msra.mxu0 %v1899
      %1962 = vmatprep.subr.mxu0 0.0
      %1963 = vmatpush1.msra.mxu0 %v1900
      %1964 = vmatprep.subr.mxu0 0.0
      %1965 = vmatpush1.msra.mxu0 %v1901
      %1966 = vmatprep.mubr.f32.mxu0 %v1817
      %1967 = vmatmul.mubr.f32.gmra.mrb[0].mxu0 %v1815
      %v1968 = vpop.f32.mrb[0].mxu0
      %v1969 = vadd.f32 0.0, %v1968
      %v1970 = vpop.f32.mrb[0].mxu0
      %1971 = vmatprep.mubr.f32.mxu0 %v1821
      %1972 = vmatmul.mubr.f32.gmra.mrb[0].mxu0 %v1819
      %v1973 = vpop.f32.mrb[0].mxu0
      %v1974 = vadd.f32 0.0, %v1973
      %v1975 = vpop.f32.mrb[0].mxu0
      %1976 = vmatprep.mubr.f32.mxu0 %v1825
      %1977 = vmatmul.mubr.f32.gmra.mrb[0].mxu0 %v1823
      %v1978 = vpop.f32.mrb[0].mxu0
      %v1979 = vadd.f32 0.0, %v1978
      %v1980 = vpop.f32.mrb[0].mxu0
      %1981 = vmatprep.mubr.f32.mxu0 %v1829
      %1982 = vmatmul.mubr.f32.gmra.mrb[0].mxu0 %v1827
      %v1983 = vpop.f32.mrb[0].mxu0
      %v1984 = vadd.f32 0.0, %v1983
      %v1985 = vpop.f32.mrb[0].mxu0
      %1986 = vmatprep.mubr.f32.mxu0 %v1833
      %1987 = vmatmul.mubr.f32.gmra.mrb[0].mxu0 %v1831
      %v1988 = vpop.f32.mrb[0].mxu0
      %v1989 = vadd.f32 0.0, %v1988
      %v1990 = vpop.f32.mrb[0].mxu0
      %1991 = vmatprep.mubr.f32.mxu0 %v1837
      %1992 = vmatmul.mubr.f32.gmra.mrb[0].mxu0 %v1835
      %v1993 = vpop.f32.mrb[0].mxu0
      %v1994 = vadd.f32 0.0, %v1993
      %v1995 = vpop.f32.mrb[0].mxu0
      %1996 = vmatprep.mubr.f32.mxu0 %v1841
      %1997 = vmatmul.mubr.f32.gmra.mrb[0].mxu0 %v1839
      %v1998 = vpop.f32.mrb[0].mxu0
      %v1999 = vadd.f32 0.0, %v1998
      %v2000 = vpop.f32.mrb[0].mxu0
      %2001 = vmatprep.mubr.f32.mxu0 %v1845
      %2002 = vmatmul.mubr.f32.gmra.mrb[0].mxu0 %v1843
      %v2003 = vpop.f32.mrb[0].mxu0
      %v2004 = vadd.f32 0.0, %v2003
      %v2005 = vpop.f32.mrb[0].mxu0
      %2006 = vdwg.mxu0
      %v2007 = vrcp.pop %v1848
      %v2008 = vrcp.pop %v1851
      %v2009 = vrcp.pop %v1854
      %v2010 = vrcp.pop %v1857
      %v2011 = vrcp.pop %v1860
      %v2012 = vrcp.pop %v1863
      %v2013 = vrcp.pop %v1866
      %v2014 = vrcp.pop %v1869
      %v2015 = vmul.f32 %v1969, %v2007
      %v2016 = vmul.f32 %v1974, %v2008
      %v2017 = vmul.f32 %v1979, %v2009
      %v2018 = vmul.f32 %v1984, %v2010
      %v2019 = vmul.f32 %v1989, %v2011
      %v2020 = vmul.f32 %v1994, %v2012
      %v2021 = vmul.f32 %v1999, %v2013
      %v2022 = vmul.f32 %v2004, %v2014
      %v2023 = vld [vmem:[%s9] sm:$0xf]
      %v2024 = vld [vmem:[%s10] sm:$0x1]
      %v2026 = vlaneseq
      %v2027 = vshrl.u32 %v2026, 7
      %v2028 = vsub.s32 0, %v2027
      %v2029 = vrot.slane %v2024, %v2028
      %v2032 = vsel %vm1496, %v2015, 0
      %v2035 = vsel %vm1496, %v2016, 0
      %v2038 = vsel %vm1496, %v2017, 0
      %v2041 = vsel %vm1496, %v2018, 0
      %v2044 = vsel %vm1496, %v2019, 0
      %v2047 = vsel %vm1496, %v2020, 0
      %v2050 = vsel %vm1496, %v2021, 0
      %v2053 = vsel %vm1496, %v2022, 0
      %v2056 = vsel %vm1521, %v2023, 0
      %2058 = vmatprep.subr.mxu0 0.0
      %2059 = vmatpush1.msra.mxu0 %v2056
      %2060 = vmatprep.subr.mxu0 0.0
      %2061 = vmatpush1.msra.mxu0 0.0
      %2062 = vmatprep.subr.mxu0 0.0
      %2063 = vmatpush1.msra.mxu0 0.0
      %2064 = vmatprep.subr.mxu0 0.0
      %2065 = vmatpush1.msra.mxu0 0.0
      %2066 = vmatprep.subr.mxu0 0.0
      %2067 = vmatpush1.msra.mxu0 0.0
      %2068 = vmatprep.subr.mxu0 0.0
      %2069 = vmatpush1.msra.mxu0 0.0
      %2070 = vmatprep.subr.mxu0 0.0
      %2071 = vmatpush1.msra.mxu0 0.0
      %2072 = vmatprep.subr.mxu0 0.0
      %2073 = vmatpush1.msra.mxu0 0.0
      %2074 = vmatprep.subr.mxu0 0.0
      %2075 = vmatpush1.msra.mxu0 0.0
      %2076 = vmatprep.subr.mxu0 0.0
      %2077 = vmatpush1.msra.mxu0 0.0
      %2078 = vmatprep.subr.mxu0 0.0
      %2079 = vmatpush1.msra.mxu0 0.0
      %2080 = vmatprep.subr.mxu0 0.0
      %2081 = vmatpush1.msra.mxu0 0.0
      %2082 = vmatprep.subr.mxu0 0.0
      %2083 = vmatpush1.msra.mxu0 0.0
      %2084 = vmatprep.subr.mxu0 0.0
      %2085 = vmatpush1.msra.mxu0 0.0
      %2086 = vmatprep.subr.mxu0 0.0
      %2087 = vmatpush1.msra.mxu0 0.0
      %2088 = vmatprep.subr.mxu0 0.0
      %2089 = vmatpush1.msra.mxu0 0.0
      %2090 = vmatprep.subr.mxu0 0.0
      %2091 = vmatpush1.msra.mxu0 0.0
      %2092 = vmatprep.subr.mxu0 0.0
      %2093 = vmatpush1.msra.mxu0 0.0
      %2094 = vmatprep.subr.mxu0 0.0
      %2095 = vmatpush1.msra.mxu0 0.0
      %2096 = vmatprep.subr.mxu0 0.0
      %2097 = vmatpush1.msra.mxu0 0.0
      %2098 = vmatprep.subr.mxu0 0.0
      %2099 = vmatpush1.msra.mxu0 0.0
      %2100 = vmatprep.subr.mxu0 0.0
      %2101 = vmatpush1.msra.mxu0 0.0
      %2102 = vmatprep.subr.mxu0 0.0
      %2103 = vmatpush1.msra.mxu0 0.0
      %2104 = vmatprep.subr.mxu0 0.0
      %2105 = vmatpush1.msra.mxu0 0.0
      %2106 = vmatprep.subr.mxu0 0.0
      %2107 = vmatpush1.msra.mxu0 0.0
      %2108 = vmatprep.subr.mxu0 0.0
      %2109 = vmatpush1.msra.mxu0 0.0
      %2110 = vmatprep.subr.mxu0 0.0
      %2111 = vmatpush1.msra.mxu0 0.0
      %2112 = vmatprep.subr.mxu0 0.0
      %2113 = vmatpush1.msra.mxu0 0.0
      %2114 = vmatprep.subr.mxu0 0.0
      %2115 = vmatpush1.msra.mxu0 0.0
      %2116 = vmatprep.subr.mxu0 0.0
      %2117 = vmatpush1.msra.mxu0 0.0
      %2118 = vmatprep.subr.mxu0 0.0
      %2119 = vmatpush1.msra.mxu0 0.0
      %2120 = vmatprep.subr.mxu0 0.0
      %2121 = vmatpush1.msra.mxu0 0.0
      %2122 = vmatprep.mubr.f32.mxu0 0.0
      %2123 = vmatmul.mubr.f32.gmra.mrb[0].mxu0 %v2032
      %v2124 = vpop.f32.mrb[0].mxu0
      %v2125 = vadd.f32 %v2029, %v2124
      %v2126 = vpop.f32.mrb[0].mxu0
      %2127 = vmatprep.mubr.f32.mxu0 0.0
      %2128 = vmatmul.mubr.f32.gmra.mrb[0].mxu0 %v2035
      %v2129 = vpop.f32.mrb[0].mxu0
      %v2130 = vadd.f32 %v2029, %v2129
      %v2131 = vpop.f32.mrb[0].mxu0
      %2132 = vmatprep.mubr.f32.mxu0 0.0
      %2133 = vmatmul.mubr.f32.gmra.mrb[0].mxu0 %v2038
      %v2134 = vpop.f32.mrb[0].mxu0
      %v2135 = vadd.f32 %v2029, %v2134
      %v2136 = vpop.f32.mrb[0].mxu0
      %2137 = vmatprep.mubr.f32.mxu0 0.0
      %2138 = vmatmul.mubr.f32.gmra.mrb[0].mxu0 %v2041
      %v2139 = vpop.f32.mrb[0].mxu0
      %v2140 = vadd.f32 %v2029, %v2139
      %v2141 = vpop.f32.mrb[0].mxu0
      %2142 = vmatprep.mubr.f32.mxu0 0.0
      %2143 = vmatmul.mubr.f32.gmra.mrb[0].mxu0 %v2044
      %v2144 = vpop.f32.mrb[0].mxu0
      %v2145 = vadd.f32 %v2029, %v2144
      %v2146 = vpop.f32.mrb[0].mxu0
      %2147 = vmatprep.mubr.f32.mxu0 0.0
      %2148 = vmatmul.mubr.f32.gmra.mrb[0].mxu0 %v2047
      %v2149 = vpop.f32.mrb[0].mxu0
      %v2150 = vadd.f32 %v2029, %v2149
      %v2151 = vpop.f32.mrb[0].mxu0
      %2152 = vmatprep.mubr.f32.mxu0 0.0
      %2153 = vmatmul.mubr.f32.gmra.mrb[0].mxu0 %v2050
      %v2154 = vpop.f32.mrb[0].mxu0
      %v2155 = vadd.f32 %v2029, %v2154
      %v2156 = vpop.f32.mrb[0].mxu0
      %2157 = vmatprep.mubr.f32.mxu0 0.0
      %2158 = vmatmul.mubr.f32.gmra.mrb[0].mxu0 %v2053
      %v2159 = vpop.f32.mrb[0].mxu0
      %v2160 = vadd.f32 %v2029, %v2159
      %v2161 = vpop.f32.mrb[0].mxu0
      %2162 = vdwg.mxu0
      %v2163 = vadd.f32 %v1450, %v2125
      %v2164 = vadd.f32 %v1451, %v2130
      %v2165 = vadd.f32 %v1452, %v2135
      %v2166 = vadd.f32 %v1453, %v2140
      %v2167 = vadd.f32 %v1454, %v2145
      %v2168 = vadd.f32 %v1455, %v2150
      %v2169 = vadd.f32 %v1456, %v2155
      %v2170 = vadd.f32 %v1457, %v2160
      %2171 = vst.msk [vmem:[%s408] sm:$0xff] %vm1496, %v2163
      %2172 = vst.msk [vmem:[%s408 + $0x8] sm:$0xff] %vm1496, %v2164
      %2173 = vst.msk [vmem:[%s408 + $0x10] sm:$0xff] %vm1496, %v2165
      %2174 = vst.msk [vmem:[%s408 + $0x18] sm:$0xff] %vm1496, %v2166
      %2175 = vst.msk [vmem:[%s408 + $0x20] sm:$0xff] %vm1496, %v2167
      %2176 = vst.msk [vmem:[%s408 + $0x28] sm:$0xff] %vm1496, %v2168
      %2177 = vst.msk [vmem:[%s408 + $0x30] sm:$0xff] %vm1496, %v2169
      %2178 = vst.msk [vmem:[%s408 + $0x38] sm:$0xff] %vm1496, %v2170
      %s2179 = smul.u32 8, %s27
      %p2180 = scmp.lt.s32.totalorder %s26, 1
      %s2181 = scalar_select %p2180, %s26, 1
      %p2182 = scmp.lt.s32.totalorder %s2179, 31
      %s2183 = scalar_select %p2182, %s2179, 31
      %s2184 = smul.addr %s2181, 32
      %s2185 = sadd.s32 %s2183, %s2184
      %s2186 = smul.addr %s2185, 8
      %s2187 = scalar_lea.vmem %s11, %s2186
      // Predicated region
      $region69: #{tpu_custom_call.1} parent=63 // pred_check
        %p2188 = pneg %p290
      $region70: #{tpu_custom_call.1} parent=63 // pred_check_branch
        %2190 = sbr.rel (%p2188) target = $region72
      $region71: #{tpu_custom_call.1} parent=63 // pred_region
        %s2191 = smul.u32 8, %s27
      $region72: #{tpu_custom_call.1} parent=63 // pred_fallthru
        _
    $region64: #{tpu_custom_call.1} parent=5 // pred_fallthru
      _
    %p2192 = scmp.le.s32.totalorder 2, %s17
    // Predicated region
    $region73: #{tpu_custom_call.1} parent=5 // pred_check
      %p2193 = pneg %p2192
    $region74: #{tpu_custom_call.1} parent=5 // pred_check_branch
      %2195 = sbr.rel (%p2193) target = $region76
    $region75: #{tpu_custom_call.1} parent=5 // pred_region
      %s2196 = ssub.s32 %s17, 2
      // Predicated region
      $region77: #{tpu_custom_call.1} parent=75 // pred_check
        %p2197 = pneg %p296
      $region78: #{tpu_custom_call.1} parent=75 // pred_check_branch
        %2199 = sbr.rel (%p2197) target = $region80
      $region79: #{tpu_custom_call.1} parent=75 // pred_region
        %s2200 = smul.u32 8, %s29
        %p2201 = scmp.lt.s32.totalorder %s28, 1
        %s2202 = scalar_select %p2201, %s28, 1
        %p2203 = scmp.lt.s32.totalorder %s2200, 31
        %s2204 = scalar_select %p2203, %s2200, 31
        %s2205 = smul.addr %s2202, 32
        %s2206 = sadd.s32 %s2204, %s2205
        %s2207 = smul.addr %s2206, 8
        %s2208 = scalar_lea.vmem %s11, %s2207
      $region80: #{tpu_custom_call.1} parent=75 // pred_fallthru
        _
    $region76: #{tpu_custom_call.1} parent=5 // pred_fallthru
      _
  $region6: #{tpu_custom_call.1} parent=0 // loop_footer
    %s21 = sadd.s32 1, %s17
  $region7: #{tpu_custom_call.1} parent=0 // loop_footer_branch
    %16 = sbr.rel target = $region3
  $region8: #{tpu_custom_call.1} parent=0 // loop_exit
    _

// kernel: tpu_custom_call.1
$region0: #{tpu_custom_call.1}
  #allocation0 [shape = 'u32[]', space=smem, size = 0x4, offset = 0x4, fixed_abs, tag = 'smem constant byte address 0x4 - core index']
  #allocation1 [shape = 'u32[144,128]{1,0:T(1,128)}', space=vmem, size = 0x12000, scoped, tag = 'internal scratch']
  #allocation2 [shape = 'f32[4,256]{1,0:T(4,128)}', space=vmem, size = 0x1000, scoped, tag = 'scratch operand']
  #allocation3 [shape = 'f32[256,4]{1,0:T(8,128)}', space=vmem, size = 0x20000, scoped, tag = 'scratch operand']
  #allocation4 [shape = 'f32[1,4]{1,0:T(1,128)}', space=vmem, size = 0x200, scoped, tag = 'scratch operand']
  #allocation5 [shape = 'f32[1,4]{1,0:T(1,128)}', space=vmem, size = 0x200, scoped, tag = 'scratch operand']
  %s0 = inlined_call_operand.vmem [shape: f32[2,256,4], index: 0, kind: input, shape index: {}]
  %s1 = inlined_call_operand.vmem [shape: f32[1,4], index: 1, kind: input, shape index: {}]
  %s2 = inlined_call_operand.vmem [shape: f32[1,4], index: 2, kind: input, shape index: {}]
  %s3 = inlined_call_operand.vmem [shape: f32[4,4], index: 3, kind: input, shape index: {}]
  %s4 = inlined_call_operand.vmem [shape: f32[1,4], index: 4, kind: input, shape index: {}]
  %s5 = inlined_call_operand.vmem [shape: f32[4,4], index: 5, kind: input, shape index: {}]
  %s6 = inlined_call_operand.vmem [shape: f32[1,4], index: 6, kind: input, shape index: {}]
  %s7 = inlined_call_operand.vmem [shape: f32[4,4], index: 7, kind: input, shape index: {}]
  %s8 = inlined_call_operand.vmem [shape: f32[1,4], index: 8, kind: input, shape index: {}]
  %s9 = inlined_call_operand.vmem [shape: f32[4,4], index: 9, kind: input, shape index: {}]
  %s10 = inlined_call_operand.vmem [shape: f32[1,4], index: 10, kind: input, shape index: {}]
  %s11 = inlined_call_operand.vmem [shape: f32[2,256,4], index: 11, kind: output, shape index: {}]
  %s12 = sld [smem:[#allocation0]]
  $region81: #{tpu_custom_call.1} parent=0
    _
  %s14 = ssub.s32 1, %s12
  %s15 = scalar_select 0, %s14, %s12
  loop: start=0, step=1, limit=10
  $region2: #{tpu_custom_call.1} parent=0 // loop_pre_header
    _
  $region3: #{tpu_custom_call.1} parent=0 // loop_header
    %s17 = sphi 0, %s21
    %p18 = scmp.ge.s32.totalorder %s17, 10
    %s24 = sphi 0, %s36
    %s25 = sphi 0, %s32
    %s26 = sphi 0, %s24
    %s27 = sphi 0, %s25
    %s28 = sphi 0, %s26
    %s29 = sphi 0, %s27
    %s39 = sphi 0, %s41
    %s42 = sphi 0, %s39
    %s43 = sphi 0, %s42
    %s59 = sphi 0, %s43
    %s63 = sphi 0, %s63
    %s65 = sphi 0, %s63
    %s66 = sphi 0, %s65
    %s80 = sphi 0, %s66
    %s84 = sphi 0, %s84
    %s86 = sphi 0, %s84
    %s87 = sphi 0, %s86
    %s101 = sphi 0, %s87
    %s105 = sphi 0, %s105
    %s107 = sphi 0, %s105
    %s108 = sphi 0, %s107
    %s122 = sphi 0, %s108
    %s126 = sphi 0, %s126
    %s128 = sphi 0, %s126
    %s129 = sphi 0, %s128
    %s143 = sphi 0, %s129
    %s147 = sphi 0, %s147
    %s149 = sphi 0, %s147
    %s150 = sphi 0, %s149
    %s164 = sphi 0, %s150
    %s168 = sphi 0, %s168
    %s170 = sphi 0, %s168
    %s171 = sphi 0, %s170
    %s185 = sphi 0, %s171
    %s189 = sphi 0, %s189
    %s191 = sphi 0, %s189
    %s192 = sphi 0, %s191
    %s206 = sphi 0, %s192
    %s210 = sphi 0, %s210
    %s212 = sphi 0, %s210
    %s213 = sphi 0, %s212
    %s227 = sphi 0, %s213
    %s231 = sphi 0, %s231
    %s233 = sphi 0, %s231
    %s234 = sphi 0, %s233
    %s248 = sphi 0, %s234
    %s252 = sphi 0, %s252
    %s254 = sphi 0, %s252
    %s255 = sphi 0, %s254
    %s269 = sphi 0, %s255
    %s277 = sphi 0, %s279
    %s280 = sphi 0, %s277
    %s281 = sphi 0, %s280
    %s297 = sphi 0, %s281
  $region4: #{tpu_custom_call.1} parent=0 // loop_header_branch
    %20 = sbr.rel (%p18) target = $region8
  $region5: #{tpu_custom_call.1} parent=0 // loop_body
    %s22 = ssub.s32 %s17, 1
    %s23 = ssub.s32 %s17, 2
    %s30 = sadd.s32 1, %s25
    %p31 = scmp.ge.s32.totalorder %s30, 4
    %s32 = scalar_select %p31, 0, %s30
    %s33 = sadd.s32 1, %s24
    %s34 = scalar_select %p31, %s33, %s24
    %p35 = scmp.ge.s32.totalorder %s34, 2
    %s36 = scalar_select %p35, 0, %s34
    %s37 = ssub.s32 %s24, %s36
    %p38 = scmp.eq.s32.totalorder %s37, 0
    %s40 = sadd.s32 %s39, 1
    %s41 = scalar_select %p38, %s39, %s40
    %p44 = pneg %p38
    %p45 = scmp.eq.s32.totalorder %s17, 7
    %p46 = por %p44, %p45
    %p47 = scmp.ne.s32.totalorder %s39, %s42
    %p48 = scmp.eq.s32.totalorder %s17, 0
    %p49 = por %p47, %p48
    %p50 = scmp.ne.s32.totalorder %s39, %s42
    %p51 = scmp.eq.s32.totalorder %s22, 7
    %p52 = por %p50, %p51
    %p53 = scmp.ne.s32.totalorder %s42, %s43
    %p54 = scmp.eq.s32.totalorder %s22, 0
    %p55 = por %p53, %p54
    %p56 = scmp.ne.s32.totalorder %s42, %s43
    %p57 = scmp.eq.s32.totalorder %s23, 7
    %p58 = por %p56, %p57
    %p60 = scmp.ne.s32.totalorder %s43, %s59
    %p61 = scmp.eq.s32.totalorder %s23, 0
    %p62 = por %p60, %p61
    %s64 = sadd.s32 %s63, 1
    %p67 = scmp.eq.s32.totalorder %s17, 7
    %p68 = scmp.ne.s32.totalorder %s63, %s65
    %p69 = scmp.eq.s32.totalorder %s17, 0
    %p70 = por %p68, %p69
    %p71 = scmp.ne.s32.totalorder %s63, %s65
    %p72 = scmp.eq.s32.totalorder %s22, 7
    %p73 = por %p71, %p72
    %p74 = scmp.ne.s32.totalorder %s65, %s66
    %p75 = scmp.eq.s32.totalorder %s22, 0
    %p76 = por %p74, %p75
    %p77 = scmp.ne.s32.totalorder %s65, %s66
    %p78 = scmp.eq.s32.totalorder %s23, 7
    %p79 = por %p77, %p78
    %p81 = scmp.ne.s32.totalorder %s66, %s80
    %p82 = scmp.eq.s32.totalorder %s23, 0
    %p83 = por %p81, %p82
    %s85 = sadd.s32 %s84, 1
    %p88 = scmp.eq.s32.totalorder %s17, 7
    %p89 = scmp.ne.s32.totalorder %s84, %s86
    %p90 = scmp.eq.s32.totalorder %s17, 0
    %p91 = por %p89, %p90
    %p92 = scmp.ne.s32.totalorder %s84, %s86
    %p93 = scmp.eq.s32.totalorder %s22, 7
    %p94 = por %p92, %p93
    %p95 = scmp.ne.s32.totalorder %s86, %s87
    %p96 = scmp.eq.s32.totalorder %s22, 0
    %p97 = por %p95, %p96
    %p98 = scmp.ne.s32.totalorder %s86, %s87
    %p99 = scmp.eq.s32.totalorder %s23, 7
    %p100 = por %p98, %p99
    %p102 = scmp.ne.s32.totalorder %s87, %s101
    %p103 = scmp.eq.s32.totalorder %s23, 0
    %p104 = por %p102, %p103
    %s106 = sadd.s32 %s105, 1
    %p109 = scmp.eq.s32.totalorder %s17, 7
    %p110 = scmp.ne.s32.totalorder %s105, %s107
    %p111 = scmp.eq.s32.totalorder %s17, 0
    %p112 = por %p110, %p111
    %p113 = scmp.ne.s32.totalorder %s105, %s107
    %p114 = scmp.eq.s32.totalorder %s22, 7
    %p115 = por %p113, %p114
    %p116 = scmp.ne.s32.totalorder %s107, %s108
    %p117 = scmp.eq.s32.totalorder %s22, 0
    %p118 = por %p116, %p117
    %p119 = scmp.ne.s32.totalorder %s107, %s108
    %p120 = scmp.eq.s32.totalorder %s23, 7
    %p121 = por %p119, %p120
    %p123 = scmp.ne.s32.totalorder %s108, %s122
    %p124 = scmp.eq.s32.totalorder %s23, 0
    %p125 = por %p123, %p124
    %s127 = sadd.s32 %s126, 1
    %p130 = scmp.eq.s32.totalorder %s17, 7
    %p131 = scmp.ne.s32.totalorder %s126, %s128
    %p132 = scmp.eq.s32.totalorder %s17, 0
    %p133 = por %p131, %p132
    %p134 = scmp.ne.s32.totalorder %s126, %s128
    %p135 = scmp.eq.s32.totalorder %s22, 7
    %p136 = por %p134, %p135
    %p137 = scmp.ne.s32.totalorder %s128, %s129
    %p138 = scmp.eq.s32.totalorder %s22, 0
    %p139 = por %p137, %p138
    %p140 = scmp.ne.s32.totalorder %s128, %s129
    %p141 = scmp.eq.s32.totalorder %s23, 7
    %p142 = por %p140, %p141
    %p144 = scmp.ne.s32.totalorder %s129, %s143
    %p145 = scmp.eq.s32.totalorder %s23, 0
    %p146 = por %p144, %p145
    %s148 = sadd.s32 %s147, 1
    %p151 = scmp.eq.s32.totalorder %s17, 7
    %p152 = scmp.ne.s32.totalorder %s147, %s149
    %p153 = scmp.eq.s32.totalorder %s17, 0
    %p154 = por %p152, %p153
    %p155 = scmp.ne.s32.totalorder %s147, %s149
    %p156 = scmp.eq.s32.totalorder %s22, 7
    %p157 = por %p155, %p156
    %p158 = scmp.ne.s32.totalorder %s149, %s150
    %p159 = scmp.eq.s32.totalorder %s22, 0
    %p160 = por %p158, %p159
    %p161 = scmp.ne.s32.totalorder %s149, %s150
    %p162 = scmp.eq.s32.totalorder %s23, 7
    %p163 = por %p161, %p162
    %p165 = scmp.ne.s32.totalorder %s150, %s164
    %p166 = scmp.eq.s32.totalorder %s23, 0
    %p167 = por %p165, %p166
    %s169 = sadd.s32 %s168, 1
    %p172 = scmp.eq.s32.totalorder %s17, 7
    %p173 = scmp.ne.s32.totalorder %s168, %s170
    %p174 = scmp.eq.s32.totalorder %s17, 0
    %p175 = por %p173, %p174
    %p176 = scmp.ne.s32.totalorder %s168, %s170
    %p177 = scmp.eq.s32.totalorder %s22, 7
    %p178 = por %p176, %p177
    %p179 = scmp.ne.s32.totalorder %s170, %s171
    %p180 = scmp.eq.s32.totalorder %s22, 0
    %p181 = por %p179, %p180
    %p182 = scmp.ne.s32.totalorder %s170, %s171
    %p183 = scmp.eq.s32.totalorder %s23, 7
    %p184 = por %p182, %p183
    %p186 = scmp.ne.s32.totalorder %s171, %s185
    %p187 = scmp.eq.s32.totalorder %s23, 0
    %p188 = por %p186, %p187
    %s190 = sadd.s32 %s189, 1
    %p193 = scmp.eq.s32.totalorder %s17, 7
    %p194 = scmp.ne.s32.totalorder %s189, %s191
    %p195 = scmp.eq.s32.totalorder %s17, 0
    %p196 = por %p194, %p195
    %p197 = scmp.ne.s32.totalorder %s189, %s191
    %p198 = scmp.eq.s32.totalorder %s22, 7
    %p199 = por %p197, %p198
    %p200 = scmp.ne.s32.totalorder %s191, %s192
    %p201 = scmp.eq.s32.totalorder %s22, 0
    %p202 = por %p200, %p201
    %p203 = scmp.ne.s32.totalorder %s191, %s192
    %p204 = scmp.eq.s32.totalorder %s23, 7
    %p205 = por %p203, %p204
    %p207 = scmp.ne.s32.totalorder %s192, %s206
    %p208 = scmp.eq.s32.totalorder %s23, 0
    %p209 = por %p207, %p208
    %s211 = sadd.s32 %s210, 1
    %p214 = scmp.eq.s32.totalorder %s17, 7
    %p215 = scmp.ne.s32.totalorder %s210, %s212
    %p216 = scmp.eq.s32.totalorder %s17, 0
    %p217 = por %p215, %p216
    %p218 = scmp.ne.s32.totalorder %s210, %s212
    %p219 = scmp.eq.s32.totalorder %s22, 7
    %p220 = por %p218, %p219
    %p221 = scmp.ne.s32.totalorder %s212, %s213
    %p222 = scmp.eq.s32.totalorder %s22, 0
    %p223 = por %p221, %p222
    %p224 = scmp.ne.s32.totalorder %s212, %s213
    %p225 = scmp.eq.s32.totalorder %s23, 7
    %p226 = por %p224, %p225
    %p228 = scmp.ne.s32.totalorder %s213, %s227
    %p229 = scmp.eq.s32.totalorder %s23, 0
    %p230 = por %p228, %p229
    %s232 = sadd.s32 %s231, 1
    %p235 = scmp.eq.s32.totalorder %s17, 7
    %p236 = scmp.ne.s32.totalorder %s231, %s233
    %p237 = scmp.eq.s32.totalorder %s17, 0
    %p238 = por %p236, %p237
    %p239 = scmp.ne.s32.totalorder %s231, %s233
    %p240 = scmp.eq.s32.totalorder %s22, 7
    %p241 = por %p239, %p240
    %p242 = scmp.ne.s32.totalorder %s233, %s234
    %p243 = scmp.eq.s32.totalorder %s22, 0
    %p244 = por %p242, %p243
    %p245 = scmp.ne.s32.totalorder %s233, %s234
    %p246 = scmp.eq.s32.totalorder %s23, 7
    %p247 = por %p245, %p246
    %p249 = scmp.ne.s32.totalorder %s234, %s248
    %p250 = scmp.eq.s32.totalorder %s23, 0
    %p251 = por %p249, %p250
    %s253 = sadd.s32 %s252, 1
    %p256 = scmp.eq.s32.totalorder %s17, 7
    %p257 = scmp.ne.s32.totalorder %s252, %s254
    %p258 = scmp.eq.s32.totalorder %s17, 0
    %p259 = por %p257, %p258
    %p260 = scmp.ne.s32.totalorder %s252, %s254
    %p261 = scmp.eq.s32.totalorder %s22, 7
    %p262 = por %p260, %p261
    %p263 = scmp.ne.s32.totalorder %s254, %s255
    %p264 = scmp.eq.s32.totalorder %s22, 0
    %p265 = por %p263, %p264
    %p266 = scmp.ne.s32.totalorder %s254, %s255
    %p267 = scmp.eq.s32.totalorder %s23, 7
    %p268 = por %p266, %p267
    %p270 = scmp.ne.s32.totalorder %s255, %s269
    %p271 = scmp.eq.s32.totalorder %s23, 0
    %p272 = por %p270, %p271
    %s273 = ssub.s32 %s24, %s36
    %s274 = ssub.s32 %s25, %s32
    %s275 = sor.u32 %s273, %s274
    %p276 = scmp.eq.s32.totalorder %s275, 0
    %s278 = sadd.s32 %s277, 1
    %s279 = scalar_select %p276, %s277, %s278
    %p282 = pneg %p276
    %p283 = scmp.eq.s32.totalorder %s17, 7
    %p284 = por %p282, %p283
    %p285 = scmp.ne.s32.totalorder %s277, %s280
    %p286 = scmp.eq.s32.totalorder %s17, 0
    %p287 = por %p285, %p286
    %p288 = scmp.ne.s32.totalorder %s277, %s280
    %p289 = scmp.eq.s32.totalorder %s22, 7
    %p290 = por %p288, %p289
    %p291 = scmp.ne.s32.totalorder %s280, %s281
    %p292 = scmp.eq.s32.totalorder %s22, 0
    %p293 = por %p291, %p292
    %p294 = scmp.ne.s32.totalorder %s280, %s281
    %p295 = scmp.eq.s32.totalorder %s23, 7
    %p296 = por %p294, %p295
    %p298 = scmp.ne.s32.totalorder %s281, %s297
    %p299 = scmp.eq.s32.totalorder %s23, 0
    %p300 = por %p298, %p299
    %p301 = scmp.le.s32.totalorder 1, %s17
    %p302 = scmp.lt.s32.totalorder %s17, 9
    %p303 = pnand %p301, %p302
    %p304 = pneg %p303
    // Predicated region
    $region9: #{tpu_custom_call.1} parent=5 // pred_check
      _
    $region10: #{tpu_custom_call.1} parent=5 // pred_check_branch
      %306 = sbr.rel (%p303) target = $region12
    $region11: #{tpu_custom_call.1} parent=5 // pred_region
      %s307 = ssub.s32 %s17, 1
      // Predicated region
      $region13: #{tpu_custom_call.1} parent=11 // pred_check
        %p308 = pneg %p76
      $region14: #{tpu_custom_call.1} parent=11 // pred_check_branch
        %310 = sbr.rel (%p308) target = $region16
      $region15: #{tpu_custom_call.1} parent=11 // pred_region
        _
      $region16: #{tpu_custom_call.1} parent=11 // pred_fallthru
        _
      // Predicated region
      $region17: #{tpu_custom_call.1} parent=11 // pred_check
        %p311 = pneg %p97
      $region18: #{tpu_custom_call.1} parent=11 // pred_check_branch
        %313 = sbr.rel (%p311) target = $region20
      $region19: #{tpu_custom_call.1} parent=11 // pred_region
        _
      $region20: #{tpu_custom_call.1} parent=11 // pred_fallthru
        _
      // Predicated region
      $region21: #{tpu_custom_call.1} parent=11 // pred_check
        %p314 = pneg %p118
      $region22: #{tpu_custom_call.1} parent=11 // pred_check_branch
        %316 = sbr.rel (%p314) target = $region24
      $region23: #{tpu_custom_call.1} parent=11 // pred_region
        _
      $region24: #{tpu_custom_call.1} parent=11 // pred_fallthru
        _
      // Predicated region
      $region25: #{tpu_custom_call.1} parent=11 // pred_check
        %p317 = pneg %p139
      $region26: #{tpu_custom_call.1} parent=11 // pred_check_branch
        %319 = sbr.rel (%p317) target = $region28
      $region27: #{tpu_custom_call.1} parent=11 // pred_region
        _
      $region28: #{tpu_custom_call.1} parent=11 // pred_fallthru
        _
      // Predicated region
      $region29: #{tpu_custom_call.1} parent=11 // pred_check
        %p320 = pneg %p160
      $region30: #{tpu_custom_call.1} parent=11 // pred_check_branch
        %322 = sbr.rel (%p320) target = $region32
      $region31: #{tpu_custom_call.1} parent=11 // pred_region
        _
      $region32: #{tpu_custom_call.1} parent=11 // pred_fallthru
        _
      // Predicated region
      $region33: #{tpu_custom_call.1} parent=11 // pred_check
        %p323 = pneg %p181
      $region34: #{tpu_custom_call.1} parent=11 // pred_check_branch
        %325 = sbr.rel (%p323) target = $region36
      $region35: #{tpu_custom_call.1} parent=11 // pred_region
        _
      $region36: #{tpu_custom_call.1} parent=11 // pred_fallthru
        _
      // Predicated region
      $region37: #{tpu_custom_call.1} parent=11 // pred_check
        %p326 = pneg %p202
      $region38: #{tpu_custom_call.1} parent=11 // pred_check_branch
        %328 = sbr.rel (%p326) target = $region40
      $region39: #{tpu_custom_call.1} parent=11 // pred_region
        _
      $region40: #{tpu_custom_call.1} parent=11 // pred_fallthru
        _
      // Predicated region
      $region41: #{tpu_custom_call.1} parent=11 // pred_check
        %p329 = pneg %p223
      $region42: #{tpu_custom_call.1} parent=11 // pred_check_branch
        %331 = sbr.rel (%p329) target = $region44
      $region43: #{tpu_custom_call.1} parent=11 // pred_region
        _
      $region44: #{tpu_custom_call.1} parent=11 // pred_fallthru
        _
      // Predicated region
      $region45: #{tpu_custom_call.1} parent=11 // pred_check
        %p332 = pneg %p244
      $region46: #{tpu_custom_call.1} parent=11 // pred_check_branch
        %334 = sbr.rel (%p332) target = $region48
      $region47: #{tpu_custom_call.1} parent=11 // pred_region
        _
      $region48: #{tpu_custom_call.1} parent=11 // pred_fallthru
        _
      // Predicated region
      $region49: #{tpu_custom_call.1} parent=11 // pred_check
        %p335 = pneg %p265
      $region50: #{tpu_custom_call.1} parent=11 // pred_check_branch
        %337 = sbr.rel (%p335) target = $region52
      $region51: #{tpu_custom_call.1} parent=11 // pred_region
        _
      $region52: #{tpu_custom_call.1} parent=11 // pred_fallthru
        _
    $region12: #{tpu_custom_call.1} parent=5 // pred_fallthru
      _
    %p338 = scmp.lt.s32.totalorder %s17, 8
    // Predicated region
    $region53: #{tpu_custom_call.1} parent=5 // pred_check
      %p339 = pneg %p338
    $region54: #{tpu_custom_call.1} parent=5 // pred_check_branch
      %341 = sbr.rel (%p339) target = $region56
    $region55: #{tpu_custom_call.1} parent=5 // pred_region
      // Predicated region
      $region57: #{tpu_custom_call.1} parent=55 // pred_check
        %p342 = pneg %p49
      $region58: #{tpu_custom_call.1} parent=55 // pred_check_branch
        %344 = sbr.rel (%p342) target = $region60
      $region59: #{tpu_custom_call.1} parent=55 // pred_region
        %p345 = scmp.lt.s32.totalorder %s24, 1
        %s346 = scalar_select %p345, %s24, 1
        %s347 = smul.addr %s346, 32
        %s348 = smul.addr %s347, 8
        %s349 = scalar_lea.vmem %s0, %s348
      $region60: #{tpu_custom_call.1} parent=55 // pred_fallthru
        _
    $region56: #{tpu_custom_call.1} parent=5 // pred_fallthru
      _
    %p350 = scmp.le.s32.totalorder 1, %s17
    %p351 = scmp.lt.s32.totalorder %s17, 9
    %p352 = pnand %p350, %p351
    %p353 = pneg %p352
    // Predicated region
    $region61: #{tpu_custom_call.1} parent=5 // pred_check
      _
    $region62: #{tpu_custom_call.1} parent=5 // pred_check_branch
      %355 = sbr.rel (%p352) target = $region64
    $region63: #{tpu_custom_call.1} parent=5 // pred_region
      %s356 = ssub.s32 %s17, 1
      %p357 = scmp.lt.s32.totalorder %s26, 1
      %s358 = scalar_select %p357, %s26, 1
      %s359 = smul.addr %s358, 32
      %s360 = smul.addr %s359, 8
      %s361 = scalar_lea.vmem %s0, %s360
      %p362 = pneg %p55
      %p363 = pneg %p52
      %p364 = pneg %p76
      %p365 = pneg %p73
      %p366 = pneg %p97
      %p367 = pneg %p94
      %p368 = pneg %p118
      %p369 = pneg %p115
      %p370 = pneg %p139
      %p371 = pneg %p136
      %p372 = pneg %p160
      %p373 = pneg %p157
      %p374 = pneg %p181
      %p375 = pneg %p178
      %p376 = pneg %p202
      %p377 = pneg %p199
      %p378 = pneg %p223
      %p379 = pneg %p220
      %p380 = pneg %p244
      %p381 = pneg %p241
      %p382 = pneg %p265
      %p383 = pneg %p262
      %p384 = pneg %p293
      %p385 = pneg %p290
      %s386 = smul.u32 8, %s27
      %p387 = scmp.lt.s32.totalorder %s26, 1
      %s388 = scalar_select %p387, %s26, 1
      %p389 = scmp.lt.s32.totalorder %s386, 31
      %s390 = scalar_select %p389, %s386, 31
      %s391 = smul.addr %s388, 32
      %s392 = sadd.s32 %s390, %s391
      %s393 = smul.addr %s392, 8
      %s394 = scalar_lea.vmem %s11, %s393
      %p395 = scmp.lt.s32.totalorder %s26, 1
      %s396 = scalar_select %p395, %s26, 1
      %s397 = smul.addr %s396, 32
      %s398 = smul.addr %s397, 8
      %s399 = scalar_lea.vmem %s0, %s398
      %s400 = smul.u32 8, %s27
      %p401 = scmp.lt.s32.totalorder %s26, 1
      %s402 = scalar_select %p401, %s26, 1
      %p403 = scmp.lt.s32.totalorder %s400, 31
      %s404 = scalar_select %p403, %s400, 31
      %s405 = smul.addr %s402, 32
      %s406 = sadd.s32 %s404, %s405
      %s407 = smul.addr %s406, 8
      %s408 = scalar_lea.vmem %s11, %s407
      %s409 = smul.u32 8, %s27
      %p410 = scmp.eq.s32.totalorder %s27, 0
      // Predicated region
      $region65: #{tpu_custom_call.1} parent=63 // pred_check
        %p411 = pneg %p410
      $region66: #{tpu_custom_call.1} parent=63 // pred_check_branch
        %413 = sbr.rel (%p411) target = $region68
      $region67: #{tpu_custom_call.1} parent=63 // pred_region
        %v414 = vld [vmem:[%s399] sm:$0xff]
        %v415 = vld [vmem:[%s399 + $0x8] sm:$0xff]
        %v416 = vld [vmem:[%s399 + $0x10] sm:$0xff]
        %v417 = vld [vmem:[%s399 + $0x18] sm:$0xff]
        %v418 = vld [vmem:[%s399 + $0x20] sm:$0xff]
        %v419 = vld [vmem:[%s399 + $0x28] sm:$0xff]
        %v420 = vld [vmem:[%s399 + $0x30] sm:$0xff]
        %v421 = vld [vmem:[%s399 + $0x38] sm:$0xff]
        %v422 = vld [vmem:[%s399 + $0x40] sm:$0xff]
        %v423 = vld [vmem:[%s399 + $0x48] sm:$0xff]
        %v424 = vld [vmem:[%s399 + $0x50] sm:$0xff]
        %v425 = vld [vmem:[%s399 + $0x58] sm:$0xff]
        %v426 = vld [vmem:[%s399 + $0x60] sm:$0xff]
        %v427 = vld [vmem:[%s399 + $0x68] sm:$0xff]
        %v428 = vld [vmem:[%s399 + $0x70] sm:$0xff]
        %v429 = vld [vmem:[%s399 + $0x78] sm:$0xff]
        %v430 = vld [vmem:[%s399 + $0x80] sm:$0xff]
        %v431 = vld [vmem:[%s399 + $0x88] sm:$0xff]
        %v432 = vld [vmem:[%s399 + $0x90] sm:$0xff]
        %v433 = vld [vmem:[%s399 + $0x98] sm:$0xff]
        %v434 = vld [vmem:[%s399 + $0xa0] sm:$0xff]
        %v435 = vld [vmem:[%s399 + $0xa8] sm:$0xff]
        %v436 = vld [vmem:[%s399 + $0xb0] sm:$0xff]
        %v437 = vld [vmem:[%s399 + $0xb8] sm:$0xff]
        %v438 = vld [vmem:[%s399 + $0xc0] sm:$0xff]
        %v439 = vld [vmem:[%s399 + $0xc8] sm:$0xff]
        %v440 = vld [vmem:[%s399 + $0xd0] sm:$0xff]
        %v441 = vld [vmem:[%s399 + $0xd8] sm:$0xff]
        %v442 = vld [vmem:[%s399 + $0xe0] sm:$0xff]
        %v443 = vld [vmem:[%s399 + $0xe8] sm:$0xff]
        %v444 = vld [vmem:[%s399 + $0xf0] sm:$0xff]
        %v445 = vld [vmem:[%s399 + $0xf8] sm:$0xff]
        %vm446 = vcmask 31744
        %v447 = vsel %vm446, %v414, 0.0
        %v448 = vsel %vm446, %v415, 0.0
        %v449 = vadd.f32 %v447, %v448
        %v450 = vsel %vm446, %v416, 0.0
        %v451 = vadd.f32 %v449, %v450
        %v452 = vsel %vm446, %v417, 0.0
        %v453 = vadd.f32 %v451, %v452
        %v454 = vsel %vm446, %v418, 0.0
        %v455 = vadd.f32 %v453, %v454
        %v456 = vsel %vm446, %v419, 0.0
        %v457 = vadd.f32 %v455, %v456
        %v458 = vsel %vm446, %v420, 0.0
        %v459 = vadd.f32 %v457, %v458
        %v460 = vsel %vm446, %v421, 0.0
        %v461 = vadd.f32 %v459, %v460
        %v462 = vsel %vm446, %v422, 0.0
        %v463 = vadd.f32 %v461, %v462
        %v464 = vsel %vm446, %v423, 0.0
        %v465 = vadd.f32 %v463, %v464
        %v466 = vsel %vm446, %v424, 0.0
        %v467 = vadd.f32 %v465, %v466
        %v468 = vsel %vm446, %v425, 0.0
        %v469 = vadd.f32 %v467, %v468
        %v470 = vsel %vm446, %v426, 0.0
        %v471 = vadd.f32 %v469, %v470
        %v472 = vsel %vm446, %v427, 0.0
        %v473 = vadd.f32 %v471, %v472
        %v474 = vsel %vm446, %v428, 0.0
        %v475 = vadd.f32 %v473, %v474
        %v476 = vsel %vm446, %v429, 0.0
        %v477 = vadd.f32 %v475, %v476
        %v478 = vsel %vm446, %v430, 0.0
        %v479 = vadd.f32 %v477, %v478
        %v480 = vsel %vm446, %v431, 0.0
        %v481 = vadd.f32 %v479, %v480
        %v482 = vsel %vm446, %v432, 0.0
        %v483 = vadd.f32 %v481, %v482
        %v484 = vsel %vm446, %v433, 0.0
        %v485 = vadd.f32 %v483, %v484
        %v486 = vsel %vm446, %v434, 0.0
        %v487 = vadd.f32 %v485, %v486
        %v488 = vsel %vm446, %v435, 0.0
        %v489 = vadd.f32 %v487, %v488
        %v490 = vsel %vm446, %v436, 0.0
        %v491 = vadd.f32 %v489, %v490
        %v492 = vsel %vm446, %v437, 0.0
        %v493 = vadd.f32 %v491, %v492
        %v494 = vsel %vm446, %v438, 0.0
        %v495 = vadd.f32 %v493, %v494
        %v496 = vsel %vm446, %v439, 0.0
        %v497 = vadd.f32 %v495, %v496
        %v498 = vsel %vm446, %v440, 0.0
        %v499 = vadd.f32 %v497, %v498
        %v500 = vsel %vm446, %v441, 0.0
        %v501 = vadd.f32 %v499, %v500
        %v502 = vsel %vm446, %v442, 0.0
        %v503 = vadd.f32 %v501, %v502
        %v504 = vsel %vm446, %v443, 0.0
        %v505 = vadd.f32 %v503, %v504
        %v506 = vsel %vm446, %v444, 0.0
        %v507 = vadd.f32 %v505, %v506
        %v508 = vsel %vm446, %v445, 0.0
        %v509 = vadd.f32 %v507, %v508
        %v510 = vrot.slane %v509, 4
        %v511 = vadd.f32 %v509, %v510
        %v512 = vrot.slane %v511, 2
        %v513 = vadd.f32 %v511, %v512
        %v514 = vrot.slane %v513, 1
        %v515 = vadd.f32 %v513, %v514
        %v516 = vadd.f32 %v515, 0.0
        %v517 = vsel %vm446, %v516, 0.0
        %518 = vadd.xlane.f32.xlu0 %v517
        %v519 = vpop.xlane.xlu0 %518
        %v520 = vrcp.pop 1024.0
        %v521 = vmul.f32 %v519, %v520
        %v522 = vsub.f32 %v414, %v521
        %v523 = vsub.f32 %v415, %v521
        %v524 = vsub.f32 %v416, %v521
        %v525 = vsub.f32 %v417, %v521
        %v526 = vsub.f32 %v418, %v521
        %v527 = vsub.f32 %v419, %v521
        %v528 = vsub.f32 %v420, %v521
        %v529 = vsub.f32 %v421, %v521
        %v530 = vsub.f32 %v422, %v521
        %v531 = vsub.f32 %v423, %v521
        %v532 = vsub.f32 %v424, %v521
        %v533 = vsub.f32 %v425, %v521
        %v534 = vsub.f32 %v426, %v521
        %v535 = vsub.f32 %v427, %v521
        %v536 = vsub.f32 %v428, %v521
        %v537 = vsub.f32 %v429, %v521
        %v538 = vsub.f32 %v430, %v521
        %v539 = vsub.f32 %v431, %v521
        %v540 = vsub.f32 %v432, %v521
        %v541 = vsub.f32 %v433, %v521
        %v542 = vsub.f32 %v434, %v521
        %v543 = vsub.f32 %v435, %v521
        %v544 = vsub.f32 %v436, %v521
        %v545 = vsub.f32 %v437, %v521
        %v546 = vsub.f32 %v438, %v521
        %v547 = vsub.f32 %v439, %v521
        %v548 = vsub.f32 %v440, %v521
        %v549 = vsub.f32 %v441, %v521
        %v550 = vsub.f32 %v442, %v521
        %v551 = vsub.f32 %v443, %v521
        %v552 = vsub.f32 %v444, %v521
        %v553 = vsub.f32 %v445, %v521
        %v554 = vmul.f32 %v522, %v522
        %v555 = vmul.f32 %v523, %v523
        %v556 = vmul.f32 %v524, %v524
        %v557 = vmul.f32 %v525, %v525
        %v558 = vmul.f32 %v526, %v526
        %v559 = vmul.f32 %v527, %v527
        %v560 = vmul.f32 %v528, %v528
        %v561 = vmul.f32 %v529, %v529
        %v562 = vmul.f32 %v530, %v530
        %v563 = vmul.f32 %v531, %v531
        %v564 = vmul.f32 %v532, %v532
        %v565 = vmul.f32 %v533, %v533
        %v566 = vmul.f32 %v534, %v534
        %v567 = vmul.f32 %v535, %v535
        %v568 = vmul.f32 %v536, %v536
        %v569 = vmul.f32 %v537, %v537
        %v570 = vmul.f32 %v538, %v538
        %v571 = vmul.f32 %v539, %v539
        %v572 = vmul.f32 %v540, %v540
        %v573 = vmul.f32 %v541, %v541
        %v574 = vmul.f32 %v542, %v542
        %v575 = vmul.f32 %v543, %v543
        %v576 = vmul.f32 %v544, %v544
        %v577 = vmul.f32 %v545, %v545
        %v578 = vmul.f32 %v546, %v546
        %v579 = vmul.f32 %v547, %v547
        %v580 = vmul.f32 %v548, %v548
        %v581 = vmul.f32 %v549, %v549
        %v582 = vmul.f32 %v550, %v550
        %v583 = vmul.f32 %v551, %v551
        %v584 = vmul.f32 %v552, %v552
        %v585 = vmul.f32 %v553, %v553
        %v586 = vsel %vm446, %v554, 0.0
        %v587 = vsel %vm446, %v555, 0.0
        %v588 = vadd.f32 %v586, %v587
        %v589 = vsel %vm446, %v556, 0.0
        %v590 = vadd.f32 %v588, %v589
        %v591 = vsel %vm446, %v557, 0.0
        %v592 = vadd.f32 %v590, %v591
        %v593 = vsel %vm446, %v558, 0.0
        %v594 = vadd.f32 %v592, %v593
        %v595 = vsel %vm446, %v559, 0.0
        %v596 = vadd.f32 %v594, %v595
        %v597 = vsel %vm446, %v560, 0.0
        %v598 = vadd.f32 %v596, %v597
        %v599 = vsel %vm446, %v561, 0.0
        %v600 = vadd.f32 %v598, %v599
        %v601 = vsel %vm446, %v562, 0.0
        %v602 = vadd.f32 %v600, %v601
        %v603 = vsel %vm446, %v563, 0.0
        %v604 = vadd.f32 %v602, %v603
        %v605 = vsel %vm446, %v564, 0.0
        %v606 = vadd.f32 %v604, %v605
        %v607 = vsel %vm446, %v565, 0.0
        %v608 = vadd.f32 %v606, %v607
        %v609 = vsel %vm446, %v566, 0.0
        %v610 = vadd.f32 %v608, %v609
        %v611 = vsel %vm446, %v567, 0.0
        %v612 = vadd.f32 %v610, %v611
        %v613 = vsel %vm446, %v568, 0.0
        %v614 = vadd.f32 %v612, %v613
        %v615 = vsel %vm446, %v569, 0.0
        %v616 = vadd.f32 %v614, %v615
        %v617 = vsel %vm446, %v570, 0.0
        %v618 = vadd.f32 %v616, %v617
        %v619 = vsel %vm446, %v571, 0.0
        %v620 = vadd.f32 %v618, %v619
        %v621 = vsel %vm446, %v572, 0.0
        %v622 = vadd.f32 %v620, %v621
        %v623 = vsel %vm446, %v573, 0.0
        %v624 = vadd.f32 %v622, %v623
        %v625 = vsel %vm446, %v574, 0.0
        %v626 = vadd.f32 %v624, %v625
        %v627 = vsel %vm446, %v575, 0.0
        %v628 = vadd.f32 %v626, %v627
        %v629 = vsel %vm446, %v576, 0.0
        %v630 = vadd.f32 %v628, %v629
        %v631 = vsel %vm446, %v577, 0.0
        %v632 = vadd.f32 %v630, %v631
        %v633 = vsel %vm446, %v578, 0.0
        %v634 = vadd.f32 %v632, %v633
        %v635 = vsel %vm446, %v579, 0.0
        %v636 = vadd.f32 %v634, %v635
        %v637 = vsel %vm446, %v580, 0.0
        %v638 = vadd.f32 %v636, %v637
        %v639 = vsel %vm446, %v581, 0.0
        %v640 = vadd.f32 %v638, %v639
        %v641 = vsel %vm446, %v582, 0.0
        %v642 = vadd.f32 %v640, %v641
        %v643 = vsel %vm446, %v583, 0.0
        %v644 = vadd.f32 %v642, %v643
        %v645 = vsel %vm446, %v584, 0.0
        %v646 = vadd.f32 %v644, %v645
        %v647 = vsel %vm446, %v585, 0.0
        %v648 = vadd.f32 %v646, %v647
        %v649 = vrot.slane %v648, 4
        %v650 = vadd.f32 %v648, %v649
        %v651 = vrot.slane %v650, 2
        %v652 = vadd.f32 %v650, %v651
        %v653 = vrot.slane %v652, 1
        %v654 = vadd.f32 %v652, %v653
        %v655 = vadd.f32 %v654, 0.0
        %v656 = vsel %vm446, %v655, 0.0
        %657 = vadd.xlane.f32.xlu0 %v656
        %v658 = vpop.xlane.xlu0 %657
        %v659 = vmul.f32 %v658, %v520
        %v660 = vld [vmem:[%s1] sm:$0x1]
        %v661 = vadd.f32 %v659, 1e-06
        %v662 = vrsqrt.pop %v661
        %v663 = vmul.f32 %v660, %v662
        %v664 = vld [vmem:[%s2] sm:$0x1]
        %v665 = vmul.f32 %v521, %v663
        %v666 = vsub.f32 %v664, %v665
        %vm667 = vcmask 24576
        %668 = vst.msk [vmem:[#allocation4] sm:$0x1] %vm667, %v663
        %669 = vst.msk [vmem:[#allocation5] sm:$0x1] %vm667, %v666
        %v670 = vld [vmem:[%s399] sm:$0xff]
        %v671 = vld [vmem:[%s399 + $0x8] sm:$0xff]
        %v672 = vld [vmem:[%s399 + $0x10] sm:$0xff]
        %v673 = vld [vmem:[%s399 + $0x18] sm:$0xff]
        %v674 = vld [vmem:[%s399 + $0x20] sm:$0xff]
        %v675 = vld [vmem:[%s399 + $0x28] sm:$0xff]
        %v676 = vld [vmem:[%s399 + $0x30] sm:$0xff]
        %v677 = vld [vmem:[%s399 + $0x38] sm:$0xff]
        %v678 = vld [vmem:[%s399 + $0x40] sm:$0xff]
        %v679 = vld [vmem:[%s399 + $0x48] sm:$0xff]
        %v680 = vld [vmem:[%s399 + $0x50] sm:$0xff]
        %v681 = vld [vmem:[%s399 + $0x58] sm:$0xff]
        %v682 = vld [vmem:[%s399 + $0x60] sm:$0xff]
        %v683 = vld [vmem:[%s399 + $0x68] sm:$0xff]
        %v684 = vld [vmem:[%s399 + $0x70] sm:$0xff]
        %v685 = vld [vmem:[%s399 + $0x78] sm:$0xff]
        %v686 = vld [vmem:[%s399 + $0x80] sm:$0xff]
        %v687 = vld [vmem:[%s399 + $0x88] sm:$0xff]
        %v688 = vld [vmem:[%s399 + $0x90] sm:$0xff]
        %v689 = vld [vmem:[%s399 + $0x98] sm:$0xff]
        %v690 = vld [vmem:[%s399 + $0xa0] sm:$0xff]
        %v691 = vld [vmem:[%s399 + $0xa8] sm:$0xff]
        %v692 = vld [vmem:[%s399 + $0xb0] sm:$0xff]
        %v693 = vld [vmem:[%s399 + $0xb8] sm:$0xff]
        %v694 = vld [vmem:[%s399 + $0xc0] sm:$0xff]
        %v695 = vld [vmem:[%s399 + $0xc8] sm:$0xff]
        %v696 = vld [vmem:[%s399 + $0xd0] sm:$0xff]
        %v697 = vld [vmem:[%s399 + $0xd8] sm:$0xff]
        %v698 = vld [vmem:[%s399 + $0xe0] sm:$0xff]
        %v699 = vld [vmem:[%s399 + $0xe8] sm:$0xff]
        %v700 = vld [vmem:[%s399 + $0xf0] sm:$0xff]
        %v701 = vld [vmem:[%s399 + $0xf8] sm:$0xff]
        %v703 = vlaneseq
        %v704 = vshrl.u32 %v703, 7
        %v705 = vsub.s32 0, %v704
        %v706 = vrot.slane %v663, %v705
        %v708 = vmul.f32 %v670, %v706
        %v709 = vmul.f32 %v671, %v706
        %v710 = vmul.f32 %v672, %v706
        %v711 = vmul.f32 %v673, %v706
        %v712 = vmul.f32 %v674, %v706
        %v713 = vmul.f32 %v675, %v706
        %v714 = vmul.f32 %v676, %v706
        %v715 = vmul.f32 %v677, %v706
        %v716 = vmul.f32 %v678, %v706
        %v717 = vmul.f32 %v679, %v706
        %v718 = vmul.f32 %v680, %v706
        %v719 = vmul.f32 %v681, %v706
        %v720 = vmul.f32 %v682, %v706
        %v721 = vmul.f32 %v683, %v706
        %v722 = vmul.f32 %v684, %v706
        %v723 = vmul.f32 %v685, %v706
        %v724 = vmul.f32 %v686, %v706
        %v725 = vmul.f32 %v687, %v706
        %v726 = vmul.f32 %v688, %v706
        %v727 = vmul.f32 %v689, %v706
        %v728 = vmul.f32 %v690, %v706
        %v729 = vmul.f32 %v691, %v706
        %v730 = vmul.f32 %v692, %v706
        %v731 = vmul.f32 %v693, %v706
        %v732 = vmul.f32 %v694, %v706
        %v733 = vmul.f32 %v695, %v706
        %v734 = vmul.f32 %v696, %v706
        %v735 = vmul.f32 %v697, %v706
        %v736 = vmul.f32 %v698, %v706
        %v737 = vmul.f32 %v699, %v706
        %v738 = vmul.f32 %v700, %v706
        %v739 = vmul.f32 %v701, %v706
        %v741 = vlaneseq
        %v742 = vshrl.u32 %v741, 7
        %v743 = vsub.s32 0, %v742
        %v744 = vrot.slane %v666, %v743
        %v746 = vadd.f32 %v708, %v744
        %v747 = vadd.f32 %v709, %v744
        %v748 = vadd.f32 %v710, %v744
        %v749 = vadd.f32 %v711, %v744
        %v750 = vadd.f32 %v712, %v744
        %v751 = vadd.f32 %v713, %v744
        %v752 = vadd.f32 %v714, %v744
        %v753 = vadd.f32 %v715, %v744
        %v754 = vadd.f32 %v716, %v744
        %v755 = vadd.f32 %v717, %v744
        %v756 = vadd.f32 %v718, %v744
        %v757 = vadd.f32 %v719, %v744
        %v758 = vadd.f32 %v720, %v744
        %v759 = vadd.f32 %v721, %v744
        %v760 = vadd.f32 %v722, %v744
        %v761 = vadd.f32 %v723, %v744
        %v762 = vadd.f32 %v724, %v744
        %v763 = vadd.f32 %v725, %v744
        %v764 = vadd.f32 %v726, %v744
        %v765 = vadd.f32 %v727, %v744
        %v766 = vadd.f32 %v728, %v744
        %v767 = vadd.f32 %v729, %v744
        %v768 = vadd.f32 %v730, %v744
        %v769 = vadd.f32 %v731, %v744
        %v770 = vadd.f32 %v732, %v744
        %v771 = vadd.f32 %v733, %v744
        %v772 = vadd.f32 %v734, %v744
        %v773 = vadd.f32 %v735, %v744
        %v774 = vadd.f32 %v736, %v744
        %v775 = vadd.f32 %v737, %v744
        %v776 = vadd.f32 %v738, %v744
        %v777 = vadd.f32 %v739, %v744
        %v778 = vld [vmem:[%s5] sm:$0xf]
        %v779 = vld [vmem:[%s6] sm:$0x1]
        %v781 = vlaneseq
        %v782 = vshrl.u32 %v781, 7
        %v783 = vsub.s32 0, %v782
        %v784 = vrot.slane %v779, %v783
        %v787 = vsel %vm446, %v746, 0
        %v790 = vsel %vm446, %v747, 0
        %v793 = vsel %vm446, %v748, 0
        %v796 = vsel %vm446, %v749, 0
        %v799 = vsel %vm446, %v750, 0
        %v802 = vsel %vm446, %v751, 0
        %v805 = vsel %vm446, %v752, 0
        %v808 = vsel %vm446, %v753, 0
        %v811 = vsel %vm446, %v754, 0
        %v814 = vsel %vm446, %v755, 0
        %v817 = vsel %vm446, %v756, 0
        %v820 = vsel %vm446, %v757, 0
        %v823 = vsel %vm446, %v758, 0
        %v826 = vsel %vm446, %v759, 0
        %v829 = vsel %vm446, %v760, 0
        %v832 = vsel %vm446, %v761, 0
        %v835 = vsel %vm446, %v762, 0
        %v838 = vsel %vm446, %v763, 0
        %v841 = vsel %vm446, %v764, 0
        %v844 = vsel %vm446, %v765, 0
        %v847 = vsel %vm446, %v766, 0
        %v850 = vsel %vm446, %v767, 0
        %v853 = vsel %vm446, %v768, 0
        %v856 = vsel %vm446, %v769, 0
        %v859 = vsel %vm446, %v770, 0
        %v862 = vsel %vm446, %v771, 0
        %v865 = vsel %vm446, %v772, 0
        %v868 = vsel %vm446, %v773, 0
        %v871 = vsel %vm446, %v774, 0
        %v874 = vsel %vm446, %v775, 0
        %v877 = vsel %vm446, %v776, 0
        %v880 = vsel %vm446, %v777, 0
        %vm882 = vcmask 1043456
        %v884 = vsel %vm882, %v778, 0
        %886 = vmatprep.subr.mxu0 0.0
        %887 = vmatpush1.msra.mxu0 %v884
        %888 = vmatprep.subr.mxu0 0.0
        %889 = vmatpush1.msra.mxu0 0.0
        %890 = vmatprep.subr.mxu0 0.0
        %891 = vmatpush1.msra.mxu0 0.0
        %892 = vmatprep.subr.mxu0 0.0
        %893 = vmatpush1.msra.mxu0 0.0
        %894 = vmatprep.subr.mxu0 0.0
        %895 = vmatpush1.msra.mxu0 0.0
        %896 = vmatprep.subr.mxu0 0.0
        %897 = vmatpush1.msra.mxu0 0.0
        %898 = vmatprep.subr.mxu0 0.0
        %899 = vmatpush1.msra.mxu0 0.0
        %900 = vmatprep.subr.mxu0 0.0
        %901 = vmatpush1.msra.mxu0 0.0
        %902 = vmatprep.subr.mxu0 0.0
        %903 = vmatpush1.msra.mxu0 0.0
        %904 = vmatprep.subr.mxu0 0.0
        %905 = vmatpush1.msra.mxu0 0.0
        %906 = vmatprep.subr.mxu0 0.0
        %907 = vmatpush1.msra.mxu0 0.0
        %908 = vmatprep.subr.mxu0 0.0
        %909 = vmatpush1.msra.mxu0 0.0
        %910 = vmatprep.subr.mxu0 0.0
        %911 = vmatpush1.msra.mxu0 0.0
        %912 = vmatprep.subr.mxu0 0.0
        %913 = vmatpush1.msra.mxu0 0.0
        %914 = vmatprep.subr.mxu0 0.0
        %915 = vmatpush1.msra.mxu0 0.0
        %916 = vmatprep.subr.mxu0 0.0
        %917 = vmatpush1.msra.mxu0 0.0
        %918 = vmatprep.subr.mxu0 0.0
        %919 = vmatpush1.msra.mxu0 0.0
        %920 = vmatprep.subr.mxu0 0.0
        %921 = vmatpush1.msra.mxu0 0.0
        %922 = vmatprep.subr.mxu0 0.0
        %923 = vmatpush1.msra.mxu0 0.0
        %924 = vmatprep.subr.mxu0 0.0
        %925 = vmatpush1.msra.mxu0 0.0
        %926 = vmatprep.subr.mxu0 0.0
        %927 = vmatpush1.msra.mxu0 0.0
        %928 = vmatprep.subr.mxu0 0.0
        %929 = vmatpush1.msra.mxu0 0.0
        %930 = vmatprep.subr.mxu0 0.0
        %931 = vmatpush1.msra.mxu0 0.0
        %932 = vmatprep.subr.mxu0 0.0
        %933 = vmatpush1.msra.mxu0 0.0
        %934 = vmatprep.subr.mxu0 0.0
        %935 = vmatpush1.msra.mxu0 0.0
        %936 = vmatprep.subr.mxu0 0.0
        %937 = vmatpush1.msra.mxu0 0.0
        %938 = vmatprep.subr.mxu0 0.0
        %939 = vmatpush1.msra.mxu0 0.0
        %940 = vmatprep.subr.mxu0 0.0
        %941 = vmatpush1.msra.mxu0 0.0
        %942 = vmatprep.subr.mxu0 0.0
        %943 = vmatpush1.msra.mxu0 0.0
        %944 = vmatprep.subr.mxu0 0.0
        %945 = vmatpush1.msra.mxu0 0.0
        %946 = vmatprep.subr.mxu0 0.0
        %947 = vmatpush1.msra.mxu0 0.0
        %948 = vmatprep.subr.mxu0 0.0
        %949 = vmatpush1.msra.mxu0 0.0
        %950 = vmatprep.mubr.f32.mxu0 0.0
        %951 = vmatmul.mubr.f32.gmra.mrb[0].mxu0 %v787
        %v952 = vpop.f32.mrb[0].mxu0
        %v953 = vadd.f32 %v784, %v952
        %v954 = vpop.f32.mrb[0].mxu0
        %955 = vmatprep.mubr.f32.mxu0 0.0
        %956 = vmatmul.mubr.f32.gmra.mrb[0].mxu0 %v790
        %v957 = vpop.f32.mrb[0].mxu0
        %v958 = vadd.f32 %v784, %v957
        %v959 = vpop.f32.mrb[0].mxu0
        %960 = vmatprep.mubr.f32.mxu0 0.0
        %961 = vmatmul.mubr.f32.gmra.mrb[0].mxu0 %v793
        %v962 = vpop.f32.mrb[0].mxu0
        %v963 = vadd.f32 %v784, %v962
        %v964 = vpop.f32.mrb[0].mxu0
        %965 = vmatprep.mubr.f32.mxu0 0.0
        %966 = vmatmul.mubr.f32.gmra.mrb[0].mxu0 %v796
        %v967 = vpop.f32.mrb[0].mxu0
        %v968 = vadd.f32 %v784, %v967
        %v969 = vpop.f32.mrb[0].mxu0
        %970 = vmatprep.mubr.f32.mxu0 0.0
        %971 = vmatmul.mubr.f32.gmra.mrb[0].mxu0 %v799
        %v972 = vpop.f32.mrb[0].mxu0
        %v973 = vadd.f32 %v784, %v972
        %v974 = vpop.f32.mrb[0].mxu0
        %975 = vmatprep.mubr.f32.mxu0 0.0
        %976 = vmatmul.mubr.f32.gmra.mrb[0].mxu0 %v802
        %v977 = vpop.f32.mrb[0].mxu0
        %v978 = vadd.f32 %v784, %v977
        %v979 = vpop.f32.mrb[0].mxu0
        %980 = vmatprep.mubr.f32.mxu0 0.0
        %981 = vmatmul.mubr.f32.gmra.mrb[0].mxu0 %v805
        %v982 = vpop.f32.mrb[0].mxu0
        %v983 = vadd.f32 %v784, %v982
        %v984 = vpop.f32.mrb[0].mxu0
        %985 = vmatprep.mubr.f32.mxu0 0.0
        %986 = vmatmul.mubr.f32.gmra.mrb[0].mxu0 %v808
        %v987 = vpop.f32.mrb[0].mxu0
        %v988 = vadd.f32 %v784, %v987
        %v989 = vpop.f32.mrb[0].mxu0
        %990 = vmatprep.mubr.f32.mxu0 0.0
        %991 = vmatmul.mubr.f32.gmra.mrb[0].mxu0 %v811
        %v992 = vpop.f32.mrb[0].mxu0
        %v993 = vadd.f32 %v784, %v992
        %v994 = vpop.f32.mrb[0].mxu0
        %995 = vmatprep.mubr.f32.mxu0 0.0
        %996 = vmatmul.mubr.f32.gmra.mrb[0].mxu0 %v814
        %v997 = vpop.f32.mrb[0].mxu0
        %v998 = vadd.f32 %v784, %v997
        %v999 = vpop.f32.mrb[0].mxu0
        %1000 = vmatprep.mubr.f32.mxu0 0.0
        %1001 = vmatmul.mubr.f32.gmra.mrb[0].mxu0 %v817
        %v1002 = vpop.f32.mrb[0].mxu0
        %v1003 = vadd.f32 %v784, %v1002
        %v1004 = vpop.f32.mrb[0].mxu0
        %1005 = vmatprep.mubr.f32.mxu0 0.0
        %1006 = vmatmul.mubr.f32.gmra.mrb[0].mxu0 %v820
        %v1007 = vpop.f32.mrb[0].mxu0
        %v1008 = vadd.f32 %v784, %v1007
        %v1009 = vpop.f32.mrb[0].mxu0
        %1010 = vmatprep.mubr.f32.mxu0 0.0
        %1011 = vmatmul.mubr.f32.gmra.mrb[0].mxu0 %v823
        %v1012 = vpop.f32.mrb[0].mxu0
        %v1013 = vadd.f32 %v784, %v1012
        %v1014 = vpop.f32.mrb[0].mxu0
        %1015 = vmatprep.mubr.f32.mxu0 0.0
        %1016 = vmatmul.mubr.f32.gmra.mrb[0].mxu0 %v826
        %v1017 = vpop.f32.mrb[0].mxu0
        %v1018 = vadd.f32 %v784, %v1017
        %v1019 = vpop.f32.mrb[0].mxu0
        %1020 = vmatprep.mubr.f32.mxu0 0.0
        %1021 = vmatmul.mubr.f32.gmra.mrb[0].mxu0 %v829
        %v1022 = vpop.f32.mrb[0].mxu0
        %v1023 = vadd.f32 %v784, %v1022
        %v1024 = vpop.f32.mrb[0].mxu0
        %1025 = vmatprep.mubr.f32.mxu0 0.0
        %1026 = vmatmul.mubr.f32.gmra.mrb[0].mxu0 %v832
        %v1027 = vpop.f32.mrb[0].mxu0
        %v1028 = vadd.f32 %v784, %v1027
        %v1029 = vpop.f32.mrb[0].mxu0
        %1030 = vmatprep.mubr.f32.mxu0 0.0
        %1031 = vmatmul.mubr.f32.gmra.mrb[0].mxu0 %v835
        %v1032 = vpop.f32.mrb[0].mxu0
        %v1033 = vadd.f32 %v784, %v1032
        %v1034 = vpop.f32.mrb[0].mxu0
        %1035 = vmatprep.mubr.f32.mxu0 0.0
        %1036 = vmatmul.mubr.f32.gmra.mrb[0].mxu0 %v838
        %v1037 = vpop.f32.mrb[0].mxu0
        %v1038 = vadd.f32 %v784, %v1037
        %v1039 = vpop.f32.mrb[0].mxu0
        %1040 = vmatprep.mubr.f32.mxu0 0.0
        %1041 = vmatmul.mubr.f32.gmra.mrb[0].mxu0 %v841
        %v1042 = vpop.f32.mrb[0].mxu0
        %v1043 = vadd.f32 %v784, %v1042
        %v1044 = vpop.f32.mrb[0].mxu0
        %1045 = vmatprep.mubr.f32.mxu0 0.0
        %1046 = vmatmul.mubr.f32.gmra.mrb[0].mxu0 %v844
        %v1047 = vpop.f32.mrb[0].mxu0
        %v1048 = vadd.f32 %v784, %v1047
        %v1049 = vpop.f32.mrb[0].mxu0
        %1050 = vmatprep.mubr.f32.mxu0 0.0
        %1051 = vmatmul.mubr.f32.gmra.mrb[0].mxu0 %v847
        %v1052 = vpop.f32.mrb[0].mxu0
        %v1053 = vadd.f32 %v784, %v1052
        %v1054 = vpop.f32.mrb[0].mxu0
        %1055 = vmatprep.mubr.f32.mxu0 0.0
        %1056 = vmatmul.mubr.f32.gmra.mrb[0].mxu0 %v850
        %v1057 = vpop.f32.mrb[0].mxu0
        %v1058 = vadd.f32 %v784, %v1057
        %v1059 = vpop.f32.mrb[0].mxu0
        %1060 = vmatprep.mubr.f32.mxu0 0.0
        %1061 = vmatmul.mubr.f32.gmra.mrb[0].mxu0 %v853
        %v1062 = vpop.f32.mrb[0].mxu0
        %v1063 = vadd.f32 %v784, %v1062
        %v1064 = vpop.f32.mrb[0].mxu0
        %1065 = vmatprep.mubr.f32.mxu0 0.0
        %1066 = vmatmul.mubr.f32.gmra.mrb[0].mxu0 %v856
        %v1067 = vpop.f32.mrb[0].mxu0
        %v1068 = vadd.f32 %v784, %v1067
        %v1069 = vpop.f32.mrb[0].mxu0
        %1070 = vmatprep.mubr.f32.mxu0 0.0
        %1071 = vmatmul.mubr.f32.gmra.mrb[0].mxu0 %v859
        %v1072 = vpop.f32.mrb[0].mxu0
        %v1073 = vadd.f32 %v784, %v1072
        %v1074 = vpop.f32.mrb[0].mxu0
        %1075 = vmatprep.mubr.f32.mxu0 0.0
        %1076 = vmatmul.mubr.f32.gmra.mrb[0].mxu0 %v862
        %v1077 = vpop.f32.mrb[0].mxu0
        %v1078 = vadd.f32 %v784, %v1077
        %v1079 = vpop.f32.mrb[0].mxu0
        %1080 = vmatprep.mubr.f32.mxu0 0.0
        %1081 = vmatmul.mubr.f32.gmra.mrb[0].mxu0 %v865
        %v1082 = vpop.f32.mrb[0].mxu0
        %v1083 = vadd.f32 %v784, %v1082
        %v1084 = vpop.f32.mrb[0].mxu0
        %1085 = vmatprep.mubr.f32.mxu0 0.0
        %1086 = vmatmul.mubr.f32.gmra.mrb[0].mxu0 %v868
        %v1087 = vpop.f32.mrb[0].mxu0
        %v1088 = vadd.f32 %v784, %v1087
        %v1089 = vpop.f32.mrb[0].mxu0
        %1090 = vmatprep.mubr.f32.mxu0 0.0
        %1091 = vmatmul.mubr.f32.gmra.mrb[0].mxu0 %v871
        %v1092 = vpop.f32.mrb[0].mxu0
        %v1093 = vadd.f32 %v784, %v1092
        %v1094 = vpop.f32.mrb[0].mxu0
        %1095 = vmatprep.mubr.f32.mxu0 0.0
        %1096 = vmatmul.mubr.f32.gmra.mrb[0].mxu0 %v874
        %v1097 = vpop.f32.mrb[0].mxu0
        %v1098 = vadd.f32 %v784, %v1097
        %v1099 = vpop.f32.mrb[0].mxu0
        %1100 = vmatprep.mubr.f32.mxu0 0.0
        %1101 = vmatmul.mubr.f32.gmra.mrb[0].mxu0 %v877
        %v1102 = vpop.f32.mrb[0].mxu0
        %v1103 = vadd.f32 %v784, %v1102
        %v1104 = vpop.f32.mrb[0].mxu0
        %1105 = vmatprep.mubr.f32.mxu0 0.0
        %1106 = vmatmul.mubr.f32.gmra.mrb[0].mxu0 %v880
        %v1107 = vpop.f32.mrb[0].mxu0
        %v1108 = vadd.f32 %v784, %v1107
        %v1109 = vpop.f32.mrb[0].mxu0
        %1110 = vdwg.mxu0
        %v1111 = vld [vmem:[%s7] sm:$0xf]
        %v1112 = vld [vmem:[%s8] sm:$0x1]
        %v1114 = vlaneseq
        %v1115 = vshrl.u32 %v1114, 7
        %v1116 = vsub.s32 0, %v1115
        %v1117 = vrot.slane %v1112, %v1116
        %v1120 = vsel %vm882, %v1111, 0
        %1122 = vmatprep.subr.mxu0 0.0
        %1123 = vmatpush1.msra.mxu0 %v1120
        %1124 = vmatprep.subr.mxu0 0.0
        %1125 = vmatpush1.msra.mxu0 0.0
        %1126 = vmatprep.subr.mxu0 0.0
        %1127 = vmatpush1.msra.mxu0 0.0
        %1128 = vmatprep.subr.mxu0 0.0
        %1129 = vmatpush1.msra.mxu0 0.0
        %1130 = vmatprep.subr.mxu0 0.0
        %1131 = vmatpush1.msra.mxu0 0.0
        %1132 = vmatprep.subr.mxu0 0.0
        %1133 = vmatpush1.msra.mxu0 0.0
        %1134 = vmatprep.subr.mxu0 0.0
        %1135 = vmatpush1.msra.mxu0 0.0
        %1136 = vmatprep.subr.mxu0 0.0
        %1137 = vmatpush1.msra.mxu0 0.0
        %1138 = vmatprep.subr.mxu0 0.0
        %1139 = vmatpush1.msra.mxu0 0.0
        %1140 = vmatprep.subr.mxu0 0.0
        %1141 = vmatpush1.msra.mxu0 0.0
        %1142 = vmatprep.subr.mxu0 0.0
        %1143 = vmatpush1.msra.mxu0 0.0
        %1144 = vmatprep.subr.mxu0 0.0
        %1145 = vmatpush1.msra.mxu0 0.0
        %1146 = vmatprep.subr.mxu0 0.0
        %1147 = vmatpush1.msra.mxu0 0.0
        %1148 = vmatprep.subr.mxu0 0.0
        %1149 = vmatpush1.msra.mxu0 0.0
        %1150 = vmatprep.subr.mxu0 0.0
        %1151 = vmatpush1.msra.mxu0 0.0
        %1152 = vmatprep.subr.mxu0 0.0
        %1153 = vmatpush1.msra.mxu0 0.0
        %1154 = vmatprep.subr.mxu0 0.0
        %1155 = vmatpush1.msra.mxu0 0.0
        %1156 = vmatprep.subr.mxu0 0.0
        %1157 = vmatpush1.msra.mxu0 0.0
        %1158 = vmatprep.subr.mxu0 0.0
        %1159 = vmatpush1.msra.mxu0 0.0
        %1160 = vmatprep.subr.mxu0 0.0
        %1161 = vmatpush1.msra.mxu0 0.0
        %1162 = vmatprep.subr.mxu0 0.0
        %1163 = vmatpush1.msra.mxu0 0.0
        %1164 = vmatprep.subr.mxu0 0.0
        %1165 = vmatpush1.msra.mxu0 0.0
        %1166 = vmatprep.subr.mxu0 0.0
        %1167 = vmatpush1.msra.mxu0 0.0
        %1168 = vmatprep.subr.mxu0 0.0
        %1169 = vmatpush1.msra.mxu0 0.0
        %1170 = vmatprep.subr.mxu0 0.0
        %1171 = vmatpush1.msra.mxu0 0.0
        %1172 = vmatprep.subr.mxu0 0.0
        %1173 = vmatpush1.msra.mxu0 0.0
        %1174 = vmatprep.subr.mxu0 0.0
        %1175 = vmatpush1.msra.mxu0 0.0
        %1176 = vmatprep.subr.mxu0 0.0
        %1177 = vmatpush1.msra.mxu0 0.0
        %1178 = vmatprep.subr.mxu0 0.0
        %1179 = vmatpush1.msra.mxu0 0.0
        %1180 = vmatprep.subr.mxu0 0.0
        %1181 = vmatpush1.msra.mxu0 0.0
        %1182 = vmatprep.subr.mxu0 0.0
        %1183 = vmatpush1.msra.mxu0 0.0
        %1184 = vmatprep.subr.mxu0 0.0
        %1185 = vmatpush1.msra.mxu0 0.0
        %1186 = vmatprep.mubr.f32.mxu0 0.0
        %1187 = vmatmul.mubr.f32.gmra.mrb[0].mxu0 %v787
        %v1188 = vpop.f32.mrb[0].mxu0
        %v1189 = vadd.f32 %v1117, %v1188
        %v1190 = vpop.f32.mrb[0].mxu0
        %1191 = vmatprep.mubr.f32.mxu0 0.0
        %1192 = vmatmul.mubr.f32.gmra.mrb[0].mxu0 %v790
        %v1193 = vpop.f32.mrb[0].mxu0
        %v1194 = vadd.f32 %v1117, %v1193
        %v1195 = vpop.f32.mrb[0].mxu0
        %1196 = vmatprep.mubr.f32.mxu0 0.0
        %1197 = vmatmul.mubr.f32.gmra.mrb[0].mxu0 %v793
        %v1198 = vpop.f32.mrb[0].mxu0
        %v1199 = vadd.f32 %v1117, %v1198
        %v1200 = vpop.f32.mrb[0].mxu0
        %1201 = vmatprep.mubr.f32.mxu0 0.0
        %1202 = vmatmul.mubr.f32.gmra.mrb[0].mxu0 %v796
        %v1203 = vpop.f32.mrb[0].mxu0
        %v1204 = vadd.f32 %v1117, %v1203
        %v1205 = vpop.f32.mrb[0].mxu0
        %1206 = vmatprep.mubr.f32.mxu0 0.0
        %1207 = vmatmul.mubr.f32.gmra.mrb[0].mxu0 %v799
        %v1208 = vpop.f32.mrb[0].mxu0
        %v1209 = vadd.f32 %v1117, %v1208
        %v1210 = vpop.f32.mrb[0].mxu0
        %1211 = vmatprep.mubr.f32.mxu0 0.0
        %1212 = vmatmul.mubr.f32.gmra.mrb[0].mxu0 %v802
        %v1213 = vpop.f32.mrb[0].mxu0
        %v1214 = vadd.f32 %v1117, %v1213
        %v1215 = vpop.f32.mrb[0].mxu0
        %1216 = vmatprep.mubr.f32.mxu0 0.0
        %1217 = vmatmul.mubr.f32.gmra.mrb[0].mxu0 %v805
        %v1218 = vpop.f32.mrb[0].mxu0
        %v1219 = vadd.f32 %v1117, %v1218
        %v1220 = vpop.f32.mrb[0].mxu0
        %1221 = vmatprep.mubr.f32.mxu0 0.0
        %1222 = vmatmul.mubr.f32.gmra.mrb[0].mxu0 %v808
        %v1223 = vpop.f32.mrb[0].mxu0
        %v1224 = vadd.f32 %v1117, %v1223
        %v1225 = vpop.f32.mrb[0].mxu0
        %1226 = vmatprep.mubr.f32.mxu0 0.0
        %1227 = vmatmul.mubr.f32.gmra.mrb[0].mxu0 %v811
        %v1228 = vpop.f32.mrb[0].mxu0
        %v1229 = vadd.f32 %v1117, %v1228
        %v1230 = vpop.f32.mrb[0].mxu0
        %1231 = vmatprep.mubr.f32.mxu0 0.0
        %1232 = vmatmul.mubr.f32.gmra.mrb[0].mxu0 %v814
        %v1233 = vpop.f32.mrb[0].mxu0
        %v1234 = vadd.f32 %v1117, %v1233
        %v1235 = vpop.f32.mrb[0].mxu0
        %1236 = vmatprep.mubr.f32.mxu0 0.0
        %1237 = vmatmul.mubr.f32.gmra.mrb[0].mxu0 %v817
        %v1238 = vpop.f32.mrb[0].mxu0
        %v1239 = vadd.f32 %v1117, %v1238
        %v1240 = vpop.f32.mrb[0].mxu0
        %1241 = vmatprep.mubr.f32.mxu0 0.0
        %1242 = vmatmul.mubr.f32.gmra.mrb[0].mxu0 %v820
        %v1243 = vpop.f32.mrb[0].mxu0
        %v1244 = vadd.f32 %v1117, %v1243
        %v1245 = vpop.f32.mrb[0].mxu0
        %1246 = vmatprep.mubr.f32.mxu0 0.0
        %1247 = vmatmul.mubr.f32.gmra.mrb[0].mxu0 %v823
        %v1248 = vpop.f32.mrb[0].mxu0
        %v1249 = vadd.f32 %v1117, %v1248
        %v1250 = vpop.f32.mrb[0].mxu0
        %1251 = vmatprep.mubr.f32.mxu0 0.0
        %1252 = vmatmul.mubr.f32.gmra.mrb[0].mxu0 %v826
        %v1253 = vpop.f32.mrb[0].mxu0
        %v1254 = vadd.f32 %v1117, %v1253
        %v1255 = vpop.f32.mrb[0].mxu0
        %1256 = vmatprep.mubr.f32.mxu0 0.0
        %1257 = vmatmul.mubr.f32.gmra.mrb[0].mxu0 %v829
        %v1258 = vpop.f32.mrb[0].mxu0
        %v1259 = vadd.f32 %v1117, %v1258
        %v1260 = vpop.f32.mrb[0].mxu0
        %1261 = vmatprep.mubr.f32.mxu0 0.0
        %1262 = vmatmul.mubr.f32.gmra.mrb[0].mxu0 %v832
        %v1263 = vpop.f32.mrb[0].mxu0
        %v1264 = vadd.f32 %v1117, %v1263
        %v1265 = vpop.f32.mrb[0].mxu0
        %1266 = vmatprep.mubr.f32.mxu0 0.0
        %1267 = vmatmul.mubr.f32.gmra.mrb[0].mxu0 %v835
        %v1268 = vpop.f32.mrb[0].mxu0
        %v1269 = vadd.f32 %v1117, %v1268
        %v1270 = vpop.f32.mrb[0].mxu0
        %1271 = vmatprep.mubr.f32.mxu0 0.0
        %1272 = vmatmul.mubr.f32.gmra.mrb[0].mxu0 %v838
        %v1273 = vpop.f32.mrb[0].mxu0
        %v1274 = vadd.f32 %v1117, %v1273
        %v1275 = vpop.f32.mrb[0].mxu0
        %1276 = vmatprep.mubr.f32.mxu0 0.0
        %1277 = vmatmul.mubr.f32.gmra.mrb[0].mxu0 %v841
        %v1278 = vpop.f32.mrb[0].mxu0
        %v1279 = vadd.f32 %v1117, %v1278
        %v1280 = vpop.f32.mrb[0].mxu0
        %1281 = vmatprep.mubr.f32.mxu0 0.0
        %1282 = vmatmul.mubr.f32.gmra.mrb[0].mxu0 %v844
        %v1283 = vpop.f32.mrb[0].mxu0
        %v1284 = vadd.f32 %v1117, %v1283
        %v1285 = vpop.f32.mrb[0].mxu0
        %1286 = vmatprep.mubr.f32.mxu0 0.0
        %1287 = vmatmul.mubr.f32.gmra.mrb[0].mxu0 %v847
        %v1288 = vpop.f32.mrb[0].mxu0
        %v1289 = vadd.f32 %v1117, %v1288
        %v1290 = vpop.f32.mrb[0].mxu0
        %1291 = vmatprep.mubr.f32.mxu0 0.0
        %1292 = vmatmul.mubr.f32.gmra.mrb[0].mxu0 %v850
        %v1293 = vpop.f32.mrb[0].mxu0
        %v1294 = vadd.f32 %v1117, %v1293
        %v1295 = vpop.f32.mrb[0].mxu0
        %1296 = vmatprep.mubr.f32.mxu0 0.0
        %1297 = vmatmul.mubr.f32.gmra.mrb[0].mxu0 %v853
        %v1298 = vpop.f32.mrb[0].mxu0
        %v1299 = vadd.f32 %v1117, %v1298
        %v1300 = vpop.f32.mrb[0].mxu0
        %1301 = vmatprep.mubr.f32.mxu0 0.0
        %1302 = vmatmul.mubr.f32.gmra.mrb[0].mxu0 %v856
        %v1303 = vpop.f32.mrb[0].mxu0
        %v1304 = vadd.f32 %v1117, %v1303
        %v1305 = vpop.f32.mrb[0].mxu0
        %1306 = vmatprep.mubr.f32.mxu0 0.0
        %1307 = vmatmul.mubr.f32.gmra.mrb[0].mxu0 %v859
        %v1308 = vpop.f32.mrb[0].mxu0
        %v1309 = vadd.f32 %v1117, %v1308
        %v1310 = vpop.f32.mrb[0].mxu0
        %1311 = vmatprep.mubr.f32.mxu0 0.0
        %1312 = vmatmul.mubr.f32.gmra.mrb[0].mxu0 %v862
        %v1313 = vpop.f32.mrb[0].mxu0
        %v1314 = vadd.f32 %v1117, %v1313
        %v1315 = vpop.f32.mrb[0].mxu0
        %1316 = vmatprep.mubr.f32.mxu0 0.0
        %1317 = vmatmul.mubr.f32.gmra.mrb[0].mxu0 %v865
        %v1318 = vpop.f32.mrb[0].mxu0
        %v1319 = vadd.f32 %v1117, %v1318
        %v1320 = vpop.f32.mrb[0].mxu0
        %1321 = vmatprep.mubr.f32.mxu0 0.0
        %1322 = vmatmul.mubr.f32.gmra.mrb[0].mxu0 %v868
        %v1323 = vpop.f32.mrb[0].mxu0
        %v1324 = vadd.f32 %v1117, %v1323
        %v1325 = vpop.f32.mrb[0].mxu0
        %1326 = vmatprep.mubr.f32.mxu0 0.0
        %1327 = vmatmul.mubr.f32.gmra.mrb[0].mxu0 %v871
        %v1328 = vpop.f32.mrb[0].mxu0
        %v1329 = vadd.f32 %v1117, %v1328
        %v1330 = vpop.f32.mrb[0].mxu0
        %1331 = vmatprep.mubr.f32.mxu0 0.0
        %1332 = vmatmul.mubr.f32.gmra.mrb[0].mxu0 %v874
        %v1333 = vpop.f32.mrb[0].mxu0
        %v1334 = vadd.f32 %v1117, %v1333
        %v1335 = vpop.f32.mrb[0].mxu0
        %1336 = vmatprep.mubr.f32.mxu0 0.0
        %1337 = vmatmul.mubr.f32.gmra.mrb[0].mxu0 %v877
        %v1338 = vpop.f32.mrb[0].mxu0
        %v1339 = vadd.f32 %v1117, %v1338
        %v1340 = vpop.f32.mrb[0].mxu0
        %1341 = vmatprep.mubr.f32.mxu0 0.0
        %1342 = vmatmul.mubr.f32.gmra.mrb[0].mxu0 %v880
        %v1343 = vpop.f32.mrb[0].mxu0
        %v1344 = vadd.f32 %v1117, %v1343
        %v1345 = vpop.f32.mrb[0].mxu0
        %1346 = vdwg.mxu0
        %1347 = vxpose.xlu0.b32.start [1/16] %v953, 128
        %1348 = vxpose.xlu0.b32.cont [2/16] %v958, 128
        %1349 = vxpose.xlu0.b32.cont [3/16] %v963, 128
        %1350 = vxpose.xlu0.b32.cont [4/16] %v968, 128
        %1351 = vxpose.xlu0.b32.cont [5/16] %v973, 128
        %1352 = vxpose.xlu0.b32.cont [6/16] %v978, 128
        %1353 = vxpose.xlu0.b32.cont [7/16] %v983, 128
        %1354 = vxpose.xlu0.b32.cont [8/16] %v988, 128
        %1355 = vxpose.xlu0.b32.cont [9/16] %v993, 128
        %1356 = vxpose.xlu0.b32.cont [10/16] %v998, 128
        %1357 = vxpose.xlu0.b32.cont [11/16] %v1003, 128
        %1358 = vxpose.xlu0.b32.cont [12/16] %v1008, 128
        %1359 = vxpose.xlu0.b32.cont [13/16] %v1013, 128
        %1360 = vxpose.xlu0.b32.cont [14/16] %v1018, 128
        %1361 = vxpose.xlu0.b32.cont [15/16] %v1023, 128
        %1362 = vxpose.xlu0.b32.end [16/16] %v1028, 128
        %v1363 = vpop.trf.xlu0
        %v1364 = vpop.trf.xlu0
        %v1365 = vpop.trf.xlu0
        %v1366 = vpop.trf.xlu0
        %v1367 = vpop.trf.xlu0
        %v1368 = vpop.trf.xlu0
        %v1369 = vpop.trf.xlu0
        %v1370 = vpop.trf.xlu0
        %v1371 = vpop.trf.xlu0
        %v1372 = vpop.trf.xlu0
        %v1373 = vpop.trf.xlu0
        %v1374 = vpop.trf.xlu0
        %v1375 = vpop.trf.xlu0
        %v1376 = vpop.trf.xlu0
        %v1377 = vpop.trf.xlu0
        %v1378 = vpop.trf.xlu0
        %1379 = vxpose.xlu0.b32.start [1/16] %v1033, 128
        %1380 = vxpose.xlu0.b32.cont [2/16] %v1038, 128
        %1381 = vxpose.xlu0.b32.cont [3/16] %v1043, 128
        %1382 = vxpose.xlu0.b32.cont [4/16] %v1048, 128
        %1383 = vxpose.xlu0.b32.cont [5/16] %v1053, 128
        %1384 = vxpose.xlu0.b32.cont [6/16] %v1058, 128
        %1385 = vxpose.xlu0.b32.cont [7/16] %v1063, 128
        %1386 = vxpose.xlu0.b32.cont [8/16] %v1068, 128
        %1387 = vxpose.xlu0.b32.cont [9/16] %v1073, 128
        %1388 = vxpose.xlu0.b32.cont [10/16] %v1078, 128
        %1389 = vxpose.xlu0.b32.cont [11/16] %v1083, 128
        %1390 = vxpose.xlu0.b32.cont [12/16] %v1088, 128
        %1391 = vxpose.xlu0.b32.cont [13/16] %v1093, 128
        %1392 = vxpose.xlu0.b32.cont [14/16] %v1098, 128
        %1393 = vxpose.xlu0.b32.cont [15/16] %v1103, 128
        %1394 = vxpose.xlu0.b32.end [16/16] %v1108, 128
        %v1395 = vpop.trf.xlu0
        %v1396 = vpop.trf.xlu0
        %v1397 = vpop.trf.xlu0
        %v1398 = vpop.trf.xlu0
        %v1399 = vpop.trf.xlu0
        %v1400 = vpop.trf.xlu0
        %v1401 = vpop.trf.xlu0
        %v1402 = vpop.trf.xlu0
        %v1403 = vpop.trf.xlu0
        %v1404 = vpop.trf.xlu0
        %v1405 = vpop.trf.xlu0
        %v1406 = vpop.trf.xlu0
        %v1407 = vpop.trf.xlu0
        %v1408 = vpop.trf.xlu0
        %v1409 = vpop.trf.xlu0
        %v1410 = vpop.trf.xlu0
        %v1413 = vcombine.low %v1363, %v1395
        %1415 = vst [vmem:[#allocation2] sm:$0xff] %v1413
        %1416 = vst.msk [vmem:[#allocation3] sm:$0xff] %vm446, %v1189
        %1417 = vst.msk [vmem:[#allocation3 + $0x8] sm:$0xff] %vm446, %v1194
        %1418 = vst.msk [vmem:[#allocation3 + $0x10] sm:$0xff] %vm446, %v1199
        %1419 = vst.msk [vmem:[#allocation3 + $0x18] sm:$0xff] %vm446, %v1204
        %1420 = vst.msk [vmem:[#allocation3 + $0x20] sm:$0xff] %vm446, %v1209
        %1421 = vst.msk [vmem:[#allocation3 + $0x28] sm:$0xff] %vm446, %v1214
        %1422 = vst.msk [vmem:[#allocation3 + $0x30] sm:$0xff] %vm446, %v1219
        %1423 = vst.msk [vmem:[#allocation3 + $0x38] sm:$0xff] %vm446, %v1224
        %1424 = vst.msk [vmem:[#allocation3 + $0x40] sm:$0xff] %vm446, %v1229
        %1425 = vst.msk [vmem:[#allocation3 + $0x48] sm:$0xff] %vm446, %v1234
        %1426 = vst.msk [vmem:[#allocation3 + $0x50] sm:$0xff] %vm446, %v1239
        %1427 = vst.msk [vmem:[#allocation3 + $0x58] sm:$0xff] %vm446, %v1244
        %1428 = vst.msk [vmem:[#allocation3 + $0x60] sm:$0xff] %vm446, %v1249
        %1429 = vst.msk [vmem:[#allocation3 + $0x68] sm:$0xff] %vm446, %v1254
        %1430 = vst.msk [vmem:[#allocation3 + $0x70] sm:$0xff] %vm446, %v1259
        %1431 = vst.msk [vmem:[#allocation3 + $0x78] sm:$0xff] %vm446, %v1264
        %1432 = vst.msk [vmem:[#allocation3 + $0x80] sm:$0xff] %vm446, %v1269
        %1433 = vst.msk [vmem:[#allocation3 + $0x88] sm:$0xff] %vm446, %v1274
        %1434 = vst.msk [vmem:[#allocation3 + $0x90] sm:$0xff] %vm446, %v1279
        %1435 = vst.msk [vmem:[#allocation3 + $0x98] sm:$0xff] %vm446, %v1284
        %1436 = vst.msk [vmem:[#allocation3 + $0xa0] sm:$0xff] %vm446, %v1289
        %1437 = vst.msk [vmem:[#allocation3 + $0xa8] sm:$0xff] %vm446, %v1294
        %1438 = vst.msk [vmem:[#allocation3 + $0xb0] sm:$0xff] %vm446, %v1299
        %1439 = vst.msk [vmem:[#allocation3 + $0xb8] sm:$0xff] %vm446, %v1304
        %1440 = vst.msk [vmem:[#allocation3 + $0xc0] sm:$0xff] %vm446, %v1309
        %1441 = vst.msk [vmem:[#allocation3 + $0xc8] sm:$0xff] %vm446, %v1314
        %1442 = vst.msk [vmem:[#allocation3 + $0xd0] sm:$0xff] %vm446, %v1319
        %1443 = vst.msk [vmem:[#allocation3 + $0xd8] sm:$0xff] %vm446, %v1324
        %1444 = vst.msk [vmem:[#allocation3 + $0xe0] sm:$0xff] %vm446, %v1329
        %1445 = vst.msk [vmem:[#allocation3 + $0xe8] sm:$0xff] %vm446, %v1334
        %1446 = vst.msk [vmem:[#allocation3 + $0xf0] sm:$0xff] %vm446, %v1339
        %1447 = vst.msk [vmem:[#allocation3 + $0xf8] sm:$0xff] %vm446, %v1344
      $region68: #{tpu_custom_call.1} parent=63 // pred_fallthru
        _
      %s1448 = smul.u32 %s27, 64
      %s1449 = scalar_lea.vmem %s399, %s1448
      %v1450 = vld [vmem:[%s1449] sm:$0xff]
      %v1451 = vld [vmem:[%s1449 + $0x8] sm:$0xff]
      %v1452 = vld [vmem:[%s1449 + $0x10] sm:$0xff]
      %v1453 = vld [vmem:[%s1449 + $0x18] sm:$0xff]
      %v1454 = vld [vmem:[%s1449 + $0x20] sm:$0xff]
      %v1455 = vld [vmem:[%s1449 + $0x28] sm:$0xff]
      %v1456 = vld [vmem:[%s1449 + $0x30] sm:$0xff]
      %v1457 = vld [vmem:[%s1449 + $0x38] sm:$0xff]
      %v1458 = vld [vmem:[#allocation4] sm:$0x1]
      %v1460 = vlaneseq
      %v1461 = vshrl.u32 %v1460, 7
      %v1462 = vsub.s32 0, %v1461
      %v1463 = vrot.slane %v1458, %v1462
      %v1465 = vmul.f32 %v1450, %v1463
      %v1466 = vmul.f32 %v1451, %v1463
      %v1467 = vmul.f32 %v1452, %v1463
      %v1468 = vmul.f32 %v1453, %v1463
      %v1469 = vmul.f32 %v1454, %v1463
      %v1470 = vmul.f32 %v1455, %v1463
      %v1471 = vmul.f32 %v1456, %v1463
      %v1472 = vmul.f32 %v1457, %v1463
      %v1473 = vld [vmem:[#allocation5] sm:$0x1]
      %v1475 = vlaneseq
      %v1476 = vshrl.u32 %v1475, 7
      %v1477 = vsub.s32 0, %v1476
      %v1478 = vrot.slane %v1473, %v1477
      %v1480 = vadd.f32 %v1465, %v1478
      %v1481 = vadd.f32 %v1466, %v1478
      %v1482 = vadd.f32 %v1467, %v1478
      %v1483 = vadd.f32 %v1468, %v1478
      %v1484 = vadd.f32 %v1469, %v1478
      %v1485 = vadd.f32 %v1470, %v1478
      %v1486 = vadd.f32 %v1471, %v1478
      %v1487 = vadd.f32 %v1472, %v1478
      %v1488 = vld [vmem:[%s3] sm:$0xf]
      %v1489 = vld [vmem:[%s4] sm:$0x1]
      %v1491 = vlaneseq
      %v1492 = vshrl.u32 %v1491, 7
      %v1493 = vsub.s32 0, %v1492
      %v1494 = vrot.slane %v1489, %v1493
      %vm1496 = vcmask 31744
      %v1498 = vsel %vm1496, %v1480, 0
      %v1501 = vsel %vm1496, %v1481, 0
      %v1504 = vsel %vm1496, %v1482, 0
      %v1507 = vsel %vm1496, %v1483, 0
      %v1510 = vsel %vm1496, %v1484, 0
      %v1513 = vsel %vm1496, %v1485, 0
      %v1516 = vsel %vm1496, %v1486, 0
      %v1519 = vsel %vm1496, %v1487, 0
      %vm1521 = vcmask 1043456
      %v1523 = vsel %vm1521, %v1488, 0
      %1525 = vmatprep.subr.mxu0 0.0
      %1526 = vmatpush1.msra.mxu0 %v1523
      %1527 = vmatprep.subr.mxu0 0.0
      %1528 = vmatpush1.msra.mxu0 0.0
      %1529 = vmatprep.subr.mxu0 0.0
      %1530 = vmatpush1.msra.mxu0 0.0
      %1531 = vmatprep.subr.mxu0 0.0
      %1532 = vmatpush1.msra.mxu0 0.0
      %1533 = vmatprep.subr.mxu0 0.0
      %1534 = vmatpush1.msra.mxu0 0.0
      %1535 = vmatprep.subr.mxu0 0.0
      %1536 = vmatpush1.msra.mxu0 0.0
      %1537 = vmatprep.subr.mxu0 0.0
      %1538 = vmatpush1.msra.mxu0 0.0
      %1539 = vmatprep.subr.mxu0 0.0
      %1540 = vmatpush1.msra.mxu0 0.0
      %1541 = vmatprep.subr.mxu0 0.0
      %1542 = vmatpush1.msra.mxu0 0.0
      %1543 = vmatprep.subr.mxu0 0.0
      %1544 = vmatpush1.msra.mxu0 0.0
      %1545 = vmatprep.subr.mxu0 0.0
      %1546 = vmatpush1.msra.mxu0 0.0
      %1547 = vmatprep.subr.mxu0 0.0
      %1548 = vmatpush1.msra.mxu0 0.0
      %1549 = vmatprep.subr.mxu0 0.0
      %1550 = vmatpush1.msra.mxu0 0.0
      %1551 = vmatprep.subr.mxu0 0.0
      %1552 = vmatpush1.msra.mxu0 0.0
      %1553 = vmatprep.subr.mxu0 0.0
      %1554 = vmatpush1.msra.mxu0 0.0
      %1555 = vmatprep.subr.mxu0 0.0
      %1556 = vmatpush1.msra.mxu0 0.0
      %1557 = vmatprep.subr.mxu0 0.0
      %1558 = vmatpush1.msra.mxu0 0.0
      %1559 = vmatprep.subr.mxu0 0.0
      %1560 = vmatpush1.msra.mxu0 0.0
      %1561 = vmatprep.subr.mxu0 0.0
      %1562 = vmatpush1.msra.mxu0 0.0
      %1563 = vmatprep.subr.mxu0 0.0
      %1564 = vmatpush1.msra.mxu0 0.0
      %1565 = vmatprep.subr.mxu0 0.0
      %1566 = vmatpush1.msra.mxu0 0.0
      %1567 = vmatprep.subr.mxu0 0.0
      %1568 = vmatpush1.msra.mxu0 0.0
      %1569 = vmatprep.subr.mxu0 0.0
      %1570 = vmatpush1.msra.mxu0 0.0
      %1571 = vmatprep.subr.mxu0 0.0
      %1572 = vmatpush1.msra.mxu0 0.0
      %1573 = vmatprep.subr.mxu0 0.0
      %1574 = vmatpush1.msra.mxu0 0.0
      %1575 = vmatprep.subr.mxu0 0.0
      %1576 = vmatpush1.msra.mxu0 0.0
      %1577 = vmatprep.subr.mxu0 0.0
      %1578 = vmatpush1.msra.mxu0 0.0
      %1579 = vmatprep.subr.mxu0 0.0
      %1580 = vmatpush1.msra.mxu0 0.0
      %1581 = vmatprep.subr.mxu0 0.0
      %1582 = vmatpush1.msra.mxu0 0.0
      %1583 = vmatprep.subr.mxu0 0.0
      %1584 = vmatpush1.msra.mxu0 0.0
      %1585 = vmatprep.subr.mxu0 0.0
      %1586 = vmatpush1.msra.mxu0 0.0
      %1587 = vmatprep.subr.mxu0 0.0
      %1588 = vmatpush1.msra.mxu0 0.0
      %1589 = vmatprep.mubr.f32.mxu0 0.0
      %1590 = vmatmul.mubr.f32.gmra.mrb[0].mxu0 %v1498
      %v1591 = vpop.f32.mrb[0].mxu0
      %v1592 = vadd.f32 %v1494, %v1591
      %v1593 = vpop.f32.mrb[0].mxu0
      %1594 = vmatprep.mubr.f32.mxu0 0.0
      %1595 = vmatmul.mubr.f32.gmra.mrb[0].mxu0 %v1501
      %v1596 = vpop.f32.mrb[0].mxu0
      %v1597 = vadd.f32 %v1494, %v1596
      %v1598 = vpop.f32.mrb[0].mxu0
      %1599 = vmatprep.mubr.f32.mxu0 0.0
      %1600 = vmatmul.mubr.f32.gmra.mrb[0].mxu0 %v1504
      %v1601 = vpop.f32.mrb[0].mxu0
      %v1602 = vadd.f32 %v1494, %v1601
      %v1603 = vpop.f32.mrb[0].mxu0
      %1604 = vmatprep.mubr.f32.mxu0 0.0
      %1605 = vmatmul.mubr.f32.gmra.mrb[0].mxu0 %v1507
      %v1606 = vpop.f32.mrb[0].mxu0
      %v1607 = vadd.f32 %v1494, %v1606
      %v1608 = vpop.f32.mrb[0].mxu0
      %1609 = vmatprep.mubr.f32.mxu0 0.0
      %1610 = vmatmul.mubr.f32.gmra.mrb[0].mxu0 %v1510
      %v1611 = vpop.f32.mrb[0].mxu0
      %v1612 = vadd.f32 %v1494, %v1611
      %v1613 = vpop.f32.mrb[0].mxu0
      %1614 = vmatprep.mubr.f32.mxu0 0.0
      %1615 = vmatmul.mubr.f32.gmra.mrb[0].mxu0 %v1513
      %v1616 = vpop.f32.mrb[0].mxu0
      %v1617 = vadd.f32 %v1494, %v1616
      %v1618 = vpop.f32.mrb[0].mxu0
      %1619 = vmatprep.mubr.f32.mxu0 0.0
      %1620 = vmatmul.mubr.f32.gmra.mrb[0].mxu0 %v1516
      %v1621 = vpop.f32.mrb[0].mxu0
      %v1622 = vadd.f32 %v1494, %v1621
      %v1623 = vpop.f32.mrb[0].mxu0
      %1624 = vmatprep.mubr.f32.mxu0 0.0
      %1625 = vmatmul.mubr.f32.gmra.mrb[0].mxu0 %v1519
      %v1626 = vpop.f32.mrb[0].mxu0
      %v1627 = vadd.f32 %v1494, %v1626
      %v1628 = vpop.f32.mrb[0].mxu0
      %1629 = vdwg.mxu0
      %v1630 = vld [vmem:[#allocation2] sm:$0xff]
      %v1632 = vcombine.high %v1630, %v1630
      %v1634 = vsel %vm1496, %v1592, 0
      %v1637 = vsel %vm1496, %v1597, 0
      %v1640 = vsel %vm1496, %v1602, 0
      %v1643 = vsel %vm1496, %v1607, 0
      %v1646 = vsel %vm1496, %v1612, 0
      %v1649 = vsel %vm1496, %v1617, 0
      %v1652 = vsel %vm1496, %v1622, 0
      %v1655 = vsel %vm1496, %v1627, 0
      %v1657 = vsel %vm1521, %v1630, 0
      %v1659 = vsel %vm1521, %v1632, 0
      %1661 = vmatprep.subr.mxu0 %v1659
      %1662 = vmatpush1.msra.mxu0 %v1657
      %1663 = vmatprep.subr.mxu0 0.0
      %1664 = vmatpush1.msra.mxu0 0.0
      %1665 = vmatprep.subr.mxu0 0.0
      %1666 = vmatpush1.msra.mxu0 0.0
      %1667 = vmatprep.subr.mxu0 0.0
      %1668 = vmatpush1.msra.mxu0 0.0
      %1669 = vmatprep.subr.mxu0 0.0
      %1670 = vmatpush1.msra.mxu0 0.0
      %1671 = vmatprep.subr.mxu0 0.0
      %1672 = vmatpush1.msra.mxu0 0.0
      %1673 = vmatprep.subr.mxu0 0.0
      %1674 = vmatpush1.msra.mxu0 0.0
      %1675 = vmatprep.subr.mxu0 0.0
      %1676 = vmatpush1.msra.mxu0 0.0
      %1677 = vmatprep.subr.mxu0 0.0
      %1678 = vmatpush1.msra.mxu0 0.0
      %1679 = vmatprep.subr.mxu0 0.0
      %1680 = vmatpush1.msra.mxu0 0.0
      %1681 = vmatprep.subr.mxu0 0.0
      %1682 = vmatpush1.msra.mxu0 0.0
      %1683 = vmatprep.subr.mxu0 0.0
      %1684 = vmatpush1.msra.mxu0 0.0
      %1685 = vmatprep.subr.mxu0 0.0
      %1686 = vmatpush1.msra.mxu0 0.0
      %1687 = vmatprep.subr.mxu0 0.0
      %1688 = vmatpush1.msra.mxu0 0.0
      %1689 = vmatprep.subr.mxu0 0.0
      %1690 = vmatpush1.msra.mxu0 0.0
      %1691 = vmatprep.subr.mxu0 0.0
      %1692 = vmatpush1.msra.mxu0 0.0
      %1693 = vmatprep.subr.mxu0 0.0
      %1694 = vmatpush1.msra.mxu0 0.0
      %1695 = vmatprep.subr.mxu0 0.0
      %1696 = vmatpush1.msra.mxu0 0.0
      %1697 = vmatprep.subr.mxu0 0.0
      %1698 = vmatpush1.msra.mxu0 0.0
      %1699 = vmatprep.subr.mxu0 0.0
      %1700 = vmatpush1.msra.mxu0 0.0
      %1701 = vmatprep.subr.mxu0 0.0
      %1702 = vmatpush1.msra.mxu0 0.0
      %1703 = vmatprep.subr.mxu0 0.0
      %1704 = vmatpush1.msra.mxu0 0.0
      %1705 = vmatprep.subr.mxu0 0.0
      %1706 = vmatpush1.msra.mxu0 0.0
      %1707 = vmatprep.subr.mxu0 0.0
      %1708 = vmatpush1.msra.mxu0 0.0
      %1709 = vmatprep.subr.mxu0 0.0
      %1710 = vmatpush1.msra.mxu0 0.0
      %1711 = vmatprep.subr.mxu0 0.0
      %1712 = vmatpush1.msra.mxu0 0.0
      %1713 = vmatprep.subr.mxu0 0.0
      %1714 = vmatpush1.msra.mxu0 0.0
      %1715 = vmatprep.subr.mxu0 0.0
      %1716 = vmatpush1.msra.mxu0 0.0
      %1717 = vmatprep.subr.mxu0 0.0
      %1718 = vmatpush1.msra.mxu0 0.0
      %1719 = vmatprep.subr.mxu0 0.0
      %1720 = vmatpush1.msra.mxu0 0.0
      %1721 = vmatprep.subr.mxu0 0.0
      %1722 = vmatpush1.msra.mxu0 0.0
      %1723 = vmatprep.subr.mxu0 0.0
      %1724 = vmatpush1.msra.mxu0 0.0
      %1725 = vmatprep.mubr.f32.mxu0 0.0
      %1726 = vmatmul.mubr.f32.gmra.mrb[0].mxu0 %v1634
      %v1727 = vpop.f32.mrb[0].mxu0
      %v1728 = vadd.f32 0.0, %v1727
      %v1729 = vpop.f32.mrb[0].mxu0
      %v1730 = vadd.f32 0.0, %v1729
      %1731 = vmatprep.mubr.f32.mxu0 0.0
      %1732 = vmatmul.mubr.f32.gmra.mrb[0].mxu0 %v1637
      %v1733 = vpop.f32.mrb[0].mxu0
      %v1734 = vadd.f32 0.0, %v1733
      %v1735 = vpop.f32.mrb[0].mxu0
      %v1736 = vadd.f32 0.0, %v1735
      %1737 = vmatprep.mubr.f32.mxu0 0.0
      %1738 = vmatmul.mubr.f32.gmra.mrb[0].mxu0 %v1640
      %v1739 = vpop.f32.mrb[0].mxu0
      %v1740 = vadd.f32 0.0, %v1739
      %v1741 = vpop.f32.mrb[0].mxu0
      %v1742 = vadd.f32 0.0, %v1741
      %1743 = vmatprep.mubr.f32.mxu0 0.0
      %1744 = vmatmul.mubr.f32.gmra.mrb[0].mxu0 %v1643
      %v1745 = vpop.f32.mrb[0].mxu0
      %v1746 = vadd.f32 0.0, %v1745
      %v1747 = vpop.f32.mrb[0].mxu0
      %v1748 = vadd.f32 0.0, %v1747
      %1749 = vmatprep.mubr.f32.mxu0 0.0
      %1750 = vmatmul.mubr.f32.gmra.mrb[0].mxu0 %v1646
      %v1751 = vpop.f32.mrb[0].mxu0
      %v1752 = vadd.f32 0.0, %v1751
      %v1753 = vpop.f32.mrb[0].mxu0
      %v1754 = vadd.f32 0.0, %v1753
      %1755 = vmatprep.mubr.f32.mxu0 0.0
      %1756 = vmatmul.mubr.f32.gmra.mrb[0].mxu0 %v1649
      %v1757 = vpop.f32.mrb[0].mxu0
      %v1758 = vadd.f32 0.0, %v1757
      %v1759 = vpop.f32.mrb[0].mxu0
      %v1760 = vadd.f32 0.0, %v1759
      %1761 = vmatprep.mubr.f32.mxu0 0.0
      %1762 = vmatmul.mubr.f32.gmra.mrb[0].mxu0 %v1652
      %v1763 = vpop.f32.mrb[0].mxu0
      %v1764 = vadd.f32 0.0, %v1763
      %v1765 = vpop.f32.mrb[0].mxu0
      %v1766 = vadd.f32 0.0, %v1765
      %1767 = vmatprep.mubr.f32.mxu0 0.0
      %1768 = vmatmul.mubr.f32.gmra.mrb[0].mxu0 %v1655
      %v1769 = vpop.f32.mrb[0].mxu0
      %v1770 = vadd.f32 0.0, %v1769
      %v1771 = vpop.f32.mrb[0].mxu0
      %v1772 = vadd.f32 0.0, %v1771
      %1773 = vdwg.mxu0
      %v1774 = vmax.f32 %v1728, %v1730
      %1775 = vmax.xlane.f32.xlu0 %v1774
      %v1776 = vpop.xlane.xlu0 %1775
      %v1777 = vmax.f32 %v1734, %v1736
      %1778 = vmax.xlane.f32.xlu0 %v1777
      %v1779 = vpop.xlane.xlu0 %1778
      %v1780 = vmax.f32 %v1740, %v1742
      %1781 = vmax.xlane.f32.xlu0 %v1780
      %v1782 = vpop.xlane.xlu0 %1781
      %v1783 = vmax.f32 %v1746, %v1748
      %1784 = vmax.xlane.f32.xlu0 %v1783
      %v1785 = vpop.xlane.xlu0 %1784
      %v1786 = vmax.f32 %v1752, %v1754
      %1787 = vmax.xlane.f32.xlu0 %v1786
      %v1788 = vpop.xlane.xlu0 %1787
      %v1789 = vmax.f32 %v1758, %v1760
      %1790 = vmax.xlane.f32.xlu0 %v1789
      %v1791 = vpop.xlane.xlu0 %1790
      %v1792 = vmax.f32 %v1764, %v1766
      %1793 = vmax.xlane.f32.xlu0 %v1792
      %v1794 = vpop.xlane.xlu0 %1793
      %v1795 = vmax.f32 %v1770, %v1772
      %1796 = vmax.xlane.f32.xlu0 %v1795
      %v1797 = vpop.xlane.xlu0 %1796
      %v1798 = vsub.f32 %v1728, %v1776
      %v1799 = vsub.f32 %v1730, %v1776
      %v1800 = vsub.f32 %v1734, %v1779
      %v1801 = vsub.f32 %v1736, %v1779
      %v1802 = vsub.f32 %v1740, %v1782
      %v1803 = vsub.f32 %v1742, %v1782
      %v1804 = vsub.f32 %v1746, %v1785
      %v1805 = vsub.f32 %v1748, %v1785
      %v1806 = vsub.f32 %v1752, %v1788
      %v1807 = vsub.f32 %v1754, %v1788
      %v1808 = vsub.f32 %v1758, %v1791
      %v1809 = vsub.f32 %v1760, %v1791
      %v1810 = vsub.f32 %v1764, %v1794
      %v1811 = vsub.f32 %v1766, %v1794
      %v1812 = vsub.f32 %v1770, %v1797
      %v1813 = vsub.f32 %v1772, %v1797
      %v1814 = vmul.f32 %v1798, 1.442695
      %v1815 = vpow.pop %v1814
      %v1816 = vmul.f32 %v1799, 1.442695
      %v1817 = vpow.pop %v1816
      %v1818 = vmul.f32 %v1800, 1.442695
      %v1819 = vpow.pop %v1818
      %v1820 = vmul.f32 %v1801, 1.442695
      %v1821 = vpow.pop %v1820
      %v1822 = vmul.f32 %v1802, 1.442695
      %v1823 = vpow.pop %v1822
      %v1824 = vmul.f32 %v1803, 1.442695
      %v1825 = vpow.pop %v1824
      %v1826 = vmul.f32 %v1804, 1.442695
      %v1827 = vpow.pop %v1826
      %v1828 = vmul.f32 %v1805, 1.442695
      %v1829 = vpow.pop %v1828
      %v1830 = vmul.f32 %v1806, 1.442695
      %v1831 = vpow.pop %v1830
      %v1832 = vmul.f32 %v1807, 1.442695
      %v1833 = vpow.pop %v1832
      %v1834 = vmul.f32 %v1808, 1.442695
      %v1835 = vpow.pop %v1834
      %v1836 = vmul.f32 %v1809, 1.442695
      %v1837 = vpow.pop %v1836
      %v1838 = vmul.f32 %v1810, 1.442695
      %v1839 = vpow.pop %v1838
      %v1840 = vmul.f32 %v1811, 1.442695
      %v1841 = vpow.pop %v1840
      %v1842 = vmul.f32 %v1812, 1.442695
      %v1843 = vpow.pop %v1842
      %v1844 = vmul.f32 %v1813, 1.442695
      %v1845 = vpow.pop %v1844
      %v1846 = vadd.f32 %v1815, %v1817
      %1847 = vadd.xlane.f32.xlu0 %v1846
      %v1848 = vpop.xlane.xlu0 %1847
      %v1849 = vadd.f32 %v1819, %v1821
      %1850 = vadd.xlane.f32.xlu0 %v1849
      %v1851 = vpop.xlane.xlu0 %1850
      %v1852 = vadd.f32 %v1823, %v1825
      %1853 = vadd.xlane.f32.xlu0 %v1852
      %v1854 = vpop.xlane.xlu0 %1853
      %v1855 = vadd.f32 %v1827, %v1829
      %1856 = vadd.xlane.f32.xlu0 %v1855
      %v1857 = vpop.xlane.xlu0 %1856
      %v1858 = vadd.f32 %v1831, %v1833
      %1859 = vadd.xlane.f32.xlu0 %v1858
      %v1860 = vpop.xlane.xlu0 %1859
      %v1861 = vadd.f32 %v1835, %v1837
      %1862 = vadd.xlane.f32.xlu0 %v1861
      %v1863 = vpop.xlane.xlu0 %1862
      %v1864 = vadd.f32 %v1839, %v1841
      %1865 = vadd.xlane.f32.xlu0 %v1864
      %v1866 = vpop.xlane.xlu0 %1865
      %v1867 = vadd.f32 %v1843, %v1845
      %1868 = vadd.xlane.f32.xlu0 %v1867
      %v1869 = vpop.xlane.xlu0 %1868
      %v1870 = vld [vmem:[#allocation3] sm:$0xff]
      %v1871 = vld [vmem:[#allocation3 + $0x8] sm:$0xff]
      %v1872 = vld [vmem:[#allocation3 + $0x10] sm:$0xff]
      %v1873 = vld [vmem:[#allocation3 + $0x18] sm:$0xff]
      %v1874 = vld [vmem:[#allocation3 + $0x20] sm:$0xff]
      %v1875 = vld [vmem:[#allocation3 + $0x28] sm:$0xff]
      %v1876 = vld [vmem:[#allocation3 + $0x30] sm:$0xff]
      %v1877 = vld [vmem:[#allocation3 + $0x38] sm:$0xff]
      %v1878 = vld [vmem:[#allocation3 + $0x40] sm:$0xff]
      %v1879 = vld [vmem:[#allocation3 + $0x48] sm:$0xff]
      %v1880 = vld [vmem:[#allocation3 + $0x50] sm:$0xff]
      %v1881 = vld [vmem:[#allocation3 + $0x58] sm:$0xff]
      %v1882 = vld [vmem:[#allocation3 + $0x60] sm:$0xff]
      %v1883 = vld [vmem:[#allocation3 + $0x68] sm:$0xff]
      %v1884 = vld [vmem:[#allocation3 + $0x70] sm:$0xff]
      %v1885 = vld [vmem:[#allocation3 + $0x78] sm:$0xff]
      %v1886 = vld [vmem:[#allocation3 + $0x80] sm:$0xff]
      %v1887 = vld [vmem:[#allocation3 + $0x88] sm:$0xff]
      %v1888 = vld [vmem:[#allocation3 + $0x90] sm:$0xff]
      %v1889 = vld [vmem:[#allocation3 + $0x98] sm:$0xff]
      %v1890 = vld [vmem:[#allocation3 + $0xa0] sm:$0xff]
      %v1891 = vld [vmem:[#allocation3 + $0xa8] sm:$0xff]
      %v1892 = vld [vmem:[#allocation3 + $0xb0] sm:$0xff]
      %v1893 = vld [vmem:[#allocation3 + $0xb8] sm:$0xff]
      %v1894 = vld [vmem:[#allocation3 + $0xc0] sm:$0xff]
      %v1895 = vld [vmem:[#allocation3 + $0xc8] sm:$0xff]
      %v1896 = vld [vmem:[#allocation3 + $0xd0] sm:$0xff]
      %v1897 = vld [vmem:[#allocation3 + $0xd8] sm:$0xff]
      %v1898 = vld [vmem:[#allocation3 + $0xe0] sm:$0xff]
      %v1899 = vld [vmem:[#allocation3 + $0xe8] sm:$0xff]
      %v1900 = vld [vmem:[#allocation3 + $0xf0] sm:$0xff]
      %v1901 = vld [vmem:[#allocation3 + $0xf8] sm:$0xff]
      %1902 = vmatprep.subr.mxu0 0.0
      %1903 = vmatpush1.msra.mxu0 %v1870
      %1904 = vmatprep.subr.mxu0 0.0
      %1905 = vmatpush1.msra.mxu0 %v1871
      %1906 = vmatprep.subr.mxu0 0.0
      %1907 = vmatpush1.msra.mxu0 %v1872
      %1908 = vmatprep.subr.mxu0 0.0
      %1909 = vmatpush1.msra.mxu0 %v1873
      %1910 = vmatprep.subr.mxu0 0.0
      %1911 = vmatpush1.msra.mxu0 %v1874
      %1912 = vmatprep.subr.mxu0 0.0
      %1913 = vmatpush1.msra.mxu0 %v1875
      %1914 = vmatprep.subr.mxu0 0.0
      %1915 = vmatpush1.msra.mxu0 %v1876
      %1916 = vmatprep.subr.mxu0 0.0
      %1917 = vmatpush1.msra.mxu0 %v1877
      %1918 = vmatprep.subr.mxu0 0.0
      %1919 = vmatpush1.msra.mxu0 %v1878
      %1920 = vmatprep.subr.mxu0 0.0
      %1921 = vmatpush1.msra.mxu0 %v1879
      %1922 = vmatprep.subr.mxu0 0.0
      %1923 = vmatpush1.msra.mxu0 %v1880
      %1924 = vmatprep.subr.mxu0 0.0
      %1925 = vmatpush1.msra.mxu0 %v1881
      %1926 = vmatprep.subr.mxu0 0.0
      %1927 = vmatpush1.msra.mxu0 %v1882
      %1928 = vmatprep.subr.mxu0 0.0
      %1929 = vmatpush1.msra.mxu0 %v1883
      %1930 = vmatprep.subr.mxu0 0.0
      %1931 = vmatpush1.msra.mxu0 %v1884
      %1932 = vmatprep.subr.mxu0 0.0
      %1933 = vmatpush1.msra.mxu0 %v1885
      %1934 = vmatprep.subr.mxu0 0.0
      %1935 = vmatpush1.msra.mxu0 %v1886
      %1936 = vmatprep.subr.mxu0 0.0
      %1937 = vmatpush1.msra.mxu0 %v1887
      %1938 = vmatprep.subr.mxu0 0.0
      %1939 = vmatpush1.msra.mxu0 %v1888
      %1940 = vmatprep.subr.mxu0 0.0
      %1941 = vmatpush1.msra.mxu0 %v1889
      %1942 = vmatprep.subr.mxu0 0.0
      %1943 = vmatpush1.msra.mxu0 %v1890
      %1944 = vmatprep.subr.mxu0 0.0
      %1945 = vmatpush1.msra.mxu0 %v1891
      %1946 = vmatprep.subr.mxu0 0.0
      %1947 = vmatpush1.msra.mxu0 %v1892
      %1948 = vmatprep.subr.mxu0 0.0
      %1949 = vmatpush1.msra.mxu0 %v1893
      %1950 = vmatprep.subr.mxu0 0.0
      %1951 = vmatpush1.msra.mxu0 %v1894
      %1952 = vmatprep.subr.mxu0 0.0
      %1953 = vmatpush1.msra.mxu0 %v1895
      %1954 = vmatprep.subr.mxu0 0.0
      %1955 = vmatpush1.msra.mxu0 %v1896
      %1956 = vmatprep.subr.mxu0 0.0
      %1957 = vmatpush1.msra.mxu0 %v1897
      %1958 = vmatprep.subr.mxu0 0.0
      %1959 = vmatpush1.msra.mxu0 %v1898
      %1960 = vmatprep.subr.mxu0 0.0
      %1961 = vmatpush1.msra.mxu0 %v1899
      %1962 = vmatprep.subr.mxu0 0.0
      %1963 = vmatpush1.msra.mxu0 %v1900
      %1964 = vmatprep.subr.mxu0 0.0
      %1965 = vmatpush1.msra.mxu0 %v1901
      %1966 = vmatprep.mubr.f32.mxu0 %v1817
      %1967 = vmatmul.mubr.f32.gmra.mrb[0].mxu0 %v1815
      %v1968 = vpop.f32.mrb[0].mxu0
      %v1969 = vadd.f32 0.0, %v1968
      %v1970 = vpop.f32.mrb[0].mxu0
      %1971 = vmatprep.mubr.f32.mxu0 %v1821
      %1972 = vmatmul.mubr.f32.gmra.mrb[0].mxu0 %v1819
      %v1973 = vpop.f32.mrb[0].mxu0
      %v1974 = vadd.f32 0.0, %v1973
      %v1975 = vpop.f32.mrb[0].mxu0
      %1976 = vmatprep.mubr.f32.mxu0 %v1825
      %1977 = vmatmul.mubr.f32.gmra.mrb[0].mxu0 %v1823
      %v1978 = vpop.f32.mrb[0].mxu0
      %v1979 = vadd.f32 0.0, %v1978
      %v1980 = vpop.f32.mrb[0].mxu0
      %1981 = vmatprep.mubr.f32.mxu0 %v1829
      %1982 = vmatmul.mubr.f32.gmra.mrb[0].mxu0 %v1827
      %v1983 = vpop.f32.mrb[0].mxu0
      %v1984 = vadd.f32 0.0, %v1983
      %v1985 = vpop.f32.mrb[0].mxu0
      %1986 = vmatprep.mubr.f32.mxu0 %v1833
      %1987 = vmatmul.mubr.f32.gmra.mrb[0].mxu0 %v1831
      %v1988 = vpop.f32.mrb[0].mxu0
      %v1989 = vadd.f32 0.0, %v1988
      %v1990 = vpop.f32.mrb[0].mxu0
      %1991 = vmatprep.mubr.f32.mxu0 %v1837
      %1992 = vmatmul.mubr.f32.gmra.mrb[0].mxu0 %v1835
      %v1993 = vpop.f32.mrb[0].mxu0
      %v1994 = vadd.f32 0.0, %v1993
      %v1995 = vpop.f32.mrb[0].mxu0
      %1996 = vmatprep.mubr.f32.mxu0 %v1841
      %1997 = vmatmul.mubr.f32.gmra.mrb[0].mxu0 %v1839
      %v1998 = vpop.f32.mrb[0].mxu0
      %v1999 = vadd.f32 0.0, %v1998
      %v2000 = vpop.f32.mrb[0].mxu0
      %2001 = vmatprep.mubr.f32.mxu0 %v1845
      %2002 = vmatmul.mubr.f32.gmra.mrb[0].mxu0 %v1843
      %v2003 = vpop.f32.mrb[0].mxu0
      %v2004 = vadd.f32 0.0, %v2003
      %v2005 = vpop.f32.mrb[0].mxu0
      %2006 = vdwg.mxu0
      %v2007 = vrcp.pop %v1848
      %v2008 = vrcp.pop %v1851
      %v2009 = vrcp.pop %v1854
      %v2010 = vrcp.pop %v1857
      %v2011 = vrcp.pop %v1860
      %v2012 = vrcp.pop %v1863
      %v2013 = vrcp.pop %v1866
      %v2014 = vrcp.pop %v1869
      %v2015 = vmul.f32 %v1969, %v2007
      %v2016 = vmul.f32 %v1974, %v2008
      %v2017 = vmul.f32 %v1979, %v2009
      %v2018 = vmul.f32 %v1984, %v2010
      %v2019 = vmul.f32 %v1989, %v2011
      %v2020 = vmul.f32 %v1994, %v2012
      %v2021 = vmul.f32 %v1999, %v2013
      %v2022 = vmul.f32 %v2004, %v2014
      %v2023 = vld [vmem:[%s9] sm:$0xf]
      %v2024 = vld [vmem:[%s10] sm:$0x1]
      %v2026 = vlaneseq
      %v2027 = vshrl.u32 %v2026, 7
      %v2028 = vsub.s32 0, %v2027
      %v2029 = vrot.slane %v2024, %v2028
      %v2032 = vsel %vm1496, %v2015, 0
      %v2035 = vsel %vm1496, %v2016, 0
      %v2038 = vsel %vm1496, %v2017, 0
      %v2041 = vsel %vm1496, %v2018, 0
      %v2044 = vsel %vm1496, %v2019, 0
      %v2047 = vsel %vm1496, %v2020, 0
      %v2050 = vsel %vm1496, %v2021, 0
      %v2053 = vsel %vm1496, %v2022, 0
      %v2056 = vsel %vm1521, %v2023, 0
      %2058 = vmatprep.subr.mxu0 0.0
      %2059 = vmatpush1.msra.mxu0 %v2056
      %2060 = vmatprep.subr.mxu0 0.0
      %2061 = vmatpush1.msra.mxu0 0.0
      %2062 = vmatprep.subr.mxu0 0.0
      %2063 = vmatpush1.msra.mxu0 0.0
      %2064 = vmatprep.subr.mxu0 0.0
      %2065 = vmatpush1.msra.mxu0 0.0
      %2066 = vmatprep.subr.mxu0 0.0
      %2067 = vmatpush1.msra.mxu0 0.0
      %2068 = vmatprep.subr.mxu0 0.0
      %2069 = vmatpush1.msra.mxu0 0.0
      %2070 = vmatprep.subr.mxu0 0.0
      %2071 = vmatpush1.msra.mxu0 0.0
      %2072 = vmatprep.subr.mxu0 0.0
      %2073 = vmatpush1.msra.mxu0 0.0
      %2074 = vmatprep.subr.mxu0 0.0
      %2075 = vmatpush1.msra.mxu0 0.0
      %2076 = vmatprep.subr.mxu0 0.0
      %2077 = vmatpush1.msra.mxu0 0.0
      %2078 = vmatprep.subr.mxu0 0.0
      %2079 = vmatpush1.msra.mxu0 0.0
      %2080 = vmatprep.subr.mxu0 0.0
      %2081 = vmatpush1.msra.mxu0 0.0
      %2082 = vmatprep.subr.mxu0 0.0
      %2083 = vmatpush1.msra.mxu0 0.0
      %2084 = vmatprep.subr.mxu0 0.0
      %2085 = vmatpush1.msra.mxu0 0.0
      %2086 = vmatprep.subr.mxu0 0.0
      %2087 = vmatpush1.msra.mxu0 0.0
      %2088 = vmatprep.subr.mxu0 0.0
      %2089 = vmatpush1.msra.mxu0 0.0
      %2090 = vmatprep.subr.mxu0 0.0
      %2091 = vmatpush1.msra.mxu0 0.0
      %2092 = vmatprep.subr.mxu0 0.0
      %2093 = vmatpush1.msra.mxu0 0.0
      %2094 = vmatprep.subr.mxu0 0.0
      %2095 = vmatpush1.msra.mxu0 0.0
      %2096 = vmatprep.subr.mxu0 0.0
      %2097 = vmatpush1.msra.mxu0 0.0
      %2098 = vmatprep.subr.mxu0 0.0
      %2099 = vmatpush1.msra.mxu0 0.0
      %2100 = vmatprep.subr.mxu0 0.0
      %2101 = vmatpush1.msra.mxu0 0.0
      %2102 = vmatprep.subr.mxu0 0.0
      %2103 = vmatpush1.msra.mxu0 0.0
      %2104 = vmatprep.subr.mxu0 0.0
      %2105 = vmatpush1.msra.mxu0 0.0
      %2106 = vmatprep.subr.mxu0 0.0
      %2107 = vmatpush1.msra.mxu0 0.0
      %2108 = vmatprep.subr.mxu0 0.0
      %2109 = vmatpush1.msra.mxu0 0.0
      %2110 = vmatprep.subr.mxu0 0.0
      %2111 = vmatpush1.msra.mxu0 0.0
      %2112 = vmatprep.subr.mxu0 0.0
      %2113 = vmatpush1.msra.mxu0 0.0
      %2114 = vmatprep.subr.mxu0 0.0
      %2115 = vmatpush1.msra.mxu0 0.0
      %2116 = vmatprep.subr.mxu0 0.0
      %2117 = vmatpush1.msra.mxu0 0.0
      %2118 = vmatprep.subr.mxu0 0.0
      %2119 = vmatpush1.msra.mxu0 0.0
      %2120 = vmatprep.subr.mxu0 0.0
      %2121 = vmatpush1.msra.mxu0 0.0
      %2122 = vmatprep.mubr.f32.mxu0 0.0
      %2123 = vmatmul.mubr.f32.gmra.mrb[0].mxu0 %v2032
      %v2124 = vpop.f32.mrb[0].mxu0
      %v2125 = vadd.f32 %v2029, %v2124
      %v2126 = vpop.f32.mrb[0].mxu0
      %2127 = vmatprep.mubr.f32.mxu0 0.0
      %2128 = vmatmul.mubr.f32.gmra.mrb[0].mxu0 %v2035
      %v2129 = vpop.f32.mrb[0].mxu0
      %v2130 = vadd.f32 %v2029, %v2129
      %v2131 = vpop.f32.mrb[0].mxu0
      %2132 = vmatprep.mubr.f32.mxu0 0.0
      %2133 = vmatmul.mubr.f32.gmra.mrb[0].mxu0 %v2038
      %v2134 = vpop.f32.mrb[0].mxu0
      %v2135 = vadd.f32 %v2029, %v2134
      %v2136 = vpop.f32.mrb[0].mxu0
      %2137 = vmatprep.mubr.f32.mxu0 0.0
      %2138 = vmatmul.mubr.f32.gmra.mrb[0].mxu0 %v2041
      %v2139 = vpop.f32.mrb[0].mxu0
      %v2140 = vadd.f32 %v2029, %v2139
      %v2141 = vpop.f32.mrb[0].mxu0
      %2142 = vmatprep.mubr.f32.mxu0 0.0
      %2143 = vmatmul.mubr.f32.gmra.mrb[0].mxu0 %v2044
      %v2144 = vpop.f32.mrb[0].mxu0
      %v2145 = vadd.f32 %v2029, %v2144
      %v2146 = vpop.f32.mrb[0].mxu0
      %2147 = vmatprep.mubr.f32.mxu0 0.0
      %2148 = vmatmul.mubr.f32.gmra.mrb[0].mxu0 %v2047
      %v2149 = vpop.f32.mrb[0].mxu0
      %v2150 = vadd.f32 %v2029, %v2149
      %v2151 = vpop.f32.mrb[0].mxu0
      %2152 = vmatprep.mubr.f32.mxu0 0.0
      %2153 = vmatmul.mubr.f32.gmra.mrb[0].mxu0 %v2050
      %v2154 = vpop.f32.mrb[0].mxu0
      %v2155 = vadd.f32 %v2029, %v2154
      %v2156 = vpop.f32.mrb[0].mxu0
      %2157 = vmatprep.mubr.f32.mxu0 0.0
      %2158 = vmatmul.mubr.f32.gmra.mrb[0].mxu0 %v2053
      %v2159 = vpop.f32.mrb[0].mxu0
      %v2160 = vadd.f32 %v2029, %v2159
      %v2161 = vpop.f32.mrb[0].mxu0
      %2162 = vdwg.mxu0
      %v2163 = vadd.f32 %v1450, %v2125
      %v2164 = vadd.f32 %v1451, %v2130
      %v2165 = vadd.f32 %v1452, %v2135
      %v2166 = vadd.f32 %v1453, %v2140
      %v2167 = vadd.f32 %v1454, %v2145
      %v2168 = vadd.f32 %v1455, %v2150
      %v2169 = vadd.f32 %v1456, %v2155
      %v2170 = vadd.f32 %v1457, %v2160
      %2171 = vst.msk [vmem:[%s408] sm:$0xff] %vm1496, %v2163
      %2172 = vst.msk [vmem:[%s408 + $0x8] sm:$0xff] %vm1496, %v2164
      %2173 = vst.msk [vmem:[%s408 + $0x10] sm:$0xff] %vm1496, %v2165
      %2174 = vst.msk [vmem:[%s408 + $0x18] sm:$0xff] %vm1496, %v2166
      %2175 = vst.msk [vmem:[%s408 + $0x20] sm:$0xff] %vm1496, %v2167
      %2176 = vst.msk [vmem:[%s408 + $0x28] sm:$0xff] %vm1496, %v2168
      %2177 = vst.msk [vmem:[%s408 + $0x30] sm:$0xff] %vm1496, %v2169
      %2178 = vst.msk [vmem:[%s408 + $0x38] sm:$0xff] %vm1496, %v2170
      %s2179 = smul.u32 8, %s27
      %p2180 = scmp.lt.s32.totalorder %s26, 1
      %s2181 = scalar_select %p2180, %s26, 1
      %p2182 = scmp.lt.s32.totalorder %s2179, 31
      %s2183 = scalar_select %p2182, %s2179, 31
      %s2184 = smul.addr %s2181, 32
      %s2185 = sadd.s32 %s2183, %s2184
      %s2186 = smul.addr %s2185, 8
      %s2187 = scalar_lea.vmem %s11, %s2186
      // Predicated region
      $region69: #{tpu_custom_call.1} parent=63 // pred_check
        %p2188 = pneg %p290
      $region70: #{tpu_custom_call.1} parent=63 // pred_check_branch
        %2190 = sbr.rel (%p2188) target = $region72
      $region71: #{tpu_custom_call.1} parent=63 // pred_region
        %s2191 = smul.u32 8, %s27
      $region72: #{tpu_custom_call.1} parent=63 // pred_fallthru
        _
    $region64: #{tpu_custom_call.1} parent=5 // pred_fallthru
      _
    %p2192 = scmp.le.s32.totalorder 2, %s17
    // Predicated region
    $region73: #{tpu_custom_call.1} parent=5 // pred_check
      %p2193 = pneg %p2192
    $region74: #{tpu_custom_call.1} parent=5 // pred_check_branch
      %2195 = sbr.rel (%p2193) target = $region76
    $region75: #{tpu_custom_call.1} parent=5 // pred_region
      %s2196 = ssub.s32 %s17, 2
      // Predicated region
      $region77: #{tpu_custom_call.1} parent=75 // pred_check
        %p2197 = pneg %p296
      $region78: #{tpu_custom_call.1} parent=75 // pred_check_branch
        %2199 = sbr.rel (%p2197) target = $region80
      $region79: #{tpu_custom_call.1} parent=75 // pred_region
        %s2200 = smul.u32 8, %s29
        %p2201 = scmp.lt.s32.totalorder %s28, 1
        %s2202 = scalar_select %p2201, %s28, 1
        %p2203 = scmp.lt.s32.totalorder %s2200, 31
        %s2204 = scalar_select %p2203, %s2200, 31
        %s2205 = smul.addr %s2202, 32
        %s2206 = sadd.s32 %s2204, %s2205
        %s2207 = smul.addr %s2206, 8
        %s2208 = scalar_lea.vmem %s11, %s2207
      $region80: #{tpu_custom_call.1} parent=75 // pred_fallthru
        _
    $region76: #{tpu_custom_call.1} parent=5 // pred_fallthru
      _
  $region6: #{tpu_custom_call.1} parent=0 // loop_footer
    %s21 = sadd.s32 1, %s17
  $region7: #{tpu_custom_call.1} parent=0 // loop_footer_branch
    %16 = sbr.rel target = $region3
  $region8: #{tpu_custom_call.1} parent=0 // loop_exit
    _

</llo_original>
